<compile_context>
chip_gen: v7x
topology: tpu7x:2x2x1
jax: 0.10.0
libtpu: 0.0.40
codegen_flags: <defaults>
</compile_context>

<pallas_src>
import functools

import jax
import jax.numpy as jnp
import numpy as np
from jax.experimental import pallas as pl
from jax.experimental.pallas import tpu as pltpu

# args.objInputMode in the original code is a global runtime flag; static here.
OBJ_INPUT_MODE = "sg"     # 'sg' -> sigmoid, 'tanh' -> tanh
OUTPUT_TILDE = True       # forward() default
OUTPUT_PROB = True        # forward() default

_MIN_GRID_STEPS = 4       # keep the pipeline busy + >= 2 steps/TensorCore on v7x


def _cdiv(a, b):
    return -(-a // b)


def _round_up(x, m):
    return _cdiv(x, m) * m


def _vmem_limit_bytes():
    """Scoped-VMEM request derived from physical VMEM: ~40 MiB on 64-MiB parts
    (v7x), capped at 64 MiB on 128-MiB parts (v5e/v6e)."""
    try:
        cap = int(pltpu.get_tpu_info().vmem_capacity_bytes)
    except Exception:
        cap = 64 << 20            # conservative default = v7x per-TensorCore VMEM
    return max(24 << 20, min(cap * 5 // 8, 64 << 20))


def _pick_b_tile(B, S, Dc, Dq, out_dim, itemsize, weight_bytes, vmem_limit):
    """Largest batch tile (multiple of 8) fitting the VMEM budget, capped so the
    grid keeps >= _MIN_GRID_STEPS steps (DMA/compute overlap, v7x dual-TC)."""
    per_row = (2 * S * Dc * itemsize               # context tile, double-buffered
               + 2 * (Dq * itemsize + S * 4)       # h + mask tiles, double-buffered
               + 2 * (out_dim + S) * 4             # f32 output tiles, double-buffered
               + 6 * (S + Dc + Dq + out_dim) * 4)  # in-kernel f32 temporaries + slack
    budget = max(vmem_limit - weight_bytes - (4 << 20), 2 << 20)
    bt = int(budget // per_row) // 8 * 8
    cap = _round_up(_cdiv(B, _MIN_GRID_STEPS), 8)
    # TODO(synk): for very small B with huge S*Dc, add an "arbitrary" S-chunk grid
    # axis with a VMEM wctx accumulator so the context stream is still pipelined.
    return max(8, min(bt, cap))


def _gate_kernel(dc, obj_input_mode, output_tilde, output_prob, use_mxu,
                 h_ref, ctx_ref, mask_ref, w_h_ref, w_out_ctx_ref,
                 ht_ref, attn_ref):
    ctx = ctx_ref[...]                                  # (bt, S, Dc) storage dtype
    valid = mask_ref[...] == 0                          # (bt, S)

    # Fused h-side matmul: [h @ W_in | h @ W_out_h] in one wide MXU pass (f32 acc).
    hproj = jnp.dot(h_ref[...], w_h_ref[...], preferred_element_type=jnp.float32)
    target = hproj[:, :dc]                              # (bt, Dc)  == linear_in(h)
    h_out = hproj[:, dc:]                               # (bt, Dq)  == h @ W_out[Dc:, :]

    # logits[b,s] = <context[b,s,:], target[b,:]>   (torch.bmm(context, target))
    if use_mxu:
        # flash-attention-style batched (q=1) MXU matmul; no f32 upcast copy of ctx.
        logits = jnp.einsum("bqd,bkd->bqk",
                            target[:, None, :].astype(ctx.dtype), ctx,
                            preferred_element_type=jnp.float32)[:, 0, :]
    else:
        logits = jnp.sum(ctx.astype(jnp.float32) * target[:, None, :], axis=-1)

    # masked_fill_(-inf) folded into a post-activation select.
    if obj_input_mode == "sg":
        attn_act = jnp.where(valid, jax.nn.sigmoid(logits), 0.0)   # sigmoid(-inf)=0
    elif obj_input_mode == "tanh":
        attn_act = jnp.where(valid, jnp.tanh(logits), -1.0)        # tanh(-inf)=-1
    else:
        # TODO(synk): torch propagates -inf weights here (NaN/inf weighted_context);
        # we use 0-weight for masked positions instead of reproducing the NaNs.
        attn_act = jnp.where(valid, logits, 0.0)

    # weighted_context[b,:] = sum_s attn[b,s] * context[b,s,:]
    if use_mxu:
        wctx = jnp.einsum("bqk,bkd->bqd",
                          attn_act[:, None, :].astype(ctx.dtype), ctx,
                          preferred_element_type=jnp.float32)[:, 0, :]
    else:
        wctx = jnp.sum(attn_act[:, :, None] * ctx.astype(jnp.float32), axis=1)

    if output_prob:
        attn_ref[...] = attn_act
    else:
        # torch's in-place masked_fill_ aliases `logit`, so returned logits are masked.
        attn_ref[...] = jnp.where(valid, logits, -jnp.inf)

    if output_tilde:
        # Keep the bf16 MXU fast path: cast wctx down to the weight dtype, f32 acc.
        ht = jnp.dot(wctx.astype(w_out_ctx_ref.dtype), w_out_ctx_ref[...],
                     preferred_element_type=jnp.float32) + h_out
        ht_ref[...] = jnp.tanh(ht)
    else:
        ht_ref[...] = wctx


def gate_forward(h, context, mask, w_in, w_out, *,
                 compute_dtype=None,
                 obj_input_mode=OBJ_INPUT_MODE,
                 output_tilde=OUTPUT_TILDE,
                 output_prob=OUTPUT_PROB):
    """Pallas implementation of Gate.forward(h, context, mask)."""
    B, Dq = h.shape
    Bc, S, Dc = context.shape
    assert Bc == B
    assert w_in.shape == (Dq, Dc)
    assert w_out.shape == (Dq + Dc, Dq)

    f = jnp.dtype(compute_dtype) if compute_dtype is not None else jnp.dtype(context.dtype)
    out_dim = Dq if output_tilde else Dc

    vmem_limit = _vmem_limit_bytes()
    itemsize = f.itemsize
    # Budget the resident weights at 2 buffers (worst case = non-Buffered fallback).
    weight_bytes = 2 * (Dq * (Dc + Dq) + Dc * Dq) * itemsize
    bt = _pick_b_tile(B, S, Dc, Dq, out_dim, itemsize, weight_bytes, vmem_limit)
    n_steps = _cdiv(B, bt)
    b_p = n_steps * bt

    # context: no copy unless an explicit dtype cast was requested.
    ctx_c = context if context.dtype == f else context.astype(f)
    # Small per-call tensors are padded on the batch axis (cheap) so only the
    # read-only context stream relies on ragged-block handling.
    h_p = jnp.zeros((b_p, Dq), f).at[:B].set(h.astype(f))
    if mask is None:
        mask_p = jnp.zeros((b_p, S), jnp.int32).at[B:].set(1)
    else:
        mask_p = jnp.ones((b_p, S), jnp.int32).at[:B].set(mask.astype(jnp.int32))

    # Split linear_out weight: rows [0:Dc] hit weighted_context, rows [Dc:] hit h;
    # fuse the h-side half with W_in into one wide weight matrix.
    w_h = jnp.concatenate([w_in.astype(f), w_out[Dc:, :].astype(f)], axis=1)  # (Dq, Dc+Dq)
    w_out_ctx = w_out[:Dc, :].astype(f)                                       # (Dc, Dq)

    out_shapes = (jax.ShapeDtypeStruct((b_p, out_dim), jnp.float32),
                  jax.ShapeDtypeStruct((b_p, S), jnp.float32))

    def _build(use_mxu, single_buffered_weights):
        kernel = functools.partial(_gate_kernel, Dc, obj_input_mode,
                                   output_tilde, output_prob, use_mxu)
        wkw = ({"pipeline_mode": pl.Buffered(buffer_count=1)}
               if single_buffered_weights else {})
        in_specs = [
            pl.BlockSpec((bt, Dq), lambda b: (b, 0)),            # h (batch-tiled)
            pl.BlockSpec((bt, S, Dc), lambda b: (b, 0, 0)),      # context (batch-tiled, unpadded)
            pl.BlockSpec((bt, S), lambda b: (b, 0)),             # mask (batch-tiled)
            pl.BlockSpec((Dq, Dc + Dq), lambda b: (0, 0), **wkw),  # fused h-side weight (resident)
            pl.BlockSpec((Dc, Dq), lambda b: (0, 0), **wkw),       # wctx-side weight (resident)
        ]
        out_specs = (
            pl.BlockSpec((bt, out_dim), lambda b: (b, 0)),
            pl.BlockSpec((bt, S), lambda b: (b, 0)),
        )
        return pl.pallas_call(
            kernel,
            grid=(n_steps,),
            in_specs=in_specs,
            out_specs=out_specs,
            out_shape=out_shapes,
            compiler_params=pltpu.CompilerParams(
                # "parallel" lets v7x shard the batch-tile axis across its 2 TensorCores.
                dimension_semantics=("parallel",),
                vmem_limit_bytes=int(vmem_limit)),
        )

    # Attempt chain: full-featured first, then progressively safer configs.
    #   (use_mxu_batched_einsum, single_buffered_weights, pad_context_batch)
    attempts = ((True, True, False), (True, False, False), (False, False, True))
    last_err = None
    for use_mxu, single_buf, pad_ctx in attempts:
        ctx_in = ctx_c
        if pad_ctx:   # guaranteed-safe path: no ragged blocks anywhere
            ctx_in = jnp.zeros((b_p, S, Dc), f).at[:B].set(ctx_c)
        try:
            ht_pad, attn_pad = _build(use_mxu, single_buf)(
                h_p, ctx_in, mask_p, w_h, w_out_ctx)
            break
        except Exception as err:   # lowering/compile fallback; see module docstring
            last_err = err
    else:
        raise last_err

    return ht_pad[:B], attn_pad[:B]


def gate_reference(h, context, mask, w_in, w_out):
    """Plain-JAX reference mirroring the PyTorch forward (objInputMode='sg')."""
    target = h @ w_in                                      # (B, Dc)
    attn = jnp.einsum("bsd,bd->bs", context, target)       # (B, S)
    attn = jnp.where(mask != 0, -jnp.inf, attn)
    attn = jax.nn.sigmoid(attn)
    wctx = jnp.einsum("bs,bsd->bd", attn, context)         # (B, Dc)
    h_tilde = jnp.tanh(jnp.concatenate([wctx, h], axis=1) @ w_out)
    return h_tilde, attn


if __name__ == "__main__":
    B, S, Dq, Dc = 2, 8, 32, 32   # batch, seq_len, query_dim, ctx_dim

    key = jax.random.PRNGKey(0)
    k_h, k_ctx, k_mask, k_win, k_wout = jax.random.split(key, 5)

    h = jax.random.normal(k_h, (B, Dq), dtype=jnp.float32)
    context = jax.random.normal(k_ctx, (B, S, Dc), dtype=jnp.float32)
    mask = (jax.random.uniform(k_mask, (B, S)) < 0.25).astype(jnp.int32)

    w_in = jax.random.normal(k_win, (Dq, Dc), dtype=jnp.float32) * (1.0 / np.sqrt(Dq))
    w_out = jax.random.normal(k_wout, (Dq + Dc, Dq), dtype=jnp.float32) * (1.0 / np.sqrt(Dq + Dc))

    ht_ref, attn_ref = gate_reference(h, context, mask, w_in, w_out)

    # f32 path (no wrapper-side context copy) — tight check against the reference.
    ht, attn = gate_forward(h, context, mask, w_in, w_out)
    jax.block_until_ready((ht, attn))
    np.testing.assert_allclose(np.asarray(ht), np.asarray(ht_ref), atol=2e-5, rtol=2e-5)
    np.testing.assert_allclose(np.asarray(attn), np.asarray(attn_ref), atol=2e-5, rtol=2e-5)

    # bf16 storage path (halves HBM traffic on the dominant context stream) — loose check.
    ht_bf, attn_bf = gate_forward(h, context, mask, w_in, w_out,
                                  compute_dtype=jnp.bfloat16)
    jax.block_until_ready((ht_bf, attn_bf))
    np.testing.assert_allclose(np.asarray(ht_bf), np.asarray(ht_ref), atol=1e-1, rtol=0)
    np.testing.assert_allclose(np.asarray(attn_bf), np.asarray(attn_ref), atol=1e-1, rtol=0)

    print("KERNEL_OK")
</pallas_src>

<mosaic_0001>
module attributes {stable_mosaic.version = 11 : i64} {
  func.func @_gate_kernel(%arg0: i32, %arg1: memref<8x32xf32, #tpu.memory_space<vmem>>, %arg2: memref<8x8x32xf32, #tpu.memory_space<vmem>>, %arg3: memref<8x8xi32, #tpu.memory_space<vmem>>, %arg4: memref<32x64xf32, #tpu.memory_space<vmem>>, %arg5: memref<32x32xf32, #tpu.memory_space<vmem>>, %arg6: memref<8x32xf32, #tpu.memory_space<vmem>>, %arg7: memref<8x8xf32, #tpu.memory_space<vmem>>) attributes {dimension_semantics = [#tpu.dimension_semantics<parallel>], iteration_bounds = array<i64: 1>, scalar_prefetch = 0 : i64, scratch_operands = 0 : i64, tpu.core_type = #tpu.core_type<tc>, window_params = [{transform_indices = @transform_0, window_bounds = array<i64: 8, 32>}, {transform_indices = @transform_1, window_bounds = array<i64: 8, 8, 32>}, {transform_indices = @transform_2, window_bounds = array<i64: 8, 8>}, {pipeline_mode = #tpu.pipeline_mode<synchronous>, transform_indices = @transform_3, window_bounds = array<i64: 32, 64>}, {pipeline_mode = #tpu.pipeline_mode<synchronous>, transform_indices = @transform_4, window_bounds = array<i64: 32, 32>}, {transform_indices = @transform_5, window_bounds = array<i64: 8, 32>}, {transform_indices = @transform_6, window_bounds = array<i64: 8, 8>}]} {
    %c0 = arith.constant 0 : index
    %c0_0 = arith.constant 0 : index
    %c0_1 = arith.constant 0 : index
    %0 = vector.load %arg2[%c0, %c0_0, %c0_1] : memref<8x8x32xf32, #tpu.memory_space<vmem>>, vector<8x8x32xf32>
    %c0_2 = arith.constant 0 : index
    %c0_3 = arith.constant 0 : index
    %1 = vector.load %arg3[%c0_2, %c0_3] : memref<8x8xi32, #tpu.memory_space<vmem>>, vector<8x8xi32>
    %c0_i32 = arith.constant 0 : i32
    %2 = vector.broadcast %c0_i32 : i32 to vector<8x8xi32>
    %3 = arith.cmpi eq, %1, %2 : vector<8x8xi32>
    %c0_4 = arith.constant 0 : index
    %c0_5 = arith.constant 0 : index
    %4 = vector.load %arg1[%c0_4, %c0_5] : memref<8x32xf32, #tpu.memory_space<vmem>>, vector<8x32xf32>
    %c0_6 = arith.constant 0 : index
    %c0_7 = arith.constant 0 : index
    %5 = vector.load %arg4[%c0_6, %c0_7] : memref<32x64xf32, #tpu.memory_space<vmem>>, vector<32x64xf32>
    %cst = arith.constant dense<0.000000e+00> : vector<8x64xf32>
    %6 = tpu.matmul %4, %5, %cst {dimension_numbers = #tpu.dot_dimension_numbers<[1], [0], [0], [1], [0, 0, 1, 1], [], []>} : vector<8x32xf32>, vector<32x64xf32>, vector<8x64xf32> -> vector<8x64xf32>
    %7 = vector.extract_strided_slice %6 {offsets = [0, 0], sizes = [8, 32], strides = [1, 1]} : vector<8x64xf32> to vector<8x32xf32>
    %8 = vector.extract_strided_slice %6 {offsets = [0, 32], sizes = [8, 32], strides = [1, 1]} : vector<8x64xf32> to vector<8x32xf32>
    %9 = vector.shape_cast %7 : vector<8x32xf32> to vector<8x1x32xf32>
    "tpu.trace_start"() <{level = 10 : i32, message = "bqd,bkd->bqk"}> : () -> ()
    %cst_8 = arith.constant dense<0.000000e+00> : vector<8x1x8xf32>
    %10 = tpu.matmul %9, %0, %cst_8 {dimension_numbers = #tpu.dot_dimension_numbers<[2], [2], [1], [1], [0, 0, 0, 1, 1, 1], [0], [0]>} : vector<8x1x32xf32>, vector<8x8x32xf32>, vector<8x1x8xf32> -> vector<8x1x8xf32>
    "tpu.trace_stop"() : () -> ()
    %11 = vector.shape_cast %10 : vector<8x1x8xf32> to vector<8x8xf32>
    %12 = arith.negf %11 : vector<8x8xf32>
    %13 = math.exp %12 : vector<8x8xf32>
    %cst_9 = arith.constant 1.000000e+00 : f32
    %14 = vector.broadcast %cst_9 : f32 to vector<8x8xf32>
    %15 = arith.addf %14, %13 : vector<8x8xf32>
    %16 = arith.divf %14, %15 : vector<8x8xf32>
    %cst_10 = arith.constant 0.000000e+00 : f32
    %17 = vector.broadcast %cst_10 : f32 to vector<8x8xf32>
    %18 = arith.select %3, %16, %17 : vector<8x8xi1>, vector<8x8xf32>
    %19 = vector.shape_cast %18 : vector<8x8xf32> to vector<8x1x8xf32>
    "tpu.trace_start"() <{level = 10 : i32, message = "bqk,bkd->bqd"}> : () -> ()
    %cst_11 = arith.constant dense<0.000000e+00> : vector<8x1x32xf32>
    %20 = tpu.matmul %19, %0, %cst_11 {dimension_numbers = #tpu.dot_dimension_numbers<[2], [1], [1], [2], [0, 0, 0, 1, 1, 2], [0], [0]>} : vector<8x1x8xf32>, vector<8x8x32xf32>, vector<8x1x32xf32> -> vector<8x1x32xf32>
    "tpu.trace_stop"() : () -> ()
    %21 = vector.shape_cast %20 : vector<8x1x32xf32> to vector<8x32xf32>
    %c0_12 = arith.constant 0 : index
    %c0_13 = arith.constant 0 : index
    %22 = vector.load %arg7[%c0_12, %c0_13] : memref<8x8xf32, #tpu.memory_space<vmem>>, vector<8x8xf32>
    tpu.vector_store %arg7[%c0_12, %c0_13], %18 {strides = array<i32>} : memref<8x8xf32, #tpu.memory_space<vmem>>, vector<8x8xf32>,
    %c0_14 = arith.constant 0 : index
    %c0_15 = arith.constant 0 : index
    %23 = vector.load %arg5[%c0_14, %c0_15] : memref<32x32xf32, #tpu.memory_space<vmem>>, vector<32x32xf32>
    %cst_16 = arith.constant dense<0.000000e+00> : vector<8x32xf32>
    %24 = tpu.matmul %21, %23, %cst_16 {dimension_numbers = #tpu.dot_dimension_numbers<[1], [0], [0], [1], [0, 0, 1, 1], [], []>} : vector<8x32xf32>, vector<32x32xf32>, vector<8x32xf32> -> vector<8x32xf32>
    %25 = arith.addf %24, %8 : vector<8x32xf32>
    %26 = math.tanh %25 : vector<8x32xf32>
    %c0_17 = arith.constant 0 : index
    %c0_18 = arith.constant 0 : index
    %27 = vector.load %arg6[%c0_17, %c0_18] : memref<8x32xf32, #tpu.memory_space<vmem>>, vector<8x32xf32>
    tpu.vector_store %arg6[%c0_17, %c0_18], %26 {strides = array<i32>} : memref<8x32xf32, #tpu.memory_space<vmem>>, vector<8x32xf32>,
    return
  }
  func.func @transform_0(%arg0: i32) -> (i32, i32) {
    %c0_i32 = arith.constant 0 : i32
    %c0_i32_0 = arith.constant 0 : i32
    return %arg0, %c0_i32 : i32, i32
  }
  func.func @transform_1(%arg0: i32) -> (i32, i32, i32) {
    %c0_i32 = arith.constant 0 : i32
    %c0_i32_0 = arith.constant 0 : i32
    %c0_i32_1 = arith.constant 0 : i32
    return %arg0, %c0_i32, %c0_i32_0 : i32, i32, i32
  }
  func.func @transform_2(%arg0: i32) -> (i32, i32) {
    %c0_i32 = arith.constant 0 : i32
    %c0_i32_0 = arith.constant 0 : i32
    return %arg0, %c0_i32 : i32, i32
  }
  func.func @transform_3(%arg0: i32) -> (i32, i32) {
    %c0_i32 = arith.constant 0 : i32
    %c0_i32_0 = arith.constant 0 : i32
    %c0_i32_1 = arith.constant 0 : i32
    return %c0_i32, %c0_i32_0 : i32, i32
  }
  func.func @transform_4(%arg0: i32) -> (i32, i32) {
    %c0_i32 = arith.constant 0 : i32
    %c0_i32_0 = arith.constant 0 : i32
    %c0_i32_1 = arith.constant 0 : i32
    return %c0_i32, %c0_i32_0 : i32, i32
  }
  func.func @transform_5(%arg0: i32) -> (i32, i32) {
    %c0_i32 = arith.constant 0 : i32
    %c0_i32_0 = arith.constant 0 : i32
    return %arg0, %c0_i32 : i32, i32
  }
  func.func @transform_6(%arg0: i32) -> (i32, i32) {
    %c0_i32 = arith.constant 0 : i32
    %c0_i32_0 = arith.constant 0 : i32
    return %arg0, %c0_i32 : i32, i32
  }
}

module attributes {stable_mosaic.version = 11 : i64} {
  func.func @_gate_kernel(%arg0: i32, %arg1: memref<8x32xf32, #tpu.memory_space<vmem>>, %arg2: memref<8x8x32xf32, #tpu.memory_space<vmem>>, %arg3: memref<8x8xi32, #tpu.memory_space<vmem>>, %arg4: memref<32x64xf32, #tpu.memory_space<vmem>>, %arg5: memref<32x32xf32, #tpu.memory_space<vmem>>, %arg6: memref<8x32xf32, #tpu.memory_space<vmem>>, %arg7: memref<8x8xf32, #tpu.memory_space<vmem>>) attributes {dimension_semantics = [#tpu.dimension_semantics<parallel>], iteration_bounds = array<i64: 1>, scalar_prefetch = 0 : i64, scratch_operands = 0 : i64, tpu.core_type = #tpu.core_type<tc>, window_params = [{transform_indices = @transform_0, window_bounds = array<i64: 8, 32>}, {transform_indices = @transform_1, window_bounds = array<i64: 8, 8, 32>}, {transform_indices = @transform_2, window_bounds = array<i64: 8, 8>}, {pipeline_mode = #tpu.pipeline_mode<synchronous>, transform_indices = @transform_3, window_bounds = array<i64: 32, 64>}, {pipeline_mode = #tpu.pipeline_mode<synchronous>, transform_indices = @transform_4, window_bounds = array<i64: 32, 32>}, {transform_indices = @transform_5, window_bounds = array<i64: 8, 32>}, {transform_indices = @transform_6, window_bounds = array<i64: 8, 8>}]} {
    %c0 = arith.constant 0 : index
    %c0_0 = arith.constant 0 : index
    %c0_1 = arith.constant 0 : index
    %0 = vector.load %arg2[%c0, %c0_0, %c0_1] : memref<8x8x32xf32, #tpu.memory_space<vmem>>, vector<8x8x32xf32>
    %c0_2 = arith.constant 0 : index
    %c0_3 = arith.constant 0 : index
    %1 = vector.load %arg3[%c0_2, %c0_3] : memref<8x8xi32, #tpu.memory_space<vmem>>, vector<8x8xi32>
    %c0_i32 = arith.constant 0 : i32
    %2 = vector.broadcast %c0_i32 : i32 to vector<8x8xi32>
    %3 = arith.cmpi eq, %1, %2 : vector<8x8xi32>
    %c0_4 = arith.constant 0 : index
    %c0_5 = arith.constant 0 : index
    %4 = vector.load %arg1[%c0_4, %c0_5] : memref<8x32xf32, #tpu.memory_space<vmem>>, vector<8x32xf32>
    %c0_6 = arith.constant 0 : index
    %c0_7 = arith.constant 0 : index
    %5 = vector.load %arg4[%c0_6, %c0_7] : memref<32x64xf32, #tpu.memory_space<vmem>>, vector<32x64xf32>
    %cst = arith.constant dense<0.000000e+00> : vector<8x64xf32>
    %6 = tpu.matmul %4, %5, %cst {dimension_numbers = #tpu.dot_dimension_numbers<[1], [0], [0], [1], [0, 0, 1, 1], [], []>} : vector<8x32xf32>, vector<32x64xf32>, vector<8x64xf32> -> vector<8x64xf32>
    %7 = vector.extract_strided_slice %6 {offsets = [0, 0], sizes = [8, 32], strides = [1, 1]} : vector<8x64xf32> to vector<8x32xf32>
    %8 = vector.extract_strided_slice %6 {offsets = [0, 32], sizes = [8, 32], strides = [1, 1]} : vector<8x64xf32> to vector<8x32xf32>
    %9 = vector.shape_cast %7 : vector<8x32xf32> to vector<8x1x32xf32>
    "tpu.trace_start"() <{level = 10 : i32, message = "bqd,bkd->bqk"}> : () -> ()
    %cst_8 = arith.constant dense<0.000000e+00> : vector<8x1x8xf32>
    %10 = tpu.matmul %9, %0, %cst_8 {dimension_numbers = #tpu.dot_dimension_numbers<[2], [2], [1], [1], [0, 0, 0, 1, 1, 1], [0], [0]>} : vector<8x1x32xf32>, vector<8x8x32xf32>, vector<8x1x8xf32> -> vector<8x1x8xf32>
    "tpu.trace_stop"() : () -> ()
    %11 = vector.shape_cast %10 : vector<8x1x8xf32> to vector<8x8xf32>
    %12 = arith.negf %11 : vector<8x8xf32>
    %13 = math.exp %12 : vector<8x8xf32>
    %cst_9 = arith.constant 1.000000e+00 : f32
    %14 = vector.broadcast %cst_9 : f32 to vector<8x8xf32>
    %15 = arith.addf %14, %13 : vector<8x8xf32>
    %16 = arith.divf %14, %15 : vector<8x8xf32>
    %cst_10 = arith.constant 0.000000e+00 : f32
    %17 = vector.broadcast %cst_10 : f32 to vector<8x8xf32>
    %18 = arith.select %3, %16, %17 : vector<8x8xi1>, vector<8x8xf32>
    %19 = vector.shape_cast %18 : vector<8x8xf32> to vector<8x1x8xf32>
    "tpu.trace_start"() <{level = 10 : i32, message = "bqk,bkd->bqd"}> : () -> ()
    %cst_11 = arith.constant dense<0.000000e+00> : vector<8x1x32xf32>
    %20 = tpu.matmul %19, %0, %cst_11 {dimension_numbers = #tpu.dot_dimension_numbers<[2], [1], [1], [2], [0, 0, 0, 1, 1, 2], [0], [0]>} : vector<8x1x8xf32>, vector<8x8x32xf32>, vector<8x1x32xf32> -> vector<8x1x32xf32>
    "tpu.trace_stop"() : () -> ()
    %21 = vector.shape_cast %20 : vector<8x1x32xf32> to vector<8x32xf32>
    %c0_12 = arith.constant 0 : index
    %c0_13 = arith.constant 0 : index
    %22 = vector.load %arg7[%c0_12, %c0_13] : memref<8x8xf32, #tpu.memory_space<vmem>>, vector<8x8xf32>
    tpu.vector_store %arg7[%c0_12, %c0_13], %18 {strides = array<i32>} : memref<8x8xf32, #tpu.memory_space<vmem>>, vector<8x8xf32>,
    %c0_14 = arith.constant 0 : index
    %c0_15 = arith.constant 0 : index
    %23 = vector.load %arg5[%c0_14, %c0_15] : memref<32x32xf32, #tpu.memory_space<vmem>>, vector<32x32xf32>
    %cst_16 = arith.constant dense<0.000000e+00> : vector<8x32xf32>
    %24 = tpu.matmul %21, %23, %cst_16 {dimension_numbers = #tpu.dot_dimension_numbers<[1], [0], [0], [1], [0, 0, 1, 1], [], []>} : vector<8x32xf32>, vector<32x32xf32>, vector<8x32xf32> -> vector<8x32xf32>
    %25 = arith.addf %24, %8 : vector<8x32xf32>
    %26 = math.tanh %25 : vector<8x32xf32>
    %c0_17 = arith.constant 0 : index
    %c0_18 = arith.constant 0 : index
    %27 = vector.load %arg6[%c0_17, %c0_18] : memref<8x32xf32, #tpu.memory_space<vmem>>, vector<8x32xf32>
    tpu.vector_store %arg6[%c0_17, %c0_18], %26 {strides = array<i32>} : memref<8x32xf32, #tpu.memory_space<vmem>>, vector<8x32xf32>,
    return
  }
  func.func @transform_0(%arg0: i32) -> (i32, i32) {
    %c0_i32 = arith.constant 0 : i32
    %c0_i32_0 = arith.constant 0 : i32
    return %arg0, %c0_i32 : i32, i32
  }
  func.func @transform_1(%arg0: i32) -> (i32, i32, i32) {
    %c0_i32 = arith.constant 0 : i32
    %c0_i32_0 = arith.constant 0 : i32
    %c0_i32_1 = arith.constant 0 : i32
    return %arg0, %c0_i32, %c0_i32_0 : i32, i32, i32
  }
  func.func @transform_2(%arg0: i32) -> (i32, i32) {
    %c0_i32 = arith.constant 0 : i32
    %c0_i32_0 = arith.constant 0 : i32
    return %arg0, %c0_i32 : i32, i32
  }
  func.func @transform_3(%arg0: i32) -> (i32, i32) {
    %c0_i32 = arith.constant 0 : i32
    %c0_i32_0 = arith.constant 0 : i32
    %c0_i32_1 = arith.constant 0 : i32
    return %c0_i32, %c0_i32_0 : i32, i32
  }
  func.func @transform_4(%arg0: i32) -> (i32, i32) {
    %c0_i32 = arith.constant 0 : i32
    %c0_i32_0 = arith.constant 0 : i32
    %c0_i32_1 = arith.constant 0 : i32
    return %c0_i32, %c0_i32_0 : i32, i32
  }
  func.func @transform_5(%arg0: i32) -> (i32, i32) {
    %c0_i32 = arith.constant 0 : i32
    %c0_i32_0 = arith.constant 0 : i32
    return %arg0, %c0_i32 : i32, i32
  }
  func.func @transform_6(%arg0: i32) -> (i32, i32) {
    %c0_i32 = arith.constant 0 : i32
    %c0_i32_0 = arith.constant 0 : i32
    return %arg0, %c0_i32 : i32, i32
  }
}

module attributes {stable_mosaic.version = 11 : i64} {
  func.func @_gate_kernel(%arg0: i32, %arg1: memref<8x32xf32, #tpu.memory_space<vmem>>, %arg2: memref<8x8x32xf32, #tpu.memory_space<vmem>>, %arg3: memref<8x8xi32, #tpu.memory_space<vmem>>, %arg4: memref<32x64xf32, #tpu.memory_space<vmem>>, %arg5: memref<32x32xf32, #tpu.memory_space<vmem>>, %arg6: memref<8x32xf32, #tpu.memory_space<vmem>>, %arg7: memref<8x8xf32, #tpu.memory_space<vmem>>) attributes {dimension_semantics = [#tpu.dimension_semantics<parallel>], iteration_bounds = array<i64: 1>, scalar_prefetch = 0 : i64, scratch_operands = 0 : i64, tpu.core_type = #tpu.core_type<tc>, window_params = [{transform_indices = @transform_0, window_bounds = array<i64: 8, 32>}, {transform_indices = @transform_1, window_bounds = array<i64: 8, 8, 32>}, {transform_indices = @transform_2, window_bounds = array<i64: 8, 8>}, {pipeline_mode = #tpu.pipeline_mode<synchronous>, transform_indices = @transform_3, window_bounds = array<i64: 32, 64>}, {pipeline_mode = #tpu.pipeline_mode<synchronous>, transform_indices = @transform_4, window_bounds = array<i64: 32, 32>}, {transform_indices = @transform_5, window_bounds = array<i64: 8, 32>}, {transform_indices = @transform_6, window_bounds = array<i64: 8, 8>}]} {
    %c0 = arith.constant 0 : index
    %c0_0 = arith.constant 0 : index
    %c0_1 = arith.constant 0 : index
    %0 = vector.load %arg2[%c0, %c0_0, %c0_1] : memref<8x8x32xf32, #tpu.memory_space<vmem>>, vector<8x8x32xf32>
    %c0_2 = arith.constant 0 : index
    %c0_3 = arith.constant 0 : index
    %1 = vector.load %arg3[%c0_2, %c0_3] : memref<8x8xi32, #tpu.memory_space<vmem>>, vector<8x8xi32>
    %c0_i32 = arith.constant 0 : i32
    %2 = vector.broadcast %c0_i32 : i32 to vector<8x8xi32>
    %3 = arith.cmpi eq, %1, %2 : vector<8x8xi32>
    %c0_4 = arith.constant 0 : index
    %c0_5 = arith.constant 0 : index
    %4 = vector.load %arg1[%c0_4, %c0_5] : memref<8x32xf32, #tpu.memory_space<vmem>>, vector<8x32xf32>
    %c0_6 = arith.constant 0 : index
    %c0_7 = arith.constant 0 : index
    %5 = vector.load %arg4[%c0_6, %c0_7] : memref<32x64xf32, #tpu.memory_space<vmem>>, vector<32x64xf32>
    %cst = arith.constant dense<0.000000e+00> : vector<8x64xf32>
    %6 = tpu.matmul %4, %5, %cst {dimension_numbers = #tpu.dot_dimension_numbers<[1], [0], [0], [1], [0, 0, 1, 1], [], []>} : vector<8x32xf32>, vector<32x64xf32>, vector<8x64xf32> -> vector<8x64xf32>
    %7 = vector.extract_strided_slice %6 {offsets = [0, 0], sizes = [8, 32], strides = [1, 1]} : vector<8x64xf32> to vector<8x32xf32>
    %8 = vector.extract_strided_slice %6 {offsets = [0, 32], sizes = [8, 32], strides = [1, 1]} : vector<8x64xf32> to vector<8x32xf32>
    %9 = vector.shape_cast %7 : vector<8x32xf32> to vector<8x1x32xf32>
    %10 = vector.broadcast %9 : vector<8x1x32xf32> to vector<8x8x32xf32>
    %11 = arith.mulf %0, %10 : vector<8x8x32xf32>
    %cst_8 = arith.constant dense<0.000000e+00> : vector<8x8xf32>
    %12 = vector.multi_reduction <add>, %11, %cst_8 [2] : vector<8x8x32xf32> to vector<8x8xf32>
    %13 = arith.negf %12 : vector<8x8xf32>
    %14 = math.exp %13 : vector<8x8xf32>
    %cst_9 = arith.constant 1.000000e+00 : f32
    %15 = vector.broadcast %cst_9 : f32 to vector<8x8xf32>
    %16 = arith.addf %15, %14 : vector<8x8xf32>
    %17 = arith.divf %15, %16 : vector<8x8xf32>
    %cst_10 = arith.constant 0.000000e+00 : f32
    %18 = vector.broadcast %cst_10 : f32 to vector<8x8xf32>
    %19 = arith.select %3, %17, %18 : vector<8x8xi1>, vector<8x8xf32>
    %20 = vector.shape_cast %19 : vector<8x8xf32> to vector<8x8x1xf32>
    %21 = vector.broadcast %20 : vector<8x8x1xf32> to vector<8x8x32xf32>
    %22 = arith.mulf %21, %0 : vector<8x8x32xf32>
    %cst_11 = arith.constant dense<0.000000e+00> : vector<8x32xf32>
    %23 = vector.multi_reduction <add>, %22, %cst_11 [1] : vector<8x8x32xf32> to vector<8x32xf32>
    %c0_12 = arith.constant 0 : index
    %c0_13 = arith.constant 0 : index
    %24 = vector.load %arg7[%c0_12, %c0_13] : memref<8x8xf32, #tpu.memory_space<vmem>>, vector<8x8xf32>
    tpu.vector_store %arg7[%c0_12, %c0_13], %19 {strides = array<i32>} : memref<8x8xf32, #tpu.memory_space<vmem>>, vector<8x8xf32>,
    %c0_14 = arith.constant 0 : index
    %c0_15 = arith.constant 0 : index
    %25 = vector.load %arg5[%c0_14, %c0_15] : memref<32x32xf32, #tpu.memory_space<vmem>>, vector<32x32xf32>
    %cst_16 = arith.constant dense<0.000000e+00> : vector<8x32xf32>
    %26 = tpu.matmul %23, %25, %cst_16 {dimension_numbers = #tpu.dot_dimension_numbers<[1], [0], [0], [1], [0, 0, 1, 1], [], []>} : vector<8x32xf32>, vector<32x32xf32>, vector<8x32xf32> -> vector<8x32xf32>
    %27 = arith.addf %26, %8 : vector<8x32xf32>
    %28 = math.tanh %27 : vector<8x32xf32>
    %c0_17 = arith.constant 0 : index
    %c0_18 = arith.constant 0 : index
    %29 = vector.load %arg6[%c0_17, %c0_18] : memref<8x32xf32, #tpu.memory_space<vmem>>, vector<8x32xf32>
    tpu.vector_store %arg6[%c0_17, %c0_18], %28 {strides = array<i32>} : memref<8x32xf32, #tpu.memory_space<vmem>>, vector<8x32xf32>,
    return
  }
  func.func @transform_0(%arg0: i32) -> (i32, i32) {
    %c0_i32 = arith.constant 0 : i32
    %c0_i32_0 = arith.constant 0 : i32
    return %arg0, %c0_i32 : i32, i32
  }
  func.func @transform_1(%arg0: i32) -> (i32, i32, i32) {
    %c0_i32 = arith.constant 0 : i32
    %c0_i32_0 = arith.constant 0 : i32
    %c0_i32_1 = arith.constant 0 : i32
    return %arg0, %c0_i32, %c0_i32_0 : i32, i32, i32
  }
  func.func @transform_2(%arg0: i32) -> (i32, i32) {
    %c0_i32 = arith.constant 0 : i32
    %c0_i32_0 = arith.constant 0 : i32
    return %arg0, %c0_i32 : i32, i32
  }
  func.func @transform_3(%arg0: i32) -> (i32, i32) {
    %c0_i32 = arith.constant 0 : i32
    %c0_i32_0 = arith.constant 0 : i32
    %c0_i32_1 = arith.constant 0 : i32
    return %c0_i32, %c0_i32_0 : i32, i32
  }
  func.func @transform_4(%arg0: i32) -> (i32, i32) {
    %c0_i32 = arith.constant 0 : i32
    %c0_i32_0 = arith.constant 0 : i32
    %c0_i32_1 = arith.constant 0 : i32
    return %c0_i32, %c0_i32_0 : i32, i32
  }
  func.func @transform_5(%arg0: i32) -> (i32, i32) {
    %c0_i32 = arith.constant 0 : i32
    %c0_i32_0 = arith.constant 0 : i32
    return %arg0, %c0_i32 : i32, i32
  }
  func.func @transform_6(%arg0: i32) -> (i32, i32) {
    %c0_i32 = arith.constant 0 : i32
    %c0_i32_0 = arith.constant 0 : i32
    return %arg0, %c0_i32 : i32, i32
  }
}

</mosaic_0001>

<llo_original>
// kernel: tpu_custom_call.1
$region0: #{tpu_custom_call.1}
  #allocation0 [shape = 'u32[]', space=smem, size = 0x4, offset = 0x4, fixed_abs, tag = 'smem constant byte address 0x4 - core index']
  #allocation1 [shape = 'u32[144,128]{1,0:T(1,128)}', space=vmem, size = 0x12000, scoped, tag = 'internal scratch']
  %s0 = inlined_call_operand.hbm [shape: f32[8,32], index: 0, kind: input, shape index: {}]
  %s1 = inlined_call_operand.hbm [shape: f32[2,8,32], index: 1, kind: input, shape index: {}]
  %s2 = inlined_call_operand.hbm [shape: s32[8,8], index: 2, kind: input, shape index: {}]
  %s3 = inlined_call_operand.hbm [shape: f32[32,64], index: 3, kind: input, shape index: {}]
  %s4 = inlined_call_operand.hbm [shape: f32[32,32], index: 4, kind: input, shape index: {}]
  %s5 = inlined_call_operand.hbm [shape: f32[8,32], index: 5, kind: output, shape index: {0}]
  %s6 = inlined_call_operand.hbm [shape: f32[8,8], index: 6, kind: output, shape index: {1}]
  %7 = xla_tuple %s5, %s6
  %s8 = sld [smem:[#allocation0]]
  $region58: #{tpu_custom_call.1} parent=0
    _
  %s10 = ssub.s32 1, %s8
  %s11 = scalar_select 0, %s10, %s8
  $region1: #{tpu_custom_call.1} parent=0
    #allocation2 [shape = 'u8[4096]{0}', space=vmem, size = 0x1000, scoped, tag = 'input window, operand 0, single buffered']
    #allocation3 [shape = 's32[1]{0}', space=sflag, size = 0x4, scoped, tag = 'scoped memory for tpu_custom_call.1']
    #allocation4 [shape = 's32[1]{0}', space=sflag, size = 0x4, scoped, tag = 'scoped memory for tpu_custom_call.1']
    #allocation5 [shape = 'u8[32768]{0}', space=vmem, size = 0x8000, scoped, tag = 'input window, operand 1, single buffered']
    #allocation6 [shape = 's32[1]{0}', space=sflag, size = 0x4, scoped, tag = 'scoped memory for tpu_custom_call.1']
    #allocation7 [shape = 'u8[4096]{0}', space=vmem, size = 0x1000, scoped, tag = 'input window, operand 2, single buffered']
    #allocation8 [shape = 'u8[16384]{0}', space=vmem, size = 0x4000, scoped, tag = 'input window, operand 3, single buffered']
    #allocation9 [shape = 's32[1]{0}', space=sflag, size = 0x4, scoped, tag = 'scoped memory for tpu_custom_call.1']
    #allocation10 [shape = 'u8[16384]{0}', space=vmem, size = 0x4000, scoped, tag = 'input window, operand 4, single buffered']
    #allocation11 [shape = 'u8[4096]{0}', space=vmem, size = 0x1000, scoped, tag = 'output window, operand 0, single buffered']
    #allocation12 [shape = 'u8[4096]{0}', space=vmem, size = 0x1000, scoped, tag = 'output window, operand 1, single buffered']
    #allocation13 [shape = 's32[1]{0}', space=sflag, size = 0x4, scoped, tag = 'scoped memory for tpu_custom_call.1']
    %12 = vsyncpa [#allocation3], 0
    %13 = vsyncpa [#allocation6], 0
    %14 = vsyncpa [#allocation9], 0
    %15 = vsyncpa [#allocation4], 0
    %16 = vsyncpa [#allocation13], 0
    // Predicated region
    $region2: #{tpu_custom_call.1} parent=1 // pred_check
      _
    $region3: #{tpu_custom_call.1} parent=1 // pred_check_branch
      %18 = sbr.rel (0) target = $region5
    $region4: #{tpu_custom_call.1} parent=1 // pred_region
      %s20 = ssub.s32 128, 128
      %21 = vsyncadd [#allocation3], %s20
      %s23 = sshll.u32 [#allocation2], 4
      %s24 = int_to_ptr.vmem [resolvable:$true] %s23
      %26 = dma.hbm_to_vmem [thread:$0]  %s0, 128, %s24, [#allocation3]
    $region5: #{tpu_custom_call.1} parent=1 // pred_fallthru
      _
    // Predicated region
    $region6: #{tpu_custom_call.1} parent=1 // pred_check
      _
    $region7: #{tpu_custom_call.1} parent=1 // pred_check_branch
      %28 = sbr.rel (0) target = $region9
    $region8: #{tpu_custom_call.1} parent=1 // pred_region
      %s30 = ssub.s32 1024, 256
      %31 = vsyncadd [#allocation6], %s30
      %s32 = sshll.u32 [#allocation5], 4
      %s33 = int_to_ptr.vmem [resolvable:$true] %s32
      %38 = dma.hbm_to_vmem [thread:$0]  %s1, 256, %s33, [#allocation6], 128, 128, 8
    $region9: #{tpu_custom_call.1} parent=1 // pred_fallthru
      _
    // Predicated region
    $region10: #{tpu_custom_call.1} parent=1 // pred_check
      _
    $region11: #{tpu_custom_call.1} parent=1 // pred_check_branch
      %40 = sbr.rel (0) target = $region13
    $region12: #{tpu_custom_call.1} parent=1 // pred_region
      %s42 = ssub.s32 128, 128
      %43 = vsyncadd [#allocation6], %s42
      %s45 = sshll.u32 [#allocation7], 4
      %s46 = int_to_ptr.vmem [resolvable:$true] %s45
      %48 = dma.hbm_to_vmem [thread:$0]  %s2, 128, %s46, [#allocation6]
    $region13: #{tpu_custom_call.1} parent=1 // pred_fallthru
      _
    // Predicated region
    $region14: #{tpu_custom_call.1} parent=1 // pred_check
      _
    $region15: #{tpu_custom_call.1} parent=1 // pred_check_branch
      %50 = sbr.rel (0) target = $region17
    $region16: #{tpu_custom_call.1} parent=1 // pred_region
      %s52 = ssub.s32 512, 512
      %53 = vsyncadd [#allocation9], %s52
      %s54 = sshll.u32 [#allocation8], 4
      %s55 = int_to_ptr.vmem [resolvable:$true] %s54
      %60 = dma.hbm_to_vmem [thread:$0]  %s3, 512, %s55, [#allocation9], 128, 128, 8
    $region17: #{tpu_custom_call.1} parent=1 // pred_fallthru
      _
    // Predicated region
    $region18: #{tpu_custom_call.1} parent=1 // pred_check
      _
    $region19: #{tpu_custom_call.1} parent=1 // pred_check_branch
      %62 = sbr.rel (0) target = $region21
    $region20: #{tpu_custom_call.1} parent=1 // pred_region
      %s64 = ssub.s32 512, 512
      %65 = vsyncadd [#allocation9], %s64
      %s66 = sshll.u32 [#allocation10], 4
      %s67 = int_to_ptr.vmem [resolvable:$true] %s66
      %72 = dma.hbm_to_vmem [thread:$0]  %s4, 512, %s67, [#allocation9], 128, 128, 8
    $region21: #{tpu_custom_call.1} parent=1 // pred_fallthru
      _
    // Predicated region
    $region22: #{tpu_custom_call.1} parent=1 // pred_check
      _
    $region23: #{tpu_custom_call.1} parent=1 // pred_check_branch
      %74 = sbr.rel (0) target = $region25
    $region24: #{tpu_custom_call.1} parent=1 // pred_region
      %75 = dma.done [#allocation3], 128
    $region25: #{tpu_custom_call.1} parent=1 // pred_fallthru
      _
    // Predicated region
    $region26: #{tpu_custom_call.1} parent=1 // pred_check
      _
    $region27: #{tpu_custom_call.1} parent=1 // pred_check_branch
      %77 = sbr.rel (0) target = $region29
    $region28: #{tpu_custom_call.1} parent=1 // pred_region
      %78 = dma.done [#allocation6], 1024
    $region29: #{tpu_custom_call.1} parent=1 // pred_fallthru
      _
    // Predicated region
    $region30: #{tpu_custom_call.1} parent=1 // pred_check
      _
    $region31: #{tpu_custom_call.1} parent=1 // pred_check_branch
      %80 = sbr.rel (0) target = $region33
    $region32: #{tpu_custom_call.1} parent=1 // pred_region
      %81 = dma.done [#allocation6], 128
    $region33: #{tpu_custom_call.1} parent=1 // pred_fallthru
      _
    // Predicated region
    $region34: #{tpu_custom_call.1} parent=1 // pred_check
      _
    $region35: #{tpu_custom_call.1} parent=1 // pred_check_branch
      %83 = sbr.rel (0) target = $region37
    $region36: #{tpu_custom_call.1} parent=1 // pred_region
      %84 = dma.done [#allocation9], 512
    $region37: #{tpu_custom_call.1} parent=1 // pred_fallthru
      _
    // Predicated region
    $region38: #{tpu_custom_call.1} parent=1 // pred_check
      _
    $region39: #{tpu_custom_call.1} parent=1 // pred_check_branch
      %86 = sbr.rel (0) target = $region41
    $region40: #{tpu_custom_call.1} parent=1 // pred_region
      %87 = dma.done [#allocation9], 512
    $region41: #{tpu_custom_call.1} parent=1 // pred_fallthru
      _
    %v88 = vld [vmem:[#allocation5] sm:$0xff]
    %v89 = vld [vmem:[#allocation5 + $0x8] sm:$0xff]
    %v90 = vld [vmem:[#allocation5 + $0x10] sm:$0xff]
    %v91 = vld [vmem:[#allocation5 + $0x18] sm:$0xff]
    %v92 = vld [vmem:[#allocation5 + $0x20] sm:$0xff]
    %v93 = vld [vmem:[#allocation5 + $0x28] sm:$0xff]
    %v94 = vld [vmem:[#allocation5 + $0x30] sm:$0xff]
    %v95 = vld [vmem:[#allocation5 + $0x38] sm:$0xff]
    %v96 = vld [vmem:[#allocation7] sm:$0xff]
    %vm97 = vcmp.eq.s32.totalorder %v96, 0
    %v98 = vld [vmem:[#allocation2] sm:$0xff]
    %v99 = vld [vmem:[#allocation8] sm:$0xff]
    %v100 = vld [vmem:[#allocation8 + $0x8] sm:$0xff]
    %v101 = vld [vmem:[#allocation8 + $0x10] sm:$0xff]
    %v102 = vld [vmem:[#allocation8 + $0x18] sm:$0xff]
    %vm103 = vcmask 261120
    %v105 = vsel %vm103, %v98, 0
    %107 = vmatprep.subr.mxu0 0.0
    %108 = vmatpush1.msra.mxu0 %v99
    %109 = vmatprep.subr.mxu0 0.0
    %110 = vmatpush1.msra.mxu0 %v100
    %111 = vmatprep.subr.mxu0 0.0
    %112 = vmatpush1.msra.mxu0 %v101
    %113 = vmatprep.subr.mxu0 0.0
    %114 = vmatpush1.msra.mxu0 %v102
    %115 = vmatprep.subr.mxu0 0.0
    %116 = vmatpush1.msra.mxu0 0.0
    %117 = vmatprep.subr.mxu0 0.0
    %118 = vmatpush1.msra.mxu0 0.0
    %119 = vmatprep.subr.mxu0 0.0
    %120 = vmatpush1.msra.mxu0 0.0
    %121 = vmatprep.subr.mxu0 0.0
    %122 = vmatpush1.msra.mxu0 0.0
    %123 = vmatprep.subr.mxu0 0.0
    %124 = vmatpush1.msra.mxu0 0.0
    %125 = vmatprep.subr.mxu0 0.0
    %126 = vmatpush1.msra.mxu0 0.0
    %127 = vmatprep.subr.mxu0 0.0
    %128 = vmatpush1.msra.mxu0 0.0
    %129 = vmatprep.subr.mxu0 0.0
    %130 = vmatpush1.msra.mxu0 0.0
    %131 = vmatprep.subr.mxu0 0.0
    %132 = vmatpush1.msra.mxu0 0.0
    %133 = vmatprep.subr.mxu0 0.0
    %134 = vmatpush1.msra.mxu0 0.0
    %135 = vmatprep.subr.mxu0 0.0
    %136 = vmatpush1.msra.mxu0 0.0
    %137 = vmatprep.subr.mxu0 0.0
    %138 = vmatpush1.msra.mxu0 0.0
    %139 = vmatprep.subr.mxu0 0.0
    %140 = vmatpush1.msra.mxu0 0.0
    %141 = vmatprep.subr.mxu0 0.0
    %142 = vmatpush1.msra.mxu0 0.0
    %143 = vmatprep.subr.mxu0 0.0
    %144 = vmatpush1.msra.mxu0 0.0
    %145 = vmatprep.subr.mxu0 0.0
    %146 = vmatpush1.msra.mxu0 0.0
    %147 = vmatprep.subr.mxu0 0.0
    %148 = vmatpush1.msra.mxu0 0.0
    %149 = vmatprep.subr.mxu0 0.0
    %150 = vmatpush1.msra.mxu0 0.0
    %151 = vmatprep.subr.mxu0 0.0
    %152 = vmatpush1.msra.mxu0 0.0
    %153 = vmatprep.subr.mxu0 0.0
    %154 = vmatpush1.msra.mxu0 0.0
    %155 = vmatprep.subr.mxu0 0.0
    %156 = vmatpush1.msra.mxu0 0.0
    %157 = vmatprep.subr.mxu0 0.0
    %158 = vmatpush1.msra.mxu0 0.0
    %159 = vmatprep.subr.mxu0 0.0
    %160 = vmatpush1.msra.mxu0 0.0
    %161 = vmatprep.subr.mxu0 0.0
    %162 = vmatpush1.msra.mxu0 0.0
    %163 = vmatprep.subr.mxu0 0.0
    %164 = vmatpush1.msra.mxu0 0.0
    %165 = vmatprep.subr.mxu0 0.0
    %166 = vmatpush1.msra.mxu0 0.0
    %167 = vmatprep.subr.mxu0 0.0
    %168 = vmatpush1.msra.mxu0 0.0
    %169 = vmatprep.subr.mxu0 0.0
    %170 = vmatpush1.msra.mxu0 0.0
    %171 = vmatprep.mubr.f32.mxu0 0.0
    %172 = vmatmul.mubr.f32.gmra.mrb[0].mxu0 %v105
    %v173 = vpop.f32.mrb[0].mxu0
    %v174 = vadd.f32 0.0, %v173
    %v175 = vpop.f32.mrb[0].mxu0
    %176 = vdwg.mxu0
    %v178 = vcombine.high %v174, %v174
    %v180 = vunpack.c.l.s4 1966171168
    %v181 = vunpack.c.0.s8 %v180
    %v182 = vlaneseq
    %v183 = vshrl.u32 %v182, 7
    %v184 = vsub.s32 %v181, %v183
    %v185 = vrot.slane %v174, %v184
    %v187 = vunpack.c.l.s4 1966171168
    %v188 = vunpack.c.0.s8 %v187
    %v189 = vlaneseq
    %v190 = vshrl.u32 %v189, 7
    %v191 = vsub.s32 %v188, %v190
    %v192 = vrot.slane %v178, %v191
    %v193 = vcombine.high %v185, %v185
    %v194 = vcombine.high %v192, %v192
    %v196 = vunpack.c.l.s4 1966171168
    %v197 = vunpack.c.0.s8 %v196
    %v198 = vlaneseq
    %v199 = vshrl.u32 %v198, 7
    %v200 = vsub.s32 %v197, %v199
    %v201 = vrot.slane %v185, %v200
    %v203 = vunpack.c.l.s4 1966171168
    %v204 = vunpack.c.0.s8 %v203
    %v205 = vlaneseq
    %v206 = vshrl.u32 %v205, 7
    %v207 = vsub.s32 %v204, %v206
    %v208 = vrot.slane %v192, %v207
    %v210 = vunpack.c.l.s4 1966171168
    %v211 = vunpack.c.0.s8 %v210
    %v212 = vlaneseq
    %v213 = vshrl.u32 %v212, 7
    %v214 = vsub.s32 %v211, %v213
    %v215 = vrot.slane %v193, %v214
    %v217 = vunpack.c.l.s4 1966171168
    %v218 = vunpack.c.0.s8 %v217
    %v219 = vlaneseq
    %v220 = vshrl.u32 %v219, 7
    %v221 = vsub.s32 %v218, %v220
    %v222 = vrot.slane %v194, %v221
    %v223 = vcombine.high %v201, %v201
    %v224 = vcombine.high %v208, %v208
    %v225 = vcombine.high %v215, %v215
    %v226 = vcombine.high %v222, %v222
    %v227 = vsel %vm103, %v201, 0
    %v230 = vsel %vm103, %v88, 0
    %232 = vmatprep.subr.mxu0 0.0
    %233 = vmatpush1.xpose.msra.mxu0 %v230
    %234 = vmatprep.subr.mxu0 0.0
    %235 = vmatpush1.xpose.msra.mxu0 0.0
    %236 = vmatprep.subr.mxu0 0.0
    %237 = vmatpush1.xpose.msra.mxu0 0.0
    %238 = vmatprep.subr.mxu0 0.0
    %239 = vmatpush1.xpose.msra.mxu0 0.0
    %240 = vmatprep.subr.mxu0 0.0
    %241 = vmatpush1.xpose.msra.mxu0 0.0
    %242 = vmatprep.subr.mxu0 0.0
    %243 = vmatpush1.xpose.msra.mxu0 0.0
    %244 = vmatprep.subr.mxu0 0.0
    %245 = vmatpush1.xpose.msra.mxu0 0.0
    %246 = vmatprep.subr.mxu0 0.0
    %247 = vmatpush1.xpose.msra.mxu0 0.0
    %248 = vmatprep.subr.mxu0 0.0
    %249 = vmatpush1.xpose.msra.mxu0 0.0
    %250 = vmatprep.subr.mxu0 0.0
    %251 = vmatpush1.xpose.msra.mxu0 0.0
    %252 = vmatprep.subr.mxu0 0.0
    %253 = vmatpush1.xpose.msra.mxu0 0.0
    %254 = vmatprep.subr.mxu0 0.0
    %255 = vmatpush1.xpose.msra.mxu0 0.0
    %256 = vmatprep.subr.mxu0 0.0
    %257 = vmatpush1.xpose.msra.mxu0 0.0
    %258 = vmatprep.subr.mxu0 0.0
    %259 = vmatpush1.xpose.msra.mxu0 0.0
    %260 = vmatprep.subr.mxu0 0.0
    %261 = vmatpush1.xpose.msra.mxu0 0.0
    %262 = vmatprep.subr.mxu0 0.0
    %263 = vmatpush1.xpose.msra.mxu0 0.0
    %264 = vmatprep.subr.mxu0 0.0
    %265 = vmatpush1.xpose.msra.mxu0 0.0
    %266 = vmatprep.subr.mxu0 0.0
    %267 = vmatpush1.xpose.msra.mxu0 0.0
    %268 = vmatprep.subr.mxu0 0.0
    %269 = vmatpush1.xpose.msra.mxu0 0.0
    %270 = vmatprep.subr.mxu0 0.0
    %271 = vmatpush1.xpose.msra.mxu0 0.0
    %272 = vmatprep.subr.mxu0 0.0
    %273 = vmatpush1.xpose.msra.mxu0 0.0
    %274 = vmatprep.subr.mxu0 0.0
    %275 = vmatpush1.xpose.msra.mxu0 0.0
    %276 = vmatprep.subr.mxu0 0.0
    %277 = vmatpush1.xpose.msra.mxu0 0.0
    %278 = vmatprep.subr.mxu0 0.0
    %279 = vmatpush1.xpose.msra.mxu0 0.0
    %280 = vmatprep.subr.mxu0 0.0
    %281 = vmatpush1.xpose.msra.mxu0 0.0
    %282 = vmatprep.subr.mxu0 0.0
    %283 = vmatpush1.xpose.msra.mxu0 0.0
    %284 = vmatprep.subr.mxu0 0.0
    %285 = vmatpush1.xpose.msra.mxu0 0.0
    %286 = vmatprep.subr.mxu0 0.0
    %287 = vmatpush1.xpose.msra.mxu0 0.0
    %288 = vmatprep.subr.mxu0 0.0
    %289 = vmatpush1.xpose.msra.mxu0 0.0
    %290 = vmatprep.subr.mxu0 0.0
    %291 = vmatpush1.xpose.msra.mxu0 0.0
    %292 = vmatprep.subr.mxu0 0.0
    %293 = vmatpush1.xpose.msra.mxu0 0.0
    %294 = vmatprep.subr.mxu0 0.0
    %295 = vmatpush1.xpose.msra.mxu0 0.0
    %296 = vmatprep.mubr.f32.mxu0 0.0
    %297 = vmatmul.mubr.f32.gmra.mrb[0].mxu0 %v227
    %v298 = vpop.f32.mrb[0].mxu0
    %v299 = vadd.f32 0.0, %v298
    %v300 = vpop.f32.mrb[0].mxu0
    %301 = vdwg.mxu0
    %v302 = vsel %vm103, %v215, 0
    %v305 = vsel %vm103, %v89, 0
    %307 = vmatprep.subr.mxu0 0.0
    %308 = vmatpush1.xpose.msra.mxu0 %v305
    %309 = vmatprep.subr.mxu0 0.0
    %310 = vmatpush1.xpose.msra.mxu0 0.0
    %311 = vmatprep.subr.mxu0 0.0
    %312 = vmatpush1.xpose.msra.mxu0 0.0
    %313 = vmatprep.subr.mxu0 0.0
    %314 = vmatpush1.xpose.msra.mxu0 0.0
    %315 = vmatprep.subr.mxu0 0.0
    %316 = vmatpush1.xpose.msra.mxu0 0.0
    %317 = vmatprep.subr.mxu0 0.0
    %318 = vmatpush1.xpose.msra.mxu0 0.0
    %319 = vmatprep.subr.mxu0 0.0
    %320 = vmatpush1.xpose.msra.mxu0 0.0
    %321 = vmatprep.subr.mxu0 0.0
    %322 = vmatpush1.xpose.msra.mxu0 0.0
    %323 = vmatprep.subr.mxu0 0.0
    %324 = vmatpush1.xpose.msra.mxu0 0.0
    %325 = vmatprep.subr.mxu0 0.0
    %326 = vmatpush1.xpose.msra.mxu0 0.0
    %327 = vmatprep.subr.mxu0 0.0
    %328 = vmatpush1.xpose.msra.mxu0 0.0
    %329 = vmatprep.subr.mxu0 0.0
    %330 = vmatpush1.xpose.msra.mxu0 0.0
    %331 = vmatprep.subr.mxu0 0.0
    %332 = vmatpush1.xpose.msra.mxu0 0.0
    %333 = vmatprep.subr.mxu0 0.0
    %334 = vmatpush1.xpose.msra.mxu0 0.0
    %335 = vmatprep.subr.mxu0 0.0
    %336 = vmatpush1.xpose.msra.mxu0 0.0
    %337 = vmatprep.subr.mxu0 0.0
    %338 = vmatpush1.xpose.msra.mxu0 0.0
    %339 = vmatprep.subr.mxu0 0.0
    %340 = vmatpush1.xpose.msra.mxu0 0.0
    %341 = vmatprep.subr.mxu0 0.0
    %342 = vmatpush1.xpose.msra.mxu0 0.0
    %343 = vmatprep.subr.mxu0 0.0
    %344 = vmatpush1.xpose.msra.mxu0 0.0
    %345 = vmatprep.subr.mxu0 0.0
    %346 = vmatpush1.xpose.msra.mxu0 0.0
    %347 = vmatprep.subr.mxu0 0.0
    %348 = vmatpush1.xpose.msra.mxu0 0.0
    %349 = vmatprep.subr.mxu0 0.0
    %350 = vmatpush1.xpose.msra.mxu0 0.0
    %351 = vmatprep.subr.mxu0 0.0
    %352 = vmatpush1.xpose.msra.mxu0 0.0
    %353 = vmatprep.subr.mxu0 0.0
    %354 = vmatpush1.xpose.msra.mxu0 0.0
    %355 = vmatprep.subr.mxu0 0.0
    %356 = vmatpush1.xpose.msra.mxu0 0.0
    %357 = vmatprep.subr.mxu0 0.0
    %358 = vmatpush1.xpose.msra.mxu0 0.0
    %359 = vmatprep.subr.mxu0 0.0
    %360 = vmatpush1.xpose.msra.mxu0 0.0
    %361 = vmatprep.subr.mxu0 0.0
    %362 = vmatpush1.xpose.msra.mxu0 0.0
    %363 = vmatprep.subr.mxu0 0.0
    %364 = vmatpush1.xpose.msra.mxu0 0.0
    %365 = vmatprep.subr.mxu0 0.0
    %366 = vmatpush1.xpose.msra.mxu0 0.0
    %367 = vmatprep.subr.mxu0 0.0
    %368 = vmatpush1.xpose.msra.mxu0 0.0
    %369 = vmatprep.subr.mxu0 0.0
    %370 = vmatpush1.xpose.msra.mxu0 0.0
    %371 = vmatprep.mubr.f32.mxu0 0.0
    %372 = vmatmul.mubr.f32.gmra.mrb[0].mxu0 %v302
    %v373 = vpop.f32.mrb[0].mxu0
    %v374 = vadd.f32 0.0, %v373
    %v375 = vpop.f32.mrb[0].mxu0
    %376 = vdwg.mxu0
    %v377 = vsel %vm103, %v223, 0
    %v380 = vsel %vm103, %v90, 0
    %382 = vmatprep.subr.mxu0 0.0
    %383 = vmatpush1.xpose.msra.mxu0 %v380
    %384 = vmatprep.subr.mxu0 0.0
    %385 = vmatpush1.xpose.msra.mxu0 0.0
    %386 = vmatprep.subr.mxu0 0.0
    %387 = vmatpush1.xpose.msra.mxu0 0.0
    %388 = vmatprep.subr.mxu0 0.0
    %389 = vmatpush1.xpose.msra.mxu0 0.0
    %390 = vmatprep.subr.mxu0 0.0
    %391 = vmatpush1.xpose.msra.mxu0 0.0
    %392 = vmatprep.subr.mxu0 0.0
    %393 = vmatpush1.xpose.msra.mxu0 0.0
    %394 = vmatprep.subr.mxu0 0.0
    %395 = vmatpush1.xpose.msra.mxu0 0.0
    %396 = vmatprep.subr.mxu0 0.0
    %397 = vmatpush1.xpose.msra.mxu0 0.0
    %398 = vmatprep.subr.mxu0 0.0
    %399 = vmatpush1.xpose.msra.mxu0 0.0
    %400 = vmatprep.subr.mxu0 0.0
    %401 = vmatpush1.xpose.msra.mxu0 0.0
    %402 = vmatprep.subr.mxu0 0.0
    %403 = vmatpush1.xpose.msra.mxu0 0.0
    %404 = vmatprep.subr.mxu0 0.0
    %405 = vmatpush1.xpose.msra.mxu0 0.0
    %406 = vmatprep.subr.mxu0 0.0
    %407 = vmatpush1.xpose.msra.mxu0 0.0
    %408 = vmatprep.subr.mxu0 0.0
    %409 = vmatpush1.xpose.msra.mxu0 0.0
    %410 = vmatprep.subr.mxu0 0.0
    %411 = vmatpush1.xpose.msra.mxu0 0.0
    %412 = vmatprep.subr.mxu0 0.0
    %413 = vmatpush1.xpose.msra.mxu0 0.0
    %414 = vmatprep.subr.mxu0 0.0
    %415 = vmatpush1.xpose.msra.mxu0 0.0
    %416 = vmatprep.subr.mxu0 0.0
    %417 = vmatpush1.xpose.msra.mxu0 0.0
    %418 = vmatprep.subr.mxu0 0.0
    %419 = vmatpush1.xpose.msra.mxu0 0.0
    %420 = vmatprep.subr.mxu0 0.0
    %421 = vmatpush1.xpose.msra.mxu0 0.0
    %422 = vmatprep.subr.mxu0 0.0
    %423 = vmatpush1.xpose.msra.mxu0 0.0
    %424 = vmatprep.subr.mxu0 0.0
    %425 = vmatpush1.xpose.msra.mxu0 0.0
    %426 = vmatprep.subr.mxu0 0.0
    %427 = vmatpush1.xpose.msra.mxu0 0.0
    %428 = vmatprep.subr.mxu0 0.0
    %429 = vmatpush1.xpose.msra.mxu0 0.0
    %430 = vmatprep.subr.mxu0 0.0
    %431 = vmatpush1.xpose.msra.mxu0 0.0
    %432 = vmatprep.subr.mxu0 0.0
    %433 = vmatpush1.xpose.msra.mxu0 0.0
    %434 = vmatprep.subr.mxu0 0.0
    %435 = vmatpush1.xpose.msra.mxu0 0.0
    %436 = vmatprep.subr.mxu0 0.0
    %437 = vmatpush1.xpose.msra.mxu0 0.0
    %438 = vmatprep.subr.mxu0 0.0
    %439 = vmatpush1.xpose.msra.mxu0 0.0
    %440 = vmatprep.subr.mxu0 0.0
    %441 = vmatpush1.xpose.msra.mxu0 0.0
    %442 = vmatprep.subr.mxu0 0.0
    %443 = vmatpush1.xpose.msra.mxu0 0.0
    %444 = vmatprep.subr.mxu0 0.0
    %445 = vmatpush1.xpose.msra.mxu0 0.0
    %446 = vmatprep.mubr.f32.mxu0 0.0
    %447 = vmatmul.mubr.f32.gmra.mrb[0].mxu0 %v377
    %v448 = vpop.f32.mrb[0].mxu0
    %v449 = vadd.f32 0.0, %v448
    %v450 = vpop.f32.mrb[0].mxu0
    %451 = vdwg.mxu0
    %v452 = vsel %vm103, %v225, 0
    %v455 = vsel %vm103, %v91, 0
    %457 = vmatprep.subr.mxu0 0.0
    %458 = vmatpush1.xpose.msra.mxu0 %v455
    %459 = vmatprep.subr.mxu0 0.0
    %460 = vmatpush1.xpose.msra.mxu0 0.0
    %461 = vmatprep.subr.mxu0 0.0
    %462 = vmatpush1.xpose.msra.mxu0 0.0
    %463 = vmatprep.subr.mxu0 0.0
    %464 = vmatpush1.xpose.msra.mxu0 0.0
    %465 = vmatprep.subr.mxu0 0.0
    %466 = vmatpush1.xpose.msra.mxu0 0.0
    %467 = vmatprep.subr.mxu0 0.0
    %468 = vmatpush1.xpose.msra.mxu0 0.0
    %469 = vmatprep.subr.mxu0 0.0
    %470 = vmatpush1.xpose.msra.mxu0 0.0
    %471 = vmatprep.subr.mxu0 0.0
    %472 = vmatpush1.xpose.msra.mxu0 0.0
    %473 = vmatprep.subr.mxu0 0.0
    %474 = vmatpush1.xpose.msra.mxu0 0.0
    %475 = vmatprep.subr.mxu0 0.0
    %476 = vmatpush1.xpose.msra.mxu0 0.0
    %477 = vmatprep.subr.mxu0 0.0
    %478 = vmatpush1.xpose.msra.mxu0 0.0
    %479 = vmatprep.subr.mxu0 0.0
    %480 = vmatpush1.xpose.msra.mxu0 0.0
    %481 = vmatprep.subr.mxu0 0.0
    %482 = vmatpush1.xpose.msra.mxu0 0.0
    %483 = vmatprep.subr.mxu0 0.0
    %484 = vmatpush1.xpose.msra.mxu0 0.0
    %485 = vmatprep.subr.mxu0 0.0
    %486 = vmatpush1.xpose.msra.mxu0 0.0
    %487 = vmatprep.subr.mxu0 0.0
    %488 = vmatpush1.xpose.msra.mxu0 0.0
    %489 = vmatprep.subr.mxu0 0.0
    %490 = vmatpush1.xpose.msra.mxu0 0.0
    %491 = vmatprep.subr.mxu0 0.0
    %492 = vmatpush1.xpose.msra.mxu0 0.0
    %493 = vmatprep.subr.mxu0 0.0
    %494 = vmatpush1.xpose.msra.mxu0 0.0
    %495 = vmatprep.subr.mxu0 0.0
    %496 = vmatpush1.xpose.msra.mxu0 0.0
    %497 = vmatprep.subr.mxu0 0.0
    %498 = vmatpush1.xpose.msra.mxu0 0.0
    %499 = vmatprep.subr.mxu0 0.0
    %500 = vmatpush1.xpose.msra.mxu0 0.0
    %501 = vmatprep.subr.mxu0 0.0
    %502 = vmatpush1.xpose.msra.mxu0 0.0
    %503 = vmatprep.subr.mxu0 0.0
    %504 = vmatpush1.xpose.msra.mxu0 0.0
    %505 = vmatprep.subr.mxu0 0.0
    %506 = vmatpush1.xpose.msra.mxu0 0.0
    %507 = vmatprep.subr.mxu0 0.0
    %508 = vmatpush1.xpose.msra.mxu0 0.0
    %509 = vmatprep.subr.mxu0 0.0
    %510 = vmatpush1.xpose.msra.mxu0 0.0
    %511 = vmatprep.subr.mxu0 0.0
    %512 = vmatpush1.xpose.msra.mxu0 0.0
    %513 = vmatprep.subr.mxu0 0.0
    %514 = vmatpush1.xpose.msra.mxu0 0.0
    %515 = vmatprep.subr.mxu0 0.0
    %516 = vmatpush1.xpose.msra.mxu0 0.0
    %517 = vmatprep.subr.mxu0 0.0
    %518 = vmatpush1.xpose.msra.mxu0 0.0
    %519 = vmatprep.subr.mxu0 0.0
    %520 = vmatpush1.xpose.msra.mxu0 0.0
    %521 = vmatprep.mubr.f32.mxu0 0.0
    %522 = vmatmul.mubr.f32.gmra.mrb[0].mxu0 %v452
    %v523 = vpop.f32.mrb[0].mxu0
    %v524 = vadd.f32 0.0, %v523
    %v525 = vpop.f32.mrb[0].mxu0
    %526 = vdwg.mxu0
    %v527 = vsel %vm103, %v208, 0
    %v530 = vsel %vm103, %v92, 0
    %532 = vmatprep.subr.mxu0 0.0
    %533 = vmatpush1.xpose.msra.mxu0 %v530
    %534 = vmatprep.subr.mxu0 0.0
    %535 = vmatpush1.xpose.msra.mxu0 0.0
    %536 = vmatprep.subr.mxu0 0.0
    %537 = vmatpush1.xpose.msra.mxu0 0.0
    %538 = vmatprep.subr.mxu0 0.0
    %539 = vmatpush1.xpose.msra.mxu0 0.0
    %540 = vmatprep.subr.mxu0 0.0
    %541 = vmatpush1.xpose.msra.mxu0 0.0
    %542 = vmatprep.subr.mxu0 0.0
    %543 = vmatpush1.xpose.msra.mxu0 0.0
    %544 = vmatprep.subr.mxu0 0.0
    %545 = vmatpush1.xpose.msra.mxu0 0.0
    %546 = vmatprep.subr.mxu0 0.0
    %547 = vmatpush1.xpose.msra.mxu0 0.0
    %548 = vmatprep.subr.mxu0 0.0
    %549 = vmatpush1.xpose.msra.mxu0 0.0
    %550 = vmatprep.subr.mxu0 0.0
    %551 = vmatpush1.xpose.msra.mxu0 0.0
    %552 = vmatprep.subr.mxu0 0.0
    %553 = vmatpush1.xpose.msra.mxu0 0.0
    %554 = vmatprep.subr.mxu0 0.0
    %555 = vmatpush1.xpose.msra.mxu0 0.0
    %556 = vmatprep.subr.mxu0 0.0
    %557 = vmatpush1.xpose.msra.mxu0 0.0
    %558 = vmatprep.subr.mxu0 0.0
    %559 = vmatpush1.xpose.msra.mxu0 0.0
    %560 = vmatprep.subr.mxu0 0.0
    %561 = vmatpush1.xpose.msra.mxu0 0.0
    %562 = vmatprep.subr.mxu0 0.0
    %563 = vmatpush1.xpose.msra.mxu0 0.0
    %564 = vmatprep.subr.mxu0 0.0
    %565 = vmatpush1.xpose.msra.mxu0 0.0
    %566 = vmatprep.subr.mxu0 0.0
    %567 = vmatpush1.xpose.msra.mxu0 0.0
    %568 = vmatprep.subr.mxu0 0.0
    %569 = vmatpush1.xpose.msra.mxu0 0.0
    %570 = vmatprep.subr.mxu0 0.0
    %571 = vmatpush1.xpose.msra.mxu0 0.0
    %572 = vmatprep.subr.mxu0 0.0
    %573 = vmatpush1.xpose.msra.mxu0 0.0
    %574 = vmatprep.subr.mxu0 0.0
    %575 = vmatpush1.xpose.msra.mxu0 0.0
    %576 = vmatprep.subr.mxu0 0.0
    %577 = vmatpush1.xpose.msra.mxu0 0.0
    %578 = vmatprep.subr.mxu0 0.0
    %579 = vmatpush1.xpose.msra.mxu0 0.0
    %580 = vmatprep.subr.mxu0 0.0
    %581 = vmatpush1.xpose.msra.mxu0 0.0
    %582 = vmatprep.subr.mxu0 0.0
    %583 = vmatpush1.xpose.msra.mxu0 0.0
    %584 = vmatprep.subr.mxu0 0.0
    %585 = vmatpush1.xpose.msra.mxu0 0.0
    %586 = vmatprep.subr.mxu0 0.0
    %587 = vmatpush1.xpose.msra.mxu0 0.0
    %588 = vmatprep.subr.mxu0 0.0
    %589 = vmatpush1.xpose.msra.mxu0 0.0
    %590 = vmatprep.subr.mxu0 0.0
    %591 = vmatpush1.xpose.msra.mxu0 0.0
    %592 = vmatprep.subr.mxu0 0.0
    %593 = vmatpush1.xpose.msra.mxu0 0.0
    %594 = vmatprep.subr.mxu0 0.0
    %595 = vmatpush1.xpose.msra.mxu0 0.0
    %596 = vmatprep.mubr.f32.mxu0 0.0
    %597 = vmatmul.mubr.f32.gmra.mrb[0].mxu0 %v527
    %v598 = vpop.f32.mrb[0].mxu0
    %v599 = vadd.f32 0.0, %v598
    %v600 = vpop.f32.mrb[0].mxu0
    %601 = vdwg.mxu0
    %v602 = vsel %vm103, %v222, 0
    %v605 = vsel %vm103, %v93, 0
    %607 = vmatprep.subr.mxu0 0.0
    %608 = vmatpush1.xpose.msra.mxu0 %v605
    %609 = vmatprep.subr.mxu0 0.0
    %610 = vmatpush1.xpose.msra.mxu0 0.0
    %611 = vmatprep.subr.mxu0 0.0
    %612 = vmatpush1.xpose.msra.mxu0 0.0
    %613 = vmatprep.subr.mxu0 0.0
    %614 = vmatpush1.xpose.msra.mxu0 0.0
    %615 = vmatprep.subr.mxu0 0.0
    %616 = vmatpush1.xpose.msra.mxu0 0.0
    %617 = vmatprep.subr.mxu0 0.0
    %618 = vmatpush1.xpose.msra.mxu0 0.0
    %619 = vmatprep.subr.mxu0 0.0
    %620 = vmatpush1.xpose.msra.mxu0 0.0
    %621 = vmatprep.subr.mxu0 0.0
    %622 = vmatpush1.xpose.msra.mxu0 0.0
    %623 = vmatprep.subr.mxu0 0.0
    %624 = vmatpush1.xpose.msra.mxu0 0.0
    %625 = vmatprep.subr.mxu0 0.0
    %626 = vmatpush1.xpose.msra.mxu0 0.0
    %627 = vmatprep.subr.mxu0 0.0
    %628 = vmatpush1.xpose.msra.mxu0 0.0
    %629 = vmatprep.subr.mxu0 0.0
    %630 = vmatpush1.xpose.msra.mxu0 0.0
    %631 = vmatprep.subr.mxu0 0.0
    %632 = vmatpush1.xpose.msra.mxu0 0.0
    %633 = vmatprep.subr.mxu0 0.0
    %634 = vmatpush1.xpose.msra.mxu0 0.0
    %635 = vmatprep.subr.mxu0 0.0
    %636 = vmatpush1.xpose.msra.mxu0 0.0
    %637 = vmatprep.subr.mxu0 0.0
    %638 = vmatpush1.xpose.msra.mxu0 0.0
    %639 = vmatprep.subr.mxu0 0.0
    %640 = vmatpush1.xpose.msra.mxu0 0.0
    %641 = vmatprep.subr.mxu0 0.0
    %642 = vmatpush1.xpose.msra.mxu0 0.0
    %643 = vmatprep.subr.mxu0 0.0
    %644 = vmatpush1.xpose.msra.mxu0 0.0
    %645 = vmatprep.subr.mxu0 0.0
    %646 = vmatpush1.xpose.msra.mxu0 0.0
    %647 = vmatprep.subr.mxu0 0.0
    %648 = vmatpush1.xpose.msra.mxu0 0.0
    %649 = vmatprep.subr.mxu0 0.0
    %650 = vmatpush1.xpose.msra.mxu0 0.0
    %651 = vmatprep.subr.mxu0 0.0
    %652 = vmatpush1.xpose.msra.mxu0 0.0
    %653 = vmatprep.subr.mxu0 0.0
    %654 = vmatpush1.xpose.msra.mxu0 0.0
    %655 = vmatprep.subr.mxu0 0.0
    %656 = vmatpush1.xpose.msra.mxu0 0.0
    %657 = vmatprep.subr.mxu0 0.0
    %658 = vmatpush1.xpose.msra.mxu0 0.0
    %659 = vmatprep.subr.mxu0 0.0
    %660 = vmatpush1.xpose.msra.mxu0 0.0
    %661 = vmatprep.subr.mxu0 0.0
    %662 = vmatpush1.xpose.msra.mxu0 0.0
    %663 = vmatprep.subr.mxu0 0.0
    %664 = vmatpush1.xpose.msra.mxu0 0.0
    %665 = vmatprep.subr.mxu0 0.0
    %666 = vmatpush1.xpose.msra.mxu0 0.0
    %667 = vmatprep.subr.mxu0 0.0
    %668 = vmatpush1.xpose.msra.mxu0 0.0
    %669 = vmatprep.subr.mxu0 0.0
    %670 = vmatpush1.xpose.msra.mxu0 0.0
    %671 = vmatprep.mubr.f32.mxu0 0.0
    %672 = vmatmul.mubr.f32.gmra.mrb[0].mxu0 %v602
    %v673 = vpop.f32.mrb[0].mxu0
    %v674 = vadd.f32 0.0, %v673
    %v675 = vpop.f32.mrb[0].mxu0
    %676 = vdwg.mxu0
    %v677 = vsel %vm103, %v224, 0
    %v680 = vsel %vm103, %v94, 0
    %682 = vmatprep.subr.mxu0 0.0
    %683 = vmatpush1.xpose.msra.mxu0 %v680
    %684 = vmatprep.subr.mxu0 0.0
    %685 = vmatpush1.xpose.msra.mxu0 0.0
    %686 = vmatprep.subr.mxu0 0.0
    %687 = vmatpush1.xpose.msra.mxu0 0.0
    %688 = vmatprep.subr.mxu0 0.0
    %689 = vmatpush1.xpose.msra.mxu0 0.0
    %690 = vmatprep.subr.mxu0 0.0
    %691 = vmatpush1.xpose.msra.mxu0 0.0
    %692 = vmatprep.subr.mxu0 0.0
    %693 = vmatpush1.xpose.msra.mxu0 0.0
    %694 = vmatprep.subr.mxu0 0.0
    %695 = vmatpush1.xpose.msra.mxu0 0.0
    %696 = vmatprep.subr.mxu0 0.0
    %697 = vmatpush1.xpose.msra.mxu0 0.0
    %698 = vmatprep.subr.mxu0 0.0
    %699 = vmatpush1.xpose.msra.mxu0 0.0
    %700 = vmatprep.subr.mxu0 0.0
    %701 = vmatpush1.xpose.msra.mxu0 0.0
    %702 = vmatprep.subr.mxu0 0.0
    %703 = vmatpush1.xpose.msra.mxu0 0.0
    %704 = vmatprep.subr.mxu0 0.0
    %705 = vmatpush1.xpose.msra.mxu0 0.0
    %706 = vmatprep.subr.mxu0 0.0
    %707 = vmatpush1.xpose.msra.mxu0 0.0
    %708 = vmatprep.subr.mxu0 0.0
    %709 = vmatpush1.xpose.msra.mxu0 0.0
    %710 = vmatprep.subr.mxu0 0.0
    %711 = vmatpush1.xpose.msra.mxu0 0.0
    %712 = vmatprep.subr.mxu0 0.0
    %713 = vmatpush1.xpose.msra.mxu0 0.0
    %714 = vmatprep.subr.mxu0 0.0
    %715 = vmatpush1.xpose.msra.mxu0 0.0
    %716 = vmatprep.subr.mxu0 0.0
    %717 = vmatpush1.xpose.msra.mxu0 0.0
    %718 = vmatprep.subr.mxu0 0.0
    %719 = vmatpush1.xpose.msra.mxu0 0.0
    %720 = vmatprep.subr.mxu0 0.0
    %721 = vmatpush1.xpose.msra.mxu0 0.0
    %722 = vmatprep.subr.mxu0 0.0
    %723 = vmatpush1.xpose.msra.mxu0 0.0
    %724 = vmatprep.subr.mxu0 0.0
    %725 = vmatpush1.xpose.msra.mxu0 0.0
    %726 = vmatprep.subr.mxu0 0.0
    %727 = vmatpush1.xpose.msra.mxu0 0.0
    %728 = vmatprep.subr.mxu0 0.0
    %729 = vmatpush1.xpose.msra.mxu0 0.0
    %730 = vmatprep.subr.mxu0 0.0
    %731 = vmatpush1.xpose.msra.mxu0 0.0
    %732 = vmatprep.subr.mxu0 0.0
    %733 = vmatpush1.xpose.msra.mxu0 0.0
    %734 = vmatprep.subr.mxu0 0.0
    %735 = vmatpush1.xpose.msra.mxu0 0.0
    %736 = vmatprep.subr.mxu0 0.0
    %737 = vmatpush1.xpose.msra.mxu0 0.0
    %738 = vmatprep.subr.mxu0 0.0
    %739 = vmatpush1.xpose.msra.mxu0 0.0
    %740 = vmatprep.subr.mxu0 0.0
    %741 = vmatpush1.xpose.msra.mxu0 0.0
    %742 = vmatprep.subr.mxu0 0.0
    %743 = vmatpush1.xpose.msra.mxu0 0.0
    %744 = vmatprep.subr.mxu0 0.0
    %745 = vmatpush1.xpose.msra.mxu0 0.0
    %746 = vmatprep.mubr.f32.mxu0 0.0
    %747 = vmatmul.mubr.f32.gmra.mrb[0].mxu0 %v677
    %v748 = vpop.f32.mrb[0].mxu0
    %v749 = vadd.f32 0.0, %v748
    %v750 = vpop.f32.mrb[0].mxu0
    %751 = vdwg.mxu0
    %v752 = vsel %vm103, %v226, 0
    %v755 = vsel %vm103, %v95, 0
    %757 = vmatprep.subr.mxu0 0.0
    %758 = vmatpush1.xpose.msra.mxu0 %v755
    %759 = vmatprep.subr.mxu0 0.0
    %760 = vmatpush1.xpose.msra.mxu0 0.0
    %761 = vmatprep.subr.mxu0 0.0
    %762 = vmatpush1.xpose.msra.mxu0 0.0
    %763 = vmatprep.subr.mxu0 0.0
    %764 = vmatpush1.xpose.msra.mxu0 0.0
    %765 = vmatprep.subr.mxu0 0.0
    %766 = vmatpush1.xpose.msra.mxu0 0.0
    %767 = vmatprep.subr.mxu0 0.0
    %768 = vmatpush1.xpose.msra.mxu0 0.0
    %769 = vmatprep.subr.mxu0 0.0
    %770 = vmatpush1.xpose.msra.mxu0 0.0
    %771 = vmatprep.subr.mxu0 0.0
    %772 = vmatpush1.xpose.msra.mxu0 0.0
    %773 = vmatprep.subr.mxu0 0.0
    %774 = vmatpush1.xpose.msra.mxu0 0.0
    %775 = vmatprep.subr.mxu0 0.0
    %776 = vmatpush1.xpose.msra.mxu0 0.0
    %777 = vmatprep.subr.mxu0 0.0
    %778 = vmatpush1.xpose.msra.mxu0 0.0
    %779 = vmatprep.subr.mxu0 0.0
    %780 = vmatpush1.xpose.msra.mxu0 0.0
    %781 = vmatprep.subr.mxu0 0.0
    %782 = vmatpush1.xpose.msra.mxu0 0.0
    %783 = vmatprep.subr.mxu0 0.0
    %784 = vmatpush1.xpose.msra.mxu0 0.0
    %785 = vmatprep.subr.mxu0 0.0
    %786 = vmatpush1.xpose.msra.mxu0 0.0
    %787 = vmatprep.subr.mxu0 0.0
    %788 = vmatpush1.xpose.msra.mxu0 0.0
    %789 = vmatprep.subr.mxu0 0.0
    %790 = vmatpush1.xpose.msra.mxu0 0.0
    %791 = vmatprep.subr.mxu0 0.0
    %792 = vmatpush1.xpose.msra.mxu0 0.0
    %793 = vmatprep.subr.mxu0 0.0
    %794 = vmatpush1.xpose.msra.mxu0 0.0
    %795 = vmatprep.subr.mxu0 0.0
    %796 = vmatpush1.xpose.msra.mxu0 0.0
    %797 = vmatprep.subr.mxu0 0.0
    %798 = vmatpush1.xpose.msra.mxu0 0.0
    %799 = vmatprep.subr.mxu0 0.0
    %800 = vmatpush1.xpose.msra.mxu0 0.0
    %801 = vmatprep.subr.mxu0 0.0
    %802 = vmatpush1.xpose.msra.mxu0 0.0
    %803 = vmatprep.subr.mxu0 0.0
    %804 = vmatpush1.xpose.msra.mxu0 0.0
    %805 = vmatprep.subr.mxu0 0.0
    %806 = vmatpush1.xpose.msra.mxu0 0.0
    %807 = vmatprep.subr.mxu0 0.0
    %808 = vmatpush1.xpose.msra.mxu0 0.0
    %809 = vmatprep.subr.mxu0 0.0
    %810 = vmatpush1.xpose.msra.mxu0 0.0
    %811 = vmatprep.subr.mxu0 0.0
    %812 = vmatpush1.xpose.msra.mxu0 0.0
    %813 = vmatprep.subr.mxu0 0.0
    %814 = vmatpush1.xpose.msra.mxu0 0.0
    %815 = vmatprep.subr.mxu0 0.0
    %816 = vmatpush1.xpose.msra.mxu0 0.0
    %817 = vmatprep.subr.mxu0 0.0
    %818 = vmatpush1.xpose.msra.mxu0 0.0
    %819 = vmatprep.subr.mxu0 0.0
    %820 = vmatpush1.xpose.msra.mxu0 0.0
    %821 = vmatprep.mubr.f32.mxu0 0.0
    %822 = vmatmul.mubr.f32.gmra.mrb[0].mxu0 %v752
    %v823 = vpop.f32.mrb[0].mxu0
    %v824 = vadd.f32 0.0, %v823
    %v825 = vpop.f32.mrb[0].mxu0
    %826 = vdwg.mxu0
    %v827 = vxor.u32 %v299, 2147483648
    %v828 = vxor.u32 %v374, 2147483648
    %v829 = vxor.u32 %v449, 2147483648
    %v830 = vxor.u32 %v524, 2147483648
    %v831 = vxor.u32 %v599, 2147483648
    %v832 = vxor.u32 %v674, 2147483648
    %v833 = vxor.u32 %v749, 2147483648
    %v834 = vxor.u32 %v824, 2147483648
    %v835 = vmul.f32 %v827, 1.442695
    %v836 = vpow.pop %v835
    %v837 = vmul.f32 %v828, 1.442695
    %v838 = vpow.pop %v837
    %v839 = vmul.f32 %v829, 1.442695
    %v840 = vpow.pop %v839
    %v841 = vmul.f32 %v830, 1.442695
    %v842 = vpow.pop %v841
    %v843 = vmul.f32 %v831, 1.442695
    %v844 = vpow.pop %v843
    %v845 = vmul.f32 %v832, 1.442695
    %v846 = vpow.pop %v845
    %v847 = vmul.f32 %v833, 1.442695
    %v848 = vpow.pop %v847
    %v849 = vmul.f32 %v834, 1.442695
    %v850 = vpow.pop %v849
    %v851 = vadd.f32 %v836, 1.0
    %v852 = vadd.f32 %v838, 1.0
    %v853 = vadd.f32 %v840, 1.0
    %v854 = vadd.f32 %v842, 1.0
    %v855 = vadd.f32 %v844, 1.0
    %v856 = vadd.f32 %v846, 1.0
    %v857 = vadd.f32 %v848, 1.0
    %v858 = vadd.f32 %v850, 1.0
    %v859 = vrcp.pop %v851
    %v860 = vmul.f32 1.0, %v859
    %v861 = vrcp.pop %v852
    %v862 = vmul.f32 1.0, %v861
    %v863 = vrcp.pop %v853
    %v864 = vmul.f32 1.0, %v863
    %v865 = vrcp.pop %v854
    %v866 = vmul.f32 1.0, %v865
    %v867 = vrcp.pop %v855
    %v868 = vmul.f32 1.0, %v867
    %v869 = vrcp.pop %v856
    %v870 = vmul.f32 1.0, %v869
    %v871 = vrcp.pop %v857
    %v872 = vmul.f32 1.0, %v871
    %v873 = vrcp.pop %v858
    %v874 = vmul.f32 1.0, %v873
    %v883 = vrot.slane %v862, 7
    %vm884 = vcmask 1041409
    %v885 = vsel %vm884, %v883, %v860
    %v886 = vrot.slane %v864, 6
    %vm887 = vcmask 1042434
    %v888 = vsel %vm887, %v886, %v885
    %v889 = vrot.slane %v866, 5
    %vm890 = vcmask 1043459
    %v891 = vsel %vm890, %v889, %v888
    %v892 = vrot.slane %v868, 4
    %vm893 = vcmask 1044484
    %v894 = vsel %vm893, %v892, %v891
    %v895 = vrot.slane %v870, 3
    %vm896 = vcmask 1045509
    %v897 = vsel %vm896, %v895, %v894
    %v898 = vrot.slane %v872, 2
    %vm899 = vcmask 1046534
    %v900 = vsel %vm899, %v898, %v897
    %v901 = vrot.slane %v874, 1
    %vm902 = vcmask 1047559
    %v903 = vsel %vm902, %v901, %v900
    %v905 = vsel %vm97, %v903, 0.0
    %v907 = vcombine.high %v905, %v905
    %v909 = vunpack.c.l.s4 1966171168
    %v910 = vunpack.c.0.s8 %v909
    %v911 = vlaneseq
    %v912 = vshrl.u32 %v911, 7
    %v913 = vsub.s32 %v910, %v912
    %v914 = vrot.slane %v905, %v913
    %v916 = vunpack.c.l.s4 1966171168
    %v917 = vunpack.c.0.s8 %v916
    %v918 = vlaneseq
    %v919 = vshrl.u32 %v918, 7
    %v920 = vsub.s32 %v917, %v919
    %v921 = vrot.slane %v907, %v920
    %v922 = vcombine.high %v914, %v914
    %v923 = vcombine.high %v921, %v921
    %v925 = vunpack.c.l.s4 1966171168
    %v926 = vunpack.c.0.s8 %v925
    %v927 = vlaneseq
    %v928 = vshrl.u32 %v927, 7
    %v929 = vsub.s32 %v926, %v928
    %v930 = vrot.slane %v914, %v929
    %v932 = vunpack.c.l.s4 1966171168
    %v933 = vunpack.c.0.s8 %v932
    %v934 = vlaneseq
    %v935 = vshrl.u32 %v934, 7
    %v936 = vsub.s32 %v933, %v935
    %v937 = vrot.slane %v921, %v936
    %v939 = vunpack.c.l.s4 1966171168
    %v940 = vunpack.c.0.s8 %v939
    %v941 = vlaneseq
    %v942 = vshrl.u32 %v941, 7
    %v943 = vsub.s32 %v940, %v942
    %v944 = vrot.slane %v922, %v943
    %v946 = vunpack.c.l.s4 1966171168
    %v947 = vunpack.c.0.s8 %v946
    %v948 = vlaneseq
    %v949 = vshrl.u32 %v948, 7
    %v950 = vsub.s32 %v947, %v949
    %v951 = vrot.slane %v923, %v950
    %v952 = vcombine.high %v930, %v930
    %v953 = vcombine.high %v937, %v937
    %v954 = vcombine.high %v944, %v944
    %v955 = vcombine.high %v951, %v951
    %vm956 = vcmask 64512
    %v957 = vsel %vm956, %v930, 0
    %959 = vmatprep.subr.mxu0 0.0
    %960 = vmatpush1.msra.mxu0 %v88
    %961 = vmatprep.subr.mxu0 0.0
    %962 = vmatpush1.msra.mxu0 0.0
    %963 = vmatprep.subr.mxu0 0.0
    %964 = vmatpush1.msra.mxu0 0.0
    %965 = vmatprep.subr.mxu0 0.0
    %966 = vmatpush1.msra.mxu0 0.0
    %967 = vmatprep.subr.mxu0 0.0
    %968 = vmatpush1.msra.mxu0 0.0
    %969 = vmatprep.subr.mxu0 0.0
    %970 = vmatpush1.msra.mxu0 0.0
    %971 = vmatprep.subr.mxu0 0.0
    %972 = vmatpush1.msra.mxu0 0.0
    %973 = vmatprep.subr.mxu0 0.0
    %974 = vmatpush1.msra.mxu0 0.0
    %975 = vmatprep.subr.mxu0 0.0
    %976 = vmatpush1.msra.mxu0 0.0
    %977 = vmatprep.subr.mxu0 0.0
    %978 = vmatpush1.msra.mxu0 0.0
    %979 = vmatprep.subr.mxu0 0.0
    %980 = vmatpush1.msra.mxu0 0.0
    %981 = vmatprep.subr.mxu0 0.0
    %982 = vmatpush1.msra.mxu0 0.0
    %983 = vmatprep.subr.mxu0 0.0
    %984 = vmatpush1.msra.mxu0 0.0
    %985 = vmatprep.subr.mxu0 0.0
    %986 = vmatpush1.msra.mxu0 0.0
    %987 = vmatprep.subr.mxu0 0.0
    %988 = vmatpush1.msra.mxu0 0.0
    %989 = vmatprep.subr.mxu0 0.0
    %990 = vmatpush1.msra.mxu0 0.0
    %991 = vmatprep.subr.mxu0 0.0
    %992 = vmatpush1.msra.mxu0 0.0
    %993 = vmatprep.subr.mxu0 0.0
    %994 = vmatpush1.msra.mxu0 0.0
    %995 = vmatprep.subr.mxu0 0.0
    %996 = vmatpush1.msra.mxu0 0.0
    %997 = vmatprep.subr.mxu0 0.0
    %998 = vmatpush1.msra.mxu0 0.0
    %999 = vmatprep.subr.mxu0 0.0
    %1000 = vmatpush1.msra.mxu0 0.0
    %1001 = vmatprep.subr.mxu0 0.0
    %1002 = vmatpush1.msra.mxu0 0.0
    %1003 = vmatprep.subr.mxu0 0.0
    %1004 = vmatpush1.msra.mxu0 0.0
    %1005 = vmatprep.subr.mxu0 0.0
    %1006 = vmatpush1.msra.mxu0 0.0
    %1007 = vmatprep.subr.mxu0 0.0
    %1008 = vmatpush1.msra.mxu0 0.0
    %1009 = vmatprep.subr.mxu0 0.0
    %1010 = vmatpush1.msra.mxu0 0.0
    %1011 = vmatprep.subr.mxu0 0.0
    %1012 = vmatpush1.msra.mxu0 0.0
    %1013 = vmatprep.subr.mxu0 0.0
    %1014 = vmatpush1.msra.mxu0 0.0
    %1015 = vmatprep.subr.mxu0 0.0
    %1016 = vmatpush1.msra.mxu0 0.0
    %1017 = vmatprep.subr.mxu0 0.0
    %1018 = vmatpush1.msra.mxu0 0.0
    %1019 = vmatprep.subr.mxu0 0.0
    %1020 = vmatpush1.msra.mxu0 0.0
    %1021 = vmatprep.subr.mxu0 0.0
    %1022 = vmatpush1.msra.mxu0 0.0
    %1023 = vmatprep.mubr.f32.mxu0 0.0
    %1024 = vmatmul.mubr.f32.gmra.mrb[0].mxu0 %v957
    %v1025 = vpop.f32.mrb[0].mxu0
    %v1026 = vadd.f32 0.0, %v1025
    %v1027 = vpop.f32.mrb[0].mxu0
    %1028 = vdwg.mxu0
    %v1029 = vsel %vm956, %v944, 0
    %1031 = vmatprep.subr.mxu0 0.0
    %1032 = vmatpush1.msra.mxu0 %v89
    %1033 = vmatprep.subr.mxu0 0.0
    %1034 = vmatpush1.msra.mxu0 0.0
    %1035 = vmatprep.subr.mxu0 0.0
    %1036 = vmatpush1.msra.mxu0 0.0
    %1037 = vmatprep.subr.mxu0 0.0
    %1038 = vmatpush1.msra.mxu0 0.0
    %1039 = vmatprep.subr.mxu0 0.0
    %1040 = vmatpush1.msra.mxu0 0.0
    %1041 = vmatprep.subr.mxu0 0.0
    %1042 = vmatpush1.msra.mxu0 0.0
    %1043 = vmatprep.subr.mxu0 0.0
    %1044 = vmatpush1.msra.mxu0 0.0
    %1045 = vmatprep.subr.mxu0 0.0
    %1046 = vmatpush1.msra.mxu0 0.0
    %1047 = vmatprep.subr.mxu0 0.0
    %1048 = vmatpush1.msra.mxu0 0.0
    %1049 = vmatprep.subr.mxu0 0.0
    %1050 = vmatpush1.msra.mxu0 0.0
    %1051 = vmatprep.subr.mxu0 0.0
    %1052 = vmatpush1.msra.mxu0 0.0
    %1053 = vmatprep.subr.mxu0 0.0
    %1054 = vmatpush1.msra.mxu0 0.0
    %1055 = vmatprep.subr.mxu0 0.0
    %1056 = vmatpush1.msra.mxu0 0.0
    %1057 = vmatprep.subr.mxu0 0.0
    %1058 = vmatpush1.msra.mxu0 0.0
    %1059 = vmatprep.subr.mxu0 0.0
    %1060 = vmatpush1.msra.mxu0 0.0
    %1061 = vmatprep.subr.mxu0 0.0
    %1062 = vmatpush1.msra.mxu0 0.0
    %1063 = vmatprep.subr.mxu0 0.0
    %1064 = vmatpush1.msra.mxu0 0.0
    %1065 = vmatprep.subr.mxu0 0.0
    %1066 = vmatpush1.msra.mxu0 0.0
    %1067 = vmatprep.subr.mxu0 0.0
    %1068 = vmatpush1.msra.mxu0 0.0
    %1069 = vmatprep.subr.mxu0 0.0
    %1070 = vmatpush1.msra.mxu0 0.0
    %1071 = vmatprep.subr.mxu0 0.0
    %1072 = vmatpush1.msra.mxu0 0.0
    %1073 = vmatprep.subr.mxu0 0.0
    %1074 = vmatpush1.msra.mxu0 0.0
    %1075 = vmatprep.subr.mxu0 0.0
    %1076 = vmatpush1.msra.mxu0 0.0
    %1077 = vmatprep.subr.mxu0 0.0
    %1078 = vmatpush1.msra.mxu0 0.0
    %1079 = vmatprep.subr.mxu0 0.0
    %1080 = vmatpush1.msra.mxu0 0.0
    %1081 = vmatprep.subr.mxu0 0.0
    %1082 = vmatpush1.msra.mxu0 0.0
    %1083 = vmatprep.subr.mxu0 0.0
    %1084 = vmatpush1.msra.mxu0 0.0
    %1085 = vmatprep.subr.mxu0 0.0
    %1086 = vmatpush1.msra.mxu0 0.0
    %1087 = vmatprep.subr.mxu0 0.0
    %1088 = vmatpush1.msra.mxu0 0.0
    %1089 = vmatprep.subr.mxu0 0.0
    %1090 = vmatpush1.msra.mxu0 0.0
    %1091 = vmatprep.subr.mxu0 0.0
    %1092 = vmatpush1.msra.mxu0 0.0
    %1093 = vmatprep.subr.mxu0 0.0
    %1094 = vmatpush1.msra.mxu0 0.0
    %1095 = vmatprep.mubr.f32.mxu0 0.0
    %1096 = vmatmul.mubr.f32.gmra.mrb[0].mxu0 %v1029
    %v1097 = vpop.f32.mrb[0].mxu0
    %v1098 = vadd.f32 0.0, %v1097
    %v1099 = vpop.f32.mrb[0].mxu0
    %1100 = vdwg.mxu0
    %v1101 = vsel %vm956, %v952, 0
    %1103 = vmatprep.subr.mxu0 0.0
    %1104 = vmatpush1.msra.mxu0 %v90
    %1105 = vmatprep.subr.mxu0 0.0
    %1106 = vmatpush1.msra.mxu0 0.0
    %1107 = vmatprep.subr.mxu0 0.0
    %1108 = vmatpush1.msra.mxu0 0.0
    %1109 = vmatprep.subr.mxu0 0.0
    %1110 = vmatpush1.msra.mxu0 0.0
    %1111 = vmatprep.subr.mxu0 0.0
    %1112 = vmatpush1.msra.mxu0 0.0
    %1113 = vmatprep.subr.mxu0 0.0
    %1114 = vmatpush1.msra.mxu0 0.0
    %1115 = vmatprep.subr.mxu0 0.0
    %1116 = vmatpush1.msra.mxu0 0.0
    %1117 = vmatprep.subr.mxu0 0.0
    %1118 = vmatpush1.msra.mxu0 0.0
    %1119 = vmatprep.subr.mxu0 0.0
    %1120 = vmatpush1.msra.mxu0 0.0
    %1121 = vmatprep.subr.mxu0 0.0
    %1122 = vmatpush1.msra.mxu0 0.0
    %1123 = vmatprep.subr.mxu0 0.0
    %1124 = vmatpush1.msra.mxu0 0.0
    %1125 = vmatprep.subr.mxu0 0.0
    %1126 = vmatpush1.msra.mxu0 0.0
    %1127 = vmatprep.subr.mxu0 0.0
    %1128 = vmatpush1.msra.mxu0 0.0
    %1129 = vmatprep.subr.mxu0 0.0
    %1130 = vmatpush1.msra.mxu0 0.0
    %1131 = vmatprep.subr.mxu0 0.0
    %1132 = vmatpush1.msra.mxu0 0.0
    %1133 = vmatprep.subr.mxu0 0.0
    %1134 = vmatpush1.msra.mxu0 0.0
    %1135 = vmatprep.subr.mxu0 0.0
    %1136 = vmatpush1.msra.mxu0 0.0
    %1137 = vmatprep.subr.mxu0 0.0
    %1138 = vmatpush1.msra.mxu0 0.0
    %1139 = vmatprep.subr.mxu0 0.0
    %1140 = vmatpush1.msra.mxu0 0.0
    %1141 = vmatprep.subr.mxu0 0.0
    %1142 = vmatpush1.msra.mxu0 0.0
    %1143 = vmatprep.subr.mxu0 0.0
    %1144 = vmatpush1.msra.mxu0 0.0
    %1145 = vmatprep.subr.mxu0 0.0
    %1146 = vmatpush1.msra.mxu0 0.0
    %1147 = vmatprep.subr.mxu0 0.0
    %1148 = vmatpush1.msra.mxu0 0.0
    %1149 = vmatprep.subr.mxu0 0.0
    %1150 = vmatpush1.msra.mxu0 0.0
    %1151 = vmatprep.subr.mxu0 0.0
    %1152 = vmatpush1.msra.mxu0 0.0
    %1153 = vmatprep.subr.mxu0 0.0
    %1154 = vmatpush1.msra.mxu0 0.0
    %1155 = vmatprep.subr.mxu0 0.0
    %1156 = vmatpush1.msra.mxu0 0.0
    %1157 = vmatprep.subr.mxu0 0.0
    %1158 = vmatpush1.msra.mxu0 0.0
    %1159 = vmatprep.subr.mxu0 0.0
    %1160 = vmatpush1.msra.mxu0 0.0
    %1161 = vmatprep.subr.mxu0 0.0
    %1162 = vmatpush1.msra.mxu0 0.0
    %1163 = vmatprep.subr.mxu0 0.0
    %1164 = vmatpush1.msra.mxu0 0.0
    %1165 = vmatprep.subr.mxu0 0.0
    %1166 = vmatpush1.msra.mxu0 0.0
    %1167 = vmatprep.mubr.f32.mxu0 0.0
    %1168 = vmatmul.mubr.f32.gmra.mrb[0].mxu0 %v1101
    %v1169 = vpop.f32.mrb[0].mxu0
    %v1170 = vadd.f32 0.0, %v1169
    %v1171 = vpop.f32.mrb[0].mxu0
    %1172 = vdwg.mxu0
    %v1173 = vsel %vm956, %v954, 0
    %1175 = vmatprep.subr.mxu0 0.0
    %1176 = vmatpush1.msra.mxu0 %v91
    %1177 = vmatprep.subr.mxu0 0.0
    %1178 = vmatpush1.msra.mxu0 0.0
    %1179 = vmatprep.subr.mxu0 0.0
    %1180 = vmatpush1.msra.mxu0 0.0
    %1181 = vmatprep.subr.mxu0 0.0
    %1182 = vmatpush1.msra.mxu0 0.0
    %1183 = vmatprep.subr.mxu0 0.0
    %1184 = vmatpush1.msra.mxu0 0.0
    %1185 = vmatprep.subr.mxu0 0.0
    %1186 = vmatpush1.msra.mxu0 0.0
    %1187 = vmatprep.subr.mxu0 0.0
    %1188 = vmatpush1.msra.mxu0 0.0
    %1189 = vmatprep.subr.mxu0 0.0
    %1190 = vmatpush1.msra.mxu0 0.0
    %1191 = vmatprep.subr.mxu0 0.0
    %1192 = vmatpush1.msra.mxu0 0.0
    %1193 = vmatprep.subr.mxu0 0.0
    %1194 = vmatpush1.msra.mxu0 0.0
    %1195 = vmatprep.subr.mxu0 0.0
    %1196 = vmatpush1.msra.mxu0 0.0
    %1197 = vmatprep.subr.mxu0 0.0
    %1198 = vmatpush1.msra.mxu0 0.0
    %1199 = vmatprep.subr.mxu0 0.0
    %1200 = vmatpush1.msra.mxu0 0.0
    %1201 = vmatprep.subr.mxu0 0.0
    %1202 = vmatpush1.msra.mxu0 0.0
    %1203 = vmatprep.subr.mxu0 0.0
    %1204 = vmatpush1.msra.mxu0 0.0
    %1205 = vmatprep.subr.mxu0 0.0
    %1206 = vmatpush1.msra.mxu0 0.0
    %1207 = vmatprep.subr.mxu0 0.0
    %1208 = vmatpush1.msra.mxu0 0.0
    %1209 = vmatprep.subr.mxu0 0.0
    %1210 = vmatpush1.msra.mxu0 0.0
    %1211 = vmatprep.subr.mxu0 0.0
    %1212 = vmatpush1.msra.mxu0 0.0
    %1213 = vmatprep.subr.mxu0 0.0
    %1214 = vmatpush1.msra.mxu0 0.0
    %1215 = vmatprep.subr.mxu0 0.0
    %1216 = vmatpush1.msra.mxu0 0.0
    %1217 = vmatprep.subr.mxu0 0.0
    %1218 = vmatpush1.msra.mxu0 0.0
    %1219 = vmatprep.subr.mxu0 0.0
    %1220 = vmatpush1.msra.mxu0 0.0
    %1221 = vmatprep.subr.mxu0 0.0
    %1222 = vmatpush1.msra.mxu0 0.0
    %1223 = vmatprep.subr.mxu0 0.0
    %1224 = vmatpush1.msra.mxu0 0.0
    %1225 = vmatprep.subr.mxu0 0.0
    %1226 = vmatpush1.msra.mxu0 0.0
    %1227 = vmatprep.subr.mxu0 0.0
    %1228 = vmatpush1.msra.mxu0 0.0
    %1229 = vmatprep.subr.mxu0 0.0
    %1230 = vmatpush1.msra.mxu0 0.0
    %1231 = vmatprep.subr.mxu0 0.0
    %1232 = vmatpush1.msra.mxu0 0.0
    %1233 = vmatprep.subr.mxu0 0.0
    %1234 = vmatpush1.msra.mxu0 0.0
    %1235 = vmatprep.subr.mxu0 0.0
    %1236 = vmatpush1.msra.mxu0 0.0
    %1237 = vmatprep.subr.mxu0 0.0
    %1238 = vmatpush1.msra.mxu0 0.0
    %1239 = vmatprep.mubr.f32.mxu0 0.0
    %1240 = vmatmul.mubr.f32.gmra.mrb[0].mxu0 %v1173
    %v1241 = vpop.f32.mrb[0].mxu0
    %v1242 = vadd.f32 0.0, %v1241
    %v1243 = vpop.f32.mrb[0].mxu0
    %1244 = vdwg.mxu0
    %v1245 = vsel %vm956, %v937, 0
    %1247 = vmatprep.subr.mxu0 0.0
    %1248 = vmatpush1.msra.mxu0 %v92
    %1249 = vmatprep.subr.mxu0 0.0
    %1250 = vmatpush1.msra.mxu0 0.0
    %1251 = vmatprep.subr.mxu0 0.0
    %1252 = vmatpush1.msra.mxu0 0.0
    %1253 = vmatprep.subr.mxu0 0.0
    %1254 = vmatpush1.msra.mxu0 0.0
    %1255 = vmatprep.subr.mxu0 0.0
    %1256 = vmatpush1.msra.mxu0 0.0
    %1257 = vmatprep.subr.mxu0 0.0
    %1258 = vmatpush1.msra.mxu0 0.0
    %1259 = vmatprep.subr.mxu0 0.0
    %1260 = vmatpush1.msra.mxu0 0.0
    %1261 = vmatprep.subr.mxu0 0.0
    %1262 = vmatpush1.msra.mxu0 0.0
    %1263 = vmatprep.subr.mxu0 0.0
    %1264 = vmatpush1.msra.mxu0 0.0
    %1265 = vmatprep.subr.mxu0 0.0
    %1266 = vmatpush1.msra.mxu0 0.0
    %1267 = vmatprep.subr.mxu0 0.0
    %1268 = vmatpush1.msra.mxu0 0.0
    %1269 = vmatprep.subr.mxu0 0.0
    %1270 = vmatpush1.msra.mxu0 0.0
    %1271 = vmatprep.subr.mxu0 0.0
    %1272 = vmatpush1.msra.mxu0 0.0
    %1273 = vmatprep.subr.mxu0 0.0
    %1274 = vmatpush1.msra.mxu0 0.0
    %1275 = vmatprep.subr.mxu0 0.0
    %1276 = vmatpush1.msra.mxu0 0.0
    %1277 = vmatprep.subr.mxu0 0.0
    %1278 = vmatpush1.msra.mxu0 0.0
    %1279 = vmatprep.subr.mxu0 0.0
    %1280 = vmatpush1.msra.mxu0 0.0
    %1281 = vmatprep.subr.mxu0 0.0
    %1282 = vmatpush1.msra.mxu0 0.0
    %1283 = vmatprep.subr.mxu0 0.0
    %1284 = vmatpush1.msra.mxu0 0.0
    %1285 = vmatprep.subr.mxu0 0.0
    %1286 = vmatpush1.msra.mxu0 0.0
    %1287 = vmatprep.subr.mxu0 0.0
    %1288 = vmatpush1.msra.mxu0 0.0
    %1289 = vmatprep.subr.mxu0 0.0
    %1290 = vmatpush1.msra.mxu0 0.0
    %1291 = vmatprep.subr.mxu0 0.0
    %1292 = vmatpush1.msra.mxu0 0.0
    %1293 = vmatprep.subr.mxu0 0.0
    %1294 = vmatpush1.msra.mxu0 0.0
    %1295 = vmatprep.subr.mxu0 0.0
    %1296 = vmatpush1.msra.mxu0 0.0
    %1297 = vmatprep.subr.mxu0 0.0
    %1298 = vmatpush1.msra.mxu0 0.0
    %1299 = vmatprep.subr.mxu0 0.0
    %1300 = vmatpush1.msra.mxu0 0.0
    %1301 = vmatprep.subr.mxu0 0.0
    %1302 = vmatpush1.msra.mxu0 0.0
    %1303 = vmatprep.subr.mxu0 0.0
    %1304 = vmatpush1.msra.mxu0 0.0
    %1305 = vmatprep.subr.mxu0 0.0
    %1306 = vmatpush1.msra.mxu0 0.0
    %1307 = vmatprep.subr.mxu0 0.0
    %1308 = vmatpush1.msra.mxu0 0.0
    %1309 = vmatprep.subr.mxu0 0.0
    %1310 = vmatpush1.msra.mxu0 0.0
    %1311 = vmatprep.mubr.f32.mxu0 0.0
    %1312 = vmatmul.mubr.f32.gmra.mrb[0].mxu0 %v1245
    %v1313 = vpop.f32.mrb[0].mxu0
    %v1314 = vadd.f32 0.0, %v1313
    %v1315 = vpop.f32.mrb[0].mxu0
    %1316 = vdwg.mxu0
    %v1317 = vsel %vm956, %v951, 0
    %1319 = vmatprep.subr.mxu0 0.0
    %1320 = vmatpush1.msra.mxu0 %v93
    %1321 = vmatprep.subr.mxu0 0.0
    %1322 = vmatpush1.msra.mxu0 0.0
    %1323 = vmatprep.subr.mxu0 0.0
    %1324 = vmatpush1.msra.mxu0 0.0
    %1325 = vmatprep.subr.mxu0 0.0
    %1326 = vmatpush1.msra.mxu0 0.0
    %1327 = vmatprep.subr.mxu0 0.0
    %1328 = vmatpush1.msra.mxu0 0.0
    %1329 = vmatprep.subr.mxu0 0.0
    %1330 = vmatpush1.msra.mxu0 0.0
    %1331 = vmatprep.subr.mxu0 0.0
    %1332 = vmatpush1.msra.mxu0 0.0
    %1333 = vmatprep.subr.mxu0 0.0
    %1334 = vmatpush1.msra.mxu0 0.0
    %1335 = vmatprep.subr.mxu0 0.0
    %1336 = vmatpush1.msra.mxu0 0.0
    %1337 = vmatprep.subr.mxu0 0.0
    %1338 = vmatpush1.msra.mxu0 0.0
    %1339 = vmatprep.subr.mxu0 0.0
    %1340 = vmatpush1.msra.mxu0 0.0
    %1341 = vmatprep.subr.mxu0 0.0
    %1342 = vmatpush1.msra.mxu0 0.0
    %1343 = vmatprep.subr.mxu0 0.0
    %1344 = vmatpush1.msra.mxu0 0.0
    %1345 = vmatprep.subr.mxu0 0.0
    %1346 = vmatpush1.msra.mxu0 0.0
    %1347 = vmatprep.subr.mxu0 0.0
    %1348 = vmatpush1.msra.mxu0 0.0
    %1349 = vmatprep.subr.mxu0 0.0
    %1350 = vmatpush1.msra.mxu0 0.0
    %1351 = vmatprep.subr.mxu0 0.0
    %1352 = vmatpush1.msra.mxu0 0.0
    %1353 = vmatprep.subr.mxu0 0.0
    %1354 = vmatpush1.msra.mxu0 0.0
    %1355 = vmatprep.subr.mxu0 0.0
    %1356 = vmatpush1.msra.mxu0 0.0
    %1357 = vmatprep.subr.mxu0 0.0
    %1358 = vmatpush1.msra.mxu0 0.0
    %1359 = vmatprep.subr.mxu0 0.0
    %1360 = vmatpush1.msra.mxu0 0.0
    %1361 = vmatprep.subr.mxu0 0.0
    %1362 = vmatpush1.msra.mxu0 0.0
    %1363 = vmatprep.subr.mxu0 0.0
    %1364 = vmatpush1.msra.mxu0 0.0
    %1365 = vmatprep.subr.mxu0 0.0
    %1366 = vmatpush1.msra.mxu0 0.0
    %1367 = vmatprep.subr.mxu0 0.0
    %1368 = vmatpush1.msra.mxu0 0.0
    %1369 = vmatprep.subr.mxu0 0.0
    %1370 = vmatpush1.msra.mxu0 0.0
    %1371 = vmatprep.subr.mxu0 0.0
    %1372 = vmatpush1.msra.mxu0 0.0
    %1373 = vmatprep.subr.mxu0 0.0
    %1374 = vmatpush1.msra.mxu0 0.0
    %1375 = vmatprep.subr.mxu0 0.0
    %1376 = vmatpush1.msra.mxu0 0.0
    %1377 = vmatprep.subr.mxu0 0.0
    %1378 = vmatpush1.msra.mxu0 0.0
    %1379 = vmatprep.subr.mxu0 0.0
    %1380 = vmatpush1.msra.mxu0 0.0
    %1381 = vmatprep.subr.mxu0 0.0
    %1382 = vmatpush1.msra.mxu0 0.0
    %1383 = vmatprep.mubr.f32.mxu0 0.0
    %1384 = vmatmul.mubr.f32.gmra.mrb[0].mxu0 %v1317
    %v1385 = vpop.f32.mrb[0].mxu0
    %v1386 = vadd.f32 0.0, %v1385
    %v1387 = vpop.f32.mrb[0].mxu0
    %1388 = vdwg.mxu0
    %v1389 = vsel %vm956, %v953, 0
    %1391 = vmatprep.subr.mxu0 0.0
    %1392 = vmatpush1.msra.mxu0 %v94
    %1393 = vmatprep.subr.mxu0 0.0
    %1394 = vmatpush1.msra.mxu0 0.0
    %1395 = vmatprep.subr.mxu0 0.0
    %1396 = vmatpush1.msra.mxu0 0.0
    %1397 = vmatprep.subr.mxu0 0.0
    %1398 = vmatpush1.msra.mxu0 0.0
    %1399 = vmatprep.subr.mxu0 0.0
    %1400 = vmatpush1.msra.mxu0 0.0
    %1401 = vmatprep.subr.mxu0 0.0
    %1402 = vmatpush1.msra.mxu0 0.0
    %1403 = vmatprep.subr.mxu0 0.0
    %1404 = vmatpush1.msra.mxu0 0.0
    %1405 = vmatprep.subr.mxu0 0.0
    %1406 = vmatpush1.msra.mxu0 0.0
    %1407 = vmatprep.subr.mxu0 0.0
    %1408 = vmatpush1.msra.mxu0 0.0
    %1409 = vmatprep.subr.mxu0 0.0
    %1410 = vmatpush1.msra.mxu0 0.0
    %1411 = vmatprep.subr.mxu0 0.0
    %1412 = vmatpush1.msra.mxu0 0.0
    %1413 = vmatprep.subr.mxu0 0.0
    %1414 = vmatpush1.msra.mxu0 0.0
    %1415 = vmatprep.subr.mxu0 0.0
    %1416 = vmatpush1.msra.mxu0 0.0
    %1417 = vmatprep.subr.mxu0 0.0
    %1418 = vmatpush1.msra.mxu0 0.0
    %1419 = vmatprep.subr.mxu0 0.0
    %1420 = vmatpush1.msra.mxu0 0.0
    %1421 = vmatprep.subr.mxu0 0.0
    %1422 = vmatpush1.msra.mxu0 0.0
    %1423 = vmatprep.subr.mxu0 0.0
    %1424 = vmatpush1.msra.mxu0 0.0
    %1425 = vmatprep.subr.mxu0 0.0
    %1426 = vmatpush1.msra.mxu0 0.0
    %1427 = vmatprep.subr.mxu0 0.0
    %1428 = vmatpush1.msra.mxu0 0.0
    %1429 = vmatprep.subr.mxu0 0.0
    %1430 = vmatpush1.msra.mxu0 0.0
    %1431 = vmatprep.subr.mxu0 0.0
    %1432 = vmatpush1.msra.mxu0 0.0
    %1433 = vmatprep.subr.mxu0 0.0
    %1434 = vmatpush1.msra.mxu0 0.0
    %1435 = vmatprep.subr.mxu0 0.0
    %1436 = vmatpush1.msra.mxu0 0.0
    %1437 = vmatprep.subr.mxu0 0.0
    %1438 = vmatpush1.msra.mxu0 0.0
    %1439 = vmatprep.subr.mxu0 0.0
    %1440 = vmatpush1.msra.mxu0 0.0
    %1441 = vmatprep.subr.mxu0 0.0
    %1442 = vmatpush1.msra.mxu0 0.0
    %1443 = vmatprep.subr.mxu0 0.0
    %1444 = vmatpush1.msra.mxu0 0.0
    %1445 = vmatprep.subr.mxu0 0.0
    %1446 = vmatpush1.msra.mxu0 0.0
    %1447 = vmatprep.subr.mxu0 0.0
    %1448 = vmatpush1.msra.mxu0 0.0
    %1449 = vmatprep.subr.mxu0 0.0
    %1450 = vmatpush1.msra.mxu0 0.0
    %1451 = vmatprep.subr.mxu0 0.0
    %1452 = vmatpush1.msra.mxu0 0.0
    %1453 = vmatprep.subr.mxu0 0.0
    %1454 = vmatpush1.msra.mxu0 0.0
    %1455 = vmatprep.mubr.f32.mxu0 0.0
    %1456 = vmatmul.mubr.f32.gmra.mrb[0].mxu0 %v1389
    %v1457 = vpop.f32.mrb[0].mxu0
    %v1458 = vadd.f32 0.0, %v1457
    %v1459 = vpop.f32.mrb[0].mxu0
    %1460 = vdwg.mxu0
    %v1461 = vsel %vm956, %v955, 0
    %1463 = vmatprep.subr.mxu0 0.0
    %1464 = vmatpush1.msra.mxu0 %v95
    %1465 = vmatprep.subr.mxu0 0.0
    %1466 = vmatpush1.msra.mxu0 0.0
    %1467 = vmatprep.subr.mxu0 0.0
    %1468 = vmatpush1.msra.mxu0 0.0
    %1469 = vmatprep.subr.mxu0 0.0
    %1470 = vmatpush1.msra.mxu0 0.0
    %1471 = vmatprep.subr.mxu0 0.0
    %1472 = vmatpush1.msra.mxu0 0.0
    %1473 = vmatprep.subr.mxu0 0.0
    %1474 = vmatpush1.msra.mxu0 0.0
    %1475 = vmatprep.subr.mxu0 0.0
    %1476 = vmatpush1.msra.mxu0 0.0
    %1477 = vmatprep.subr.mxu0 0.0
    %1478 = vmatpush1.msra.mxu0 0.0
    %1479 = vmatprep.subr.mxu0 0.0
    %1480 = vmatpush1.msra.mxu0 0.0
    %1481 = vmatprep.subr.mxu0 0.0
    %1482 = vmatpush1.msra.mxu0 0.0
    %1483 = vmatprep.subr.mxu0 0.0
    %1484 = vmatpush1.msra.mxu0 0.0
    %1485 = vmatprep.subr.mxu0 0.0
    %1486 = vmatpush1.msra.mxu0 0.0
    %1487 = vmatprep.subr.mxu0 0.0
    %1488 = vmatpush1.msra.mxu0 0.0
    %1489 = vmatprep.subr.mxu0 0.0
    %1490 = vmatpush1.msra.mxu0 0.0
    %1491 = vmatprep.subr.mxu0 0.0
    %1492 = vmatpush1.msra.mxu0 0.0
    %1493 = vmatprep.subr.mxu0 0.0
    %1494 = vmatpush1.msra.mxu0 0.0
    %1495 = vmatprep.subr.mxu0 0.0
    %1496 = vmatpush1.msra.mxu0 0.0
    %1497 = vmatprep.subr.mxu0 0.0
    %1498 = vmatpush1.msra.mxu0 0.0
    %1499 = vmatprep.subr.mxu0 0.0
    %1500 = vmatpush1.msra.mxu0 0.0
    %1501 = vmatprep.subr.mxu0 0.0
    %1502 = vmatpush1.msra.mxu0 0.0
    %1503 = vmatprep.subr.mxu0 0.0
    %1504 = vmatpush1.msra.mxu0 0.0
    %1505 = vmatprep.subr.mxu0 0.0
    %1506 = vmatpush1.msra.mxu0 0.0
    %1507 = vmatprep.subr.mxu0 0.0
    %1508 = vmatpush1.msra.mxu0 0.0
    %1509 = vmatprep.subr.mxu0 0.0
    %1510 = vmatpush1.msra.mxu0 0.0
    %1511 = vmatprep.subr.mxu0 0.0
    %1512 = vmatpush1.msra.mxu0 0.0
    %1513 = vmatprep.subr.mxu0 0.0
    %1514 = vmatpush1.msra.mxu0 0.0
    %1515 = vmatprep.subr.mxu0 0.0
    %1516 = vmatpush1.msra.mxu0 0.0
    %1517 = vmatprep.subr.mxu0 0.0
    %1518 = vmatpush1.msra.mxu0 0.0
    %1519 = vmatprep.subr.mxu0 0.0
    %1520 = vmatpush1.msra.mxu0 0.0
    %1521 = vmatprep.subr.mxu0 0.0
    %1522 = vmatpush1.msra.mxu0 0.0
    %1523 = vmatprep.subr.mxu0 0.0
    %1524 = vmatpush1.msra.mxu0 0.0
    %1525 = vmatprep.subr.mxu0 0.0
    %1526 = vmatpush1.msra.mxu0 0.0
    %1527 = vmatprep.mubr.f32.mxu0 0.0
    %1528 = vmatmul.mubr.f32.gmra.mrb[0].mxu0 %v1461
    %v1529 = vpop.f32.mrb[0].mxu0
    %v1530 = vadd.f32 0.0, %v1529
    %v1531 = vpop.f32.mrb[0].mxu0
    %1532 = vdwg.mxu0
    %1533 = vst.msk [vmem:[#allocation12] sm:$0xff] %vm956, %v905
    %v1534 = vld [vmem:[#allocation10] sm:$0xff]
    %v1535 = vld [vmem:[#allocation10 + $0x8] sm:$0xff]
    %v1536 = vld [vmem:[#allocation10 + $0x10] sm:$0xff]
    %v1537 = vld [vmem:[#allocation10 + $0x18] sm:$0xff]
    %v1546 = vrot.slane %v1098, 7
    %v1547 = vsel %vm884, %v1546, %v1026
    %v1548 = vrot.slane %v1170, 6
    %v1549 = vsel %vm887, %v1548, %v1547
    %v1550 = vrot.slane %v1242, 5
    %v1551 = vsel %vm890, %v1550, %v1549
    %v1552 = vrot.slane %v1314, 4
    %v1553 = vsel %vm893, %v1552, %v1551
    %v1554 = vrot.slane %v1386, 3
    %v1555 = vsel %vm896, %v1554, %v1553
    %v1556 = vrot.slane %v1458, 2
    %v1557 = vsel %vm899, %v1556, %v1555
    %v1558 = vrot.slane %v1530, 1
    %v1559 = vsel %vm902, %v1558, %v1557
    %1560 = vrot.lane.b32.xlu0 %v174, 96
    %v1561 = vpop.permute.xlu0 %1560
    %v1563 = vsel %vm103, %v1559, 0
    %1565 = vmatprep.subr.mxu0 0.0
    %1566 = vmatpush1.msra.mxu0 %v1534
    %1567 = vmatprep.subr.mxu0 0.0
    %1568 = vmatpush1.msra.mxu0 %v1535
    %1569 = vmatprep.subr.mxu0 0.0
    %1570 = vmatpush1.msra.mxu0 %v1536
    %1571 = vmatprep.subr.mxu0 0.0
    %1572 = vmatpush1.msra.mxu0 %v1537
    %1573 = vmatprep.subr.mxu0 0.0
    %1574 = vmatpush1.msra.mxu0 0.0
    %1575 = vmatprep.subr.mxu0 0.0
    %1576 = vmatpush1.msra.mxu0 0.0
    %1577 = vmatprep.subr.mxu0 0.0
    %1578 = vmatpush1.msra.mxu0 0.0
    %1579 = vmatprep.subr.mxu0 0.0
    %1580 = vmatpush1.msra.mxu0 0.0
    %1581 = vmatprep.subr.mxu0 0.0
    %1582 = vmatpush1.msra.mxu0 0.0
    %1583 = vmatprep.subr.mxu0 0.0
    %1584 = vmatpush1.msra.mxu0 0.0
    %1585 = vmatprep.subr.mxu0 0.0
    %1586 = vmatpush1.msra.mxu0 0.0
    %1587 = vmatprep.subr.mxu0 0.0
    %1588 = vmatpush1.msra.mxu0 0.0
    %1589 = vmatprep.subr.mxu0 0.0
    %1590 = vmatpush1.msra.mxu0 0.0
    %1591 = vmatprep.subr.mxu0 0.0
    %1592 = vmatpush1.msra.mxu0 0.0
    %1593 = vmatprep.subr.mxu0 0.0
    %1594 = vmatpush1.msra.mxu0 0.0
    %1595 = vmatprep.subr.mxu0 0.0
    %1596 = vmatpush1.msra.mxu0 0.0
    %1597 = vmatprep.subr.mxu0 0.0
    %1598 = vmatpush1.msra.mxu0 0.0
    %1599 = vmatprep.subr.mxu0 0.0
    %1600 = vmatpush1.msra.mxu0 0.0
    %1601 = vmatprep.subr.mxu0 0.0
    %1602 = vmatpush1.msra.mxu0 0.0
    %1603 = vmatprep.subr.mxu0 0.0
    %1604 = vmatpush1.msra.mxu0 0.0
    %1605 = vmatprep.subr.mxu0 0.0
    %1606 = vmatpush1.msra.mxu0 0.0
    %1607 = vmatprep.subr.mxu0 0.0
    %1608 = vmatpush1.msra.mxu0 0.0
    %1609 = vmatprep.subr.mxu0 0.0
    %1610 = vmatpush1.msra.mxu0 0.0
    %1611 = vmatprep.subr.mxu0 0.0
    %1612 = vmatpush1.msra.mxu0 0.0
    %1613 = vmatprep.subr.mxu0 0.0
    %1614 = vmatpush1.msra.mxu0 0.0
    %1615 = vmatprep.subr.mxu0 0.0
    %1616 = vmatpush1.msra.mxu0 0.0
    %1617 = vmatprep.subr.mxu0 0.0
    %1618 = vmatpush1.msra.mxu0 0.0
    %1619 = vmatprep.subr.mxu0 0.0
    %1620 = vmatpush1.msra.mxu0 0.0
    %1621 = vmatprep.subr.mxu0 0.0
    %1622 = vmatpush1.msra.mxu0 0.0
    %1623 = vmatprep.subr.mxu0 0.0
    %1624 = vmatpush1.msra.mxu0 0.0
    %1625 = vmatprep.subr.mxu0 0.0
    %1626 = vmatpush1.msra.mxu0 0.0
    %1627 = vmatprep.subr.mxu0 0.0
    %1628 = vmatpush1.msra.mxu0 0.0
    %1629 = vmatprep.mubr.f32.mxu0 0.0
    %1630 = vmatmul.mubr.f32.gmra.mrb[0].mxu0 %v1563
    %v1631 = vpop.f32.mrb[0].mxu0
    %v1632 = vadd.f32 %v1561, %v1631
    %v1633 = vpop.f32.mrb[0].mxu0
    %1634 = vdwg.mxu0
    %v1635 = vtanh.pop %v1632
    %1636 = vst.msk [vmem:[#allocation11] sm:$0xff] %vm103, %v1635
    // Predicated region
    $region42: #{tpu_custom_call.1} parent=1 // pred_check
      _
    $region43: #{tpu_custom_call.1} parent=1 // pred_check_branch
      %1638 = sbr.rel (0) target = $region45
    $region44: #{tpu_custom_call.1} parent=1 // pred_region
      %s1640 = ssub.s32 128, 128
      %1641 = vsyncadd [#allocation4], %s1640
      %s1643 = sshll.u32 [#allocation11], 4
      %s1644 = int_to_ptr.vmem [resolvable:$true] %s1643
      %1646 = dma.vmem_to_hbm [thread:$0]  %s1644, 128, %s5, [#allocation4]
    $region45: #{tpu_custom_call.1} parent=1 // pred_fallthru
      _
    // Predicated region
    $region46: #{tpu_custom_call.1} parent=1 // pred_check
      _
    $region47: #{tpu_custom_call.1} parent=1 // pred_check_branch
      %1648 = sbr.rel (0) target = $region49
    $region48: #{tpu_custom_call.1} parent=1 // pred_region
      %s1650 = ssub.s32 128, 128
      %1651 = vsyncadd [#allocation13], %s1650
      %s1653 = sshll.u32 [#allocation12], 4
      %s1654 = int_to_ptr.vmem [resolvable:$true] %s1653
      %1656 = dma.vmem_to_hbm [thread:$0]  %s1654, 128, %s6, [#allocation13]
    $region49: #{tpu_custom_call.1} parent=1 // pred_fallthru
      _
    // Predicated region
    $region50: #{tpu_custom_call.1} parent=1 // pred_check
      _
    $region51: #{tpu_custom_call.1} parent=1 // pred_check_branch
      %1658 = sbr.rel (0) target = $region53
    $region52: #{tpu_custom_call.1} parent=1 // pred_region
      %1659 = dma.done [#allocation4], 128
    $region53: #{tpu_custom_call.1} parent=1 // pred_fallthru
      _
    // Predicated region
    $region54: #{tpu_custom_call.1} parent=1 // pred_check
      _
    $region55: #{tpu_custom_call.1} parent=1 // pred_check_branch
      %1661 = sbr.rel (0) target = $region57
    $region56: #{tpu_custom_call.1} parent=1 // pred_region
      %1662 = dma.done [#allocation13], 128
    $region57: #{tpu_custom_call.1} parent=1 // pred_fallthru
      _
    %1663 = vsyncpa [#allocation3], 1
    %1664 = vsyncpa [#allocation6], 1
    %1665 = vsyncpa [#allocation9], 1
    %1666 = vsyncpa [#allocation4], 1
    %1667 = vsyncpa [#allocation13], 1

// kernel: tpu_custom_call.1
$region0: #{tpu_custom_call.1}
  #allocation0 [shape = 'u32[]', space=smem, size = 0x4, offset = 0x4, fixed_abs, tag = 'smem constant byte address 0x4 - core index']
  #allocation1 [shape = 'u32[144,128]{1,0:T(1,128)}', space=vmem, size = 0x12000, scoped, tag = 'internal scratch']
  %s0 = inlined_call_operand.hbm [shape: f32[8,32], index: 0, kind: input, shape index: {}]
  %s1 = inlined_call_operand.hbm [shape: f32[2,8,32], index: 1, kind: input, shape index: {}]
  %s2 = inlined_call_operand.hbm [shape: s32[8,8], index: 2, kind: input, shape index: {}]
  %s3 = inlined_call_operand.hbm [shape: f32[32,64], index: 3, kind: input, shape index: {}]
  %s4 = inlined_call_operand.hbm [shape: f32[32,32], index: 4, kind: input, shape index: {}]
  %s5 = inlined_call_operand.hbm [shape: f32[8,32], index: 5, kind: output, shape index: {0}]
  %s6 = inlined_call_operand.hbm [shape: f32[8,8], index: 6, kind: output, shape index: {1}]
  %7 = xla_tuple %s5, %s6
  %s8 = sld [smem:[#allocation0]]
  $region58: #{tpu_custom_call.1} parent=0
    _
  %s10 = ssub.s32 1, %s8
  %s11 = scalar_select 0, %s10, %s8
  $region1: #{tpu_custom_call.1} parent=0
    #allocation2 [shape = 'u8[4096]{0}', space=vmem, size = 0x1000, scoped, tag = 'input window, operand 0, single buffered']
    #allocation3 [shape = 's32[1]{0}', space=sflag, size = 0x4, scoped, tag = 'scoped memory for tpu_custom_call.1']
    #allocation4 [shape = 's32[1]{0}', space=sflag, size = 0x4, scoped, tag = 'scoped memory for tpu_custom_call.1']
    #allocation5 [shape = 'u8[32768]{0}', space=vmem, size = 0x8000, scoped, tag = 'input window, operand 1, single buffered']
    #allocation6 [shape = 's32[1]{0}', space=sflag, size = 0x4, scoped, tag = 'scoped memory for tpu_custom_call.1']
    #allocation7 [shape = 'u8[4096]{0}', space=vmem, size = 0x1000, scoped, tag = 'input window, operand 2, single buffered']
    #allocation8 [shape = 'u8[16384]{0}', space=vmem, size = 0x4000, scoped, tag = 'input window, operand 3, single buffered']
    #allocation9 [shape = 's32[1]{0}', space=sflag, size = 0x4, scoped, tag = 'scoped memory for tpu_custom_call.1']
    #allocation10 [shape = 'u8[16384]{0}', space=vmem, size = 0x4000, scoped, tag = 'input window, operand 4, single buffered']
    #allocation11 [shape = 'u8[4096]{0}', space=vmem, size = 0x1000, scoped, tag = 'output window, operand 0, single buffered']
    #allocation12 [shape = 'u8[4096]{0}', space=vmem, size = 0x1000, scoped, tag = 'output window, operand 1, single buffered']
    #allocation13 [shape = 's32[1]{0}', space=sflag, size = 0x4, scoped, tag = 'scoped memory for tpu_custom_call.1']
    %12 = vsyncpa [#allocation3], 0
    %13 = vsyncpa [#allocation6], 0
    %14 = vsyncpa [#allocation9], 0
    %15 = vsyncpa [#allocation4], 0
    %16 = vsyncpa [#allocation13], 0
    // Predicated region
    $region2: #{tpu_custom_call.1} parent=1 // pred_check
      _
    $region3: #{tpu_custom_call.1} parent=1 // pred_check_branch
      %18 = sbr.rel (0) target = $region5
    $region4: #{tpu_custom_call.1} parent=1 // pred_region
      %s20 = ssub.s32 128, 128
      %21 = vsyncadd [#allocation3], %s20
      %s23 = sshll.u32 [#allocation2], 4
      %s24 = int_to_ptr.vmem [resolvable:$true] %s23
      %26 = dma.hbm_to_vmem [thread:$0]  %s0, 128, %s24, [#allocation3]
    $region5: #{tpu_custom_call.1} parent=1 // pred_fallthru
      _
    // Predicated region
    $region6: #{tpu_custom_call.1} parent=1 // pred_check
      _
    $region7: #{tpu_custom_call.1} parent=1 // pred_check_branch
      %28 = sbr.rel (0) target = $region9
    $region8: #{tpu_custom_call.1} parent=1 // pred_region
      %s30 = ssub.s32 1024, 256
      %31 = vsyncadd [#allocation6], %s30
      %s32 = sshll.u32 [#allocation5], 4
      %s33 = int_to_ptr.vmem [resolvable:$true] %s32
      %38 = dma.hbm_to_vmem [thread:$0]  %s1, 256, %s33, [#allocation6], 128, 128, 8
    $region9: #{tpu_custom_call.1} parent=1 // pred_fallthru
      _
    // Predicated region
    $region10: #{tpu_custom_call.1} parent=1 // pred_check
      _
    $region11: #{tpu_custom_call.1} parent=1 // pred_check_branch
      %40 = sbr.rel (0) target = $region13
    $region12: #{tpu_custom_call.1} parent=1 // pred_region
      %s42 = ssub.s32 128, 128
      %43 = vsyncadd [#allocation6], %s42
      %s45 = sshll.u32 [#allocation7], 4
      %s46 = int_to_ptr.vmem [resolvable:$true] %s45
      %48 = dma.hbm_to_vmem [thread:$0]  %s2, 128, %s46, [#allocation6]
    $region13: #{tpu_custom_call.1} parent=1 // pred_fallthru
      _
    // Predicated region
    $region14: #{tpu_custom_call.1} parent=1 // pred_check
      _
    $region15: #{tpu_custom_call.1} parent=1 // pred_check_branch
      %50 = sbr.rel (0) target = $region17
    $region16: #{tpu_custom_call.1} parent=1 // pred_region
      %s52 = ssub.s32 512, 512
      %53 = vsyncadd [#allocation9], %s52
      %s54 = sshll.u32 [#allocation8], 4
      %s55 = int_to_ptr.vmem [resolvable:$true] %s54
      %60 = dma.hbm_to_vmem [thread:$0]  %s3, 512, %s55, [#allocation9], 128, 128, 8
    $region17: #{tpu_custom_call.1} parent=1 // pred_fallthru
      _
    // Predicated region
    $region18: #{tpu_custom_call.1} parent=1 // pred_check
      _
    $region19: #{tpu_custom_call.1} parent=1 // pred_check_branch
      %62 = sbr.rel (0) target = $region21
    $region20: #{tpu_custom_call.1} parent=1 // pred_region
      %s64 = ssub.s32 512, 512
      %65 = vsyncadd [#allocation9], %s64
      %s66 = sshll.u32 [#allocation10], 4
      %s67 = int_to_ptr.vmem [resolvable:$true] %s66
      %72 = dma.hbm_to_vmem [thread:$0]  %s4, 512, %s67, [#allocation9], 128, 128, 8
    $region21: #{tpu_custom_call.1} parent=1 // pred_fallthru
      _
    // Predicated region
    $region22: #{tpu_custom_call.1} parent=1 // pred_check
      _
    $region23: #{tpu_custom_call.1} parent=1 // pred_check_branch
      %74 = sbr.rel (0) target = $region25
    $region24: #{tpu_custom_call.1} parent=1 // pred_region
      %75 = dma.done [#allocation3], 128
    $region25: #{tpu_custom_call.1} parent=1 // pred_fallthru
      _
    // Predicated region
    $region26: #{tpu_custom_call.1} parent=1 // pred_check
      _
    $region27: #{tpu_custom_call.1} parent=1 // pred_check_branch
      %77 = sbr.rel (0) target = $region29
    $region28: #{tpu_custom_call.1} parent=1 // pred_region
      %78 = dma.done [#allocation6], 1024
    $region29: #{tpu_custom_call.1} parent=1 // pred_fallthru
      _
    // Predicated region
    $region30: #{tpu_custom_call.1} parent=1 // pred_check
      _
    $region31: #{tpu_custom_call.1} parent=1 // pred_check_branch
      %80 = sbr.rel (0) target = $region33
    $region32: #{tpu_custom_call.1} parent=1 // pred_region
      %81 = dma.done [#allocation6], 128
    $region33: #{tpu_custom_call.1} parent=1 // pred_fallthru
      _
    // Predicated region
    $region34: #{tpu_custom_call.1} parent=1 // pred_check
      _
    $region35: #{tpu_custom_call.1} parent=1 // pred_check_branch
      %83 = sbr.rel (0) target = $region37
    $region36: #{tpu_custom_call.1} parent=1 // pred_region
      %84 = dma.done [#allocation9], 512
    $region37: #{tpu_custom_call.1} parent=1 // pred_fallthru
      _
    // Predicated region
    $region38: #{tpu_custom_call.1} parent=1 // pred_check
      _
    $region39: #{tpu_custom_call.1} parent=1 // pred_check_branch
      %86 = sbr.rel (0) target = $region41
    $region40: #{tpu_custom_call.1} parent=1 // pred_region
      %87 = dma.done [#allocation9], 512
    $region41: #{tpu_custom_call.1} parent=1 // pred_fallthru
      _
    %v88 = vld [vmem:[#allocation5] sm:$0xff]
    %v89 = vld [vmem:[#allocation5 + $0x8] sm:$0xff]
    %v90 = vld [vmem:[#allocation5 + $0x10] sm:$0xff]
    %v91 = vld [vmem:[#allocation5 + $0x18] sm:$0xff]
    %v92 = vld [vmem:[#allocation5 + $0x20] sm:$0xff]
    %v93 = vld [vmem:[#allocation5 + $0x28] sm:$0xff]
    %v94 = vld [vmem:[#allocation5 + $0x30] sm:$0xff]
    %v95 = vld [vmem:[#allocation5 + $0x38] sm:$0xff]
    %v96 = vld [vmem:[#allocation7] sm:$0xff]
    %vm97 = vcmp.eq.s32.totalorder %v96, 0
    %v98 = vld [vmem:[#allocation2] sm:$0xff]
    %v99 = vld [vmem:[#allocation8] sm:$0xff]
    %v100 = vld [vmem:[#allocation8 + $0x8] sm:$0xff]
    %v101 = vld [vmem:[#allocation8 + $0x10] sm:$0xff]
    %v102 = vld [vmem:[#allocation8 + $0x18] sm:$0xff]
    %vm103 = vcmask 261120
    %v105 = vsel %vm103, %v98, 0
    %107 = vmatprep.subr.mxu0 0.0
    %108 = vmatpush1.msra.mxu0 %v99
    %109 = vmatprep.subr.mxu0 0.0
    %110 = vmatpush1.msra.mxu0 %v100
    %111 = vmatprep.subr.mxu0 0.0
    %112 = vmatpush1.msra.mxu0 %v101
    %113 = vmatprep.subr.mxu0 0.0
    %114 = vmatpush1.msra.mxu0 %v102
    %115 = vmatprep.subr.mxu0 0.0
    %116 = vmatpush1.msra.mxu0 0.0
    %117 = vmatprep.subr.mxu0 0.0
    %118 = vmatpush1.msra.mxu0 0.0
    %119 = vmatprep.subr.mxu0 0.0
    %120 = vmatpush1.msra.mxu0 0.0
    %121 = vmatprep.subr.mxu0 0.0
    %122 = vmatpush1.msra.mxu0 0.0
    %123 = vmatprep.subr.mxu0 0.0
    %124 = vmatpush1.msra.mxu0 0.0
    %125 = vmatprep.subr.mxu0 0.0
    %126 = vmatpush1.msra.mxu0 0.0
    %127 = vmatprep.subr.mxu0 0.0
    %128 = vmatpush1.msra.mxu0 0.0
    %129 = vmatprep.subr.mxu0 0.0
    %130 = vmatpush1.msra.mxu0 0.0
    %131 = vmatprep.subr.mxu0 0.0
    %132 = vmatpush1.msra.mxu0 0.0
    %133 = vmatprep.subr.mxu0 0.0
    %134 = vmatpush1.msra.mxu0 0.0
    %135 = vmatprep.subr.mxu0 0.0
    %136 = vmatpush1.msra.mxu0 0.0
    %137 = vmatprep.subr.mxu0 0.0
    %138 = vmatpush1.msra.mxu0 0.0
    %139 = vmatprep.subr.mxu0 0.0
    %140 = vmatpush1.msra.mxu0 0.0
    %141 = vmatprep.subr.mxu0 0.0
    %142 = vmatpush1.msra.mxu0 0.0
    %143 = vmatprep.subr.mxu0 0.0
    %144 = vmatpush1.msra.mxu0 0.0
    %145 = vmatprep.subr.mxu0 0.0
    %146 = vmatpush1.msra.mxu0 0.0
    %147 = vmatprep.subr.mxu0 0.0
    %148 = vmatpush1.msra.mxu0 0.0
    %149 = vmatprep.subr.mxu0 0.0
    %150 = vmatpush1.msra.mxu0 0.0
    %151 = vmatprep.subr.mxu0 0.0
    %152 = vmatpush1.msra.mxu0 0.0
    %153 = vmatprep.subr.mxu0 0.0
    %154 = vmatpush1.msra.mxu0 0.0
    %155 = vmatprep.subr.mxu0 0.0
    %156 = vmatpush1.msra.mxu0 0.0
    %157 = vmatprep.subr.mxu0 0.0
    %158 = vmatpush1.msra.mxu0 0.0
    %159 = vmatprep.subr.mxu0 0.0
    %160 = vmatpush1.msra.mxu0 0.0
    %161 = vmatprep.subr.mxu0 0.0
    %162 = vmatpush1.msra.mxu0 0.0
    %163 = vmatprep.subr.mxu0 0.0
    %164 = vmatpush1.msra.mxu0 0.0
    %165 = vmatprep.subr.mxu0 0.0
    %166 = vmatpush1.msra.mxu0 0.0
    %167 = vmatprep.subr.mxu0 0.0
    %168 = vmatpush1.msra.mxu0 0.0
    %169 = vmatprep.subr.mxu0 0.0
    %170 = vmatpush1.msra.mxu0 0.0
    %171 = vmatprep.mubr.f32.mxu0 0.0
    %172 = vmatmul.mubr.f32.gmra.mrb[0].mxu0 %v105
    %v173 = vpop.f32.mrb[0].mxu0
    %v174 = vadd.f32 0.0, %v173
    %v175 = vpop.f32.mrb[0].mxu0
    %176 = vdwg.mxu0
    %v178 = vcombine.high %v174, %v174
    %v180 = vunpack.c.l.s4 1966171168
    %v181 = vunpack.c.0.s8 %v180
    %v182 = vlaneseq
    %v183 = vshrl.u32 %v182, 7
    %v184 = vsub.s32 %v181, %v183
    %v185 = vrot.slane %v174, %v184
    %v187 = vunpack.c.l.s4 1966171168
    %v188 = vunpack.c.0.s8 %v187
    %v189 = vlaneseq
    %v190 = vshrl.u32 %v189, 7
    %v191 = vsub.s32 %v188, %v190
    %v192 = vrot.slane %v178, %v191
    %v193 = vcombine.high %v185, %v185
    %v194 = vcombine.high %v192, %v192
    %v196 = vunpack.c.l.s4 1966171168
    %v197 = vunpack.c.0.s8 %v196
    %v198 = vlaneseq
    %v199 = vshrl.u32 %v198, 7
    %v200 = vsub.s32 %v197, %v199
    %v201 = vrot.slane %v185, %v200
    %v203 = vunpack.c.l.s4 1966171168
    %v204 = vunpack.c.0.s8 %v203
    %v205 = vlaneseq
    %v206 = vshrl.u32 %v205, 7
    %v207 = vsub.s32 %v204, %v206
    %v208 = vrot.slane %v192, %v207
    %v210 = vunpack.c.l.s4 1966171168
    %v211 = vunpack.c.0.s8 %v210
    %v212 = vlaneseq
    %v213 = vshrl.u32 %v212, 7
    %v214 = vsub.s32 %v211, %v213
    %v215 = vrot.slane %v193, %v214
    %v217 = vunpack.c.l.s4 1966171168
    %v218 = vunpack.c.0.s8 %v217
    %v219 = vlaneseq
    %v220 = vshrl.u32 %v219, 7
    %v221 = vsub.s32 %v218, %v220
    %v222 = vrot.slane %v194, %v221
    %v223 = vcombine.high %v201, %v201
    %v224 = vcombine.high %v208, %v208
    %v225 = vcombine.high %v215, %v215
    %v226 = vcombine.high %v222, %v222
    %v227 = vsel %vm103, %v201, 0
    %v230 = vsel %vm103, %v88, 0
    %232 = vmatprep.subr.mxu0 0.0
    %233 = vmatpush1.xpose.msra.mxu0 %v230
    %234 = vmatprep.subr.mxu0 0.0
    %235 = vmatpush1.xpose.msra.mxu0 0.0
    %236 = vmatprep.subr.mxu0 0.0
    %237 = vmatpush1.xpose.msra.mxu0 0.0
    %238 = vmatprep.subr.mxu0 0.0
    %239 = vmatpush1.xpose.msra.mxu0 0.0
    %240 = vmatprep.subr.mxu0 0.0
    %241 = vmatpush1.xpose.msra.mxu0 0.0
    %242 = vmatprep.subr.mxu0 0.0
    %243 = vmatpush1.xpose.msra.mxu0 0.0
    %244 = vmatprep.subr.mxu0 0.0
    %245 = vmatpush1.xpose.msra.mxu0 0.0
    %246 = vmatprep.subr.mxu0 0.0
    %247 = vmatpush1.xpose.msra.mxu0 0.0
    %248 = vmatprep.subr.mxu0 0.0
    %249 = vmatpush1.xpose.msra.mxu0 0.0
    %250 = vmatprep.subr.mxu0 0.0
    %251 = vmatpush1.xpose.msra.mxu0 0.0
    %252 = vmatprep.subr.mxu0 0.0
    %253 = vmatpush1.xpose.msra.mxu0 0.0
    %254 = vmatprep.subr.mxu0 0.0
    %255 = vmatpush1.xpose.msra.mxu0 0.0
    %256 = vmatprep.subr.mxu0 0.0
    %257 = vmatpush1.xpose.msra.mxu0 0.0
    %258 = vmatprep.subr.mxu0 0.0
    %259 = vmatpush1.xpose.msra.mxu0 0.0
    %260 = vmatprep.subr.mxu0 0.0
    %261 = vmatpush1.xpose.msra.mxu0 0.0
    %262 = vmatprep.subr.mxu0 0.0
    %263 = vmatpush1.xpose.msra.mxu0 0.0
    %264 = vmatprep.subr.mxu0 0.0
    %265 = vmatpush1.xpose.msra.mxu0 0.0
    %266 = vmatprep.subr.mxu0 0.0
    %267 = vmatpush1.xpose.msra.mxu0 0.0
    %268 = vmatprep.subr.mxu0 0.0
    %269 = vmatpush1.xpose.msra.mxu0 0.0
    %270 = vmatprep.subr.mxu0 0.0
    %271 = vmatpush1.xpose.msra.mxu0 0.0
    %272 = vmatprep.subr.mxu0 0.0
    %273 = vmatpush1.xpose.msra.mxu0 0.0
    %274 = vmatprep.subr.mxu0 0.0
    %275 = vmatpush1.xpose.msra.mxu0 0.0
    %276 = vmatprep.subr.mxu0 0.0
    %277 = vmatpush1.xpose.msra.mxu0 0.0
    %278 = vmatprep.subr.mxu0 0.0
    %279 = vmatpush1.xpose.msra.mxu0 0.0
    %280 = vmatprep.subr.mxu0 0.0
    %281 = vmatpush1.xpose.msra.mxu0 0.0
    %282 = vmatprep.subr.mxu0 0.0
    %283 = vmatpush1.xpose.msra.mxu0 0.0
    %284 = vmatprep.subr.mxu0 0.0
    %285 = vmatpush1.xpose.msra.mxu0 0.0
    %286 = vmatprep.subr.mxu0 0.0
    %287 = vmatpush1.xpose.msra.mxu0 0.0
    %288 = vmatprep.subr.mxu0 0.0
    %289 = vmatpush1.xpose.msra.mxu0 0.0
    %290 = vmatprep.subr.mxu0 0.0
    %291 = vmatpush1.xpose.msra.mxu0 0.0
    %292 = vmatprep.subr.mxu0 0.0
    %293 = vmatpush1.xpose.msra.mxu0 0.0
    %294 = vmatprep.subr.mxu0 0.0
    %295 = vmatpush1.xpose.msra.mxu0 0.0
    %296 = vmatprep.mubr.f32.mxu0 0.0
    %297 = vmatmul.mubr.f32.gmra.mrb[0].mxu0 %v227
    %v298 = vpop.f32.mrb[0].mxu0
    %v299 = vadd.f32 0.0, %v298
    %v300 = vpop.f32.mrb[0].mxu0
    %301 = vdwg.mxu0
    %v302 = vsel %vm103, %v215, 0
    %v305 = vsel %vm103, %v89, 0
    %307 = vmatprep.subr.mxu0 0.0
    %308 = vmatpush1.xpose.msra.mxu0 %v305
    %309 = vmatprep.subr.mxu0 0.0
    %310 = vmatpush1.xpose.msra.mxu0 0.0
    %311 = vmatprep.subr.mxu0 0.0
    %312 = vmatpush1.xpose.msra.mxu0 0.0
    %313 = vmatprep.subr.mxu0 0.0
    %314 = vmatpush1.xpose.msra.mxu0 0.0
    %315 = vmatprep.subr.mxu0 0.0
    %316 = vmatpush1.xpose.msra.mxu0 0.0
    %317 = vmatprep.subr.mxu0 0.0
    %318 = vmatpush1.xpose.msra.mxu0 0.0
    %319 = vmatprep.subr.mxu0 0.0
    %320 = vmatpush1.xpose.msra.mxu0 0.0
    %321 = vmatprep.subr.mxu0 0.0
    %322 = vmatpush1.xpose.msra.mxu0 0.0
    %323 = vmatprep.subr.mxu0 0.0
    %324 = vmatpush1.xpose.msra.mxu0 0.0
    %325 = vmatprep.subr.mxu0 0.0
    %326 = vmatpush1.xpose.msra.mxu0 0.0
    %327 = vmatprep.subr.mxu0 0.0
    %328 = vmatpush1.xpose.msra.mxu0 0.0
    %329 = vmatprep.subr.mxu0 0.0
    %330 = vmatpush1.xpose.msra.mxu0 0.0
    %331 = vmatprep.subr.mxu0 0.0
    %332 = vmatpush1.xpose.msra.mxu0 0.0
    %333 = vmatprep.subr.mxu0 0.0
    %334 = vmatpush1.xpose.msra.mxu0 0.0
    %335 = vmatprep.subr.mxu0 0.0
    %336 = vmatpush1.xpose.msra.mxu0 0.0
    %337 = vmatprep.subr.mxu0 0.0
    %338 = vmatpush1.xpose.msra.mxu0 0.0
    %339 = vmatprep.subr.mxu0 0.0
    %340 = vmatpush1.xpose.msra.mxu0 0.0
    %341 = vmatprep.subr.mxu0 0.0
    %342 = vmatpush1.xpose.msra.mxu0 0.0
    %343 = vmatprep.subr.mxu0 0.0
    %344 = vmatpush1.xpose.msra.mxu0 0.0
    %345 = vmatprep.subr.mxu0 0.0
    %346 = vmatpush1.xpose.msra.mxu0 0.0
    %347 = vmatprep.subr.mxu0 0.0
    %348 = vmatpush1.xpose.msra.mxu0 0.0
    %349 = vmatprep.subr.mxu0 0.0
    %350 = vmatpush1.xpose.msra.mxu0 0.0
    %351 = vmatprep.subr.mxu0 0.0
    %352 = vmatpush1.xpose.msra.mxu0 0.0
    %353 = vmatprep.subr.mxu0 0.0
    %354 = vmatpush1.xpose.msra.mxu0 0.0
    %355 = vmatprep.subr.mxu0 0.0
    %356 = vmatpush1.xpose.msra.mxu0 0.0
    %357 = vmatprep.subr.mxu0 0.0
    %358 = vmatpush1.xpose.msra.mxu0 0.0
    %359 = vmatprep.subr.mxu0 0.0
    %360 = vmatpush1.xpose.msra.mxu0 0.0
    %361 = vmatprep.subr.mxu0 0.0
    %362 = vmatpush1.xpose.msra.mxu0 0.0
    %363 = vmatprep.subr.mxu0 0.0
    %364 = vmatpush1.xpose.msra.mxu0 0.0
    %365 = vmatprep.subr.mxu0 0.0
    %366 = vmatpush1.xpose.msra.mxu0 0.0
    %367 = vmatprep.subr.mxu0 0.0
    %368 = vmatpush1.xpose.msra.mxu0 0.0
    %369 = vmatprep.subr.mxu0 0.0
    %370 = vmatpush1.xpose.msra.mxu0 0.0
    %371 = vmatprep.mubr.f32.mxu0 0.0
    %372 = vmatmul.mubr.f32.gmra.mrb[0].mxu0 %v302
    %v373 = vpop.f32.mrb[0].mxu0
    %v374 = vadd.f32 0.0, %v373
    %v375 = vpop.f32.mrb[0].mxu0
    %376 = vdwg.mxu0
    %v377 = vsel %vm103, %v223, 0
    %v380 = vsel %vm103, %v90, 0
    %382 = vmatprep.subr.mxu0 0.0
    %383 = vmatpush1.xpose.msra.mxu0 %v380
    %384 = vmatprep.subr.mxu0 0.0
    %385 = vmatpush1.xpose.msra.mxu0 0.0
    %386 = vmatprep.subr.mxu0 0.0
    %387 = vmatpush1.xpose.msra.mxu0 0.0
    %388 = vmatprep.subr.mxu0 0.0
    %389 = vmatpush1.xpose.msra.mxu0 0.0
    %390 = vmatprep.subr.mxu0 0.0
    %391 = vmatpush1.xpose.msra.mxu0 0.0
    %392 = vmatprep.subr.mxu0 0.0
    %393 = vmatpush1.xpose.msra.mxu0 0.0
    %394 = vmatprep.subr.mxu0 0.0
    %395 = vmatpush1.xpose.msra.mxu0 0.0
    %396 = vmatprep.subr.mxu0 0.0
    %397 = vmatpush1.xpose.msra.mxu0 0.0
    %398 = vmatprep.subr.mxu0 0.0
    %399 = vmatpush1.xpose.msra.mxu0 0.0
    %400 = vmatprep.subr.mxu0 0.0
    %401 = vmatpush1.xpose.msra.mxu0 0.0
    %402 = vmatprep.subr.mxu0 0.0
    %403 = vmatpush1.xpose.msra.mxu0 0.0
    %404 = vmatprep.subr.mxu0 0.0
    %405 = vmatpush1.xpose.msra.mxu0 0.0
    %406 = vmatprep.subr.mxu0 0.0
    %407 = vmatpush1.xpose.msra.mxu0 0.0
    %408 = vmatprep.subr.mxu0 0.0
    %409 = vmatpush1.xpose.msra.mxu0 0.0
    %410 = vmatprep.subr.mxu0 0.0
    %411 = vmatpush1.xpose.msra.mxu0 0.0
    %412 = vmatprep.subr.mxu0 0.0
    %413 = vmatpush1.xpose.msra.mxu0 0.0
    %414 = vmatprep.subr.mxu0 0.0
    %415 = vmatpush1.xpose.msra.mxu0 0.0
    %416 = vmatprep.subr.mxu0 0.0
    %417 = vmatpush1.xpose.msra.mxu0 0.0
    %418 = vmatprep.subr.mxu0 0.0
    %419 = vmatpush1.xpose.msra.mxu0 0.0
    %420 = vmatprep.subr.mxu0 0.0
    %421 = vmatpush1.xpose.msra.mxu0 0.0
    %422 = vmatprep.subr.mxu0 0.0
    %423 = vmatpush1.xpose.msra.mxu0 0.0
    %424 = vmatprep.subr.mxu0 0.0
    %425 = vmatpush1.xpose.msra.mxu0 0.0
    %426 = vmatprep.subr.mxu0 0.0
    %427 = vmatpush1.xpose.msra.mxu0 0.0
    %428 = vmatprep.subr.mxu0 0.0
    %429 = vmatpush1.xpose.msra.mxu0 0.0
    %430 = vmatprep.subr.mxu0 0.0
    %431 = vmatpush1.xpose.msra.mxu0 0.0
    %432 = vmatprep.subr.mxu0 0.0
    %433 = vmatpush1.xpose.msra.mxu0 0.0
    %434 = vmatprep.subr.mxu0 0.0
    %435 = vmatpush1.xpose.msra.mxu0 0.0
    %436 = vmatprep.subr.mxu0 0.0
    %437 = vmatpush1.xpose.msra.mxu0 0.0
    %438 = vmatprep.subr.mxu0 0.0
    %439 = vmatpush1.xpose.msra.mxu0 0.0
    %440 = vmatprep.subr.mxu0 0.0
    %441 = vmatpush1.xpose.msra.mxu0 0.0
    %442 = vmatprep.subr.mxu0 0.0
    %443 = vmatpush1.xpose.msra.mxu0 0.0
    %444 = vmatprep.subr.mxu0 0.0
    %445 = vmatpush1.xpose.msra.mxu0 0.0
    %446 = vmatprep.mubr.f32.mxu0 0.0
    %447 = vmatmul.mubr.f32.gmra.mrb[0].mxu0 %v377
    %v448 = vpop.f32.mrb[0].mxu0
    %v449 = vadd.f32 0.0, %v448
    %v450 = vpop.f32.mrb[0].mxu0
    %451 = vdwg.mxu0
    %v452 = vsel %vm103, %v225, 0
    %v455 = vsel %vm103, %v91, 0
    %457 = vmatprep.subr.mxu0 0.0
    %458 = vmatpush1.xpose.msra.mxu0 %v455
    %459 = vmatprep.subr.mxu0 0.0
    %460 = vmatpush1.xpose.msra.mxu0 0.0
    %461 = vmatprep.subr.mxu0 0.0
    %462 = vmatpush1.xpose.msra.mxu0 0.0
    %463 = vmatprep.subr.mxu0 0.0
    %464 = vmatpush1.xpose.msra.mxu0 0.0
    %465 = vmatprep.subr.mxu0 0.0
    %466 = vmatpush1.xpose.msra.mxu0 0.0
    %467 = vmatprep.subr.mxu0 0.0
    %468 = vmatpush1.xpose.msra.mxu0 0.0
    %469 = vmatprep.subr.mxu0 0.0
    %470 = vmatpush1.xpose.msra.mxu0 0.0
    %471 = vmatprep.subr.mxu0 0.0
    %472 = vmatpush1.xpose.msra.mxu0 0.0
    %473 = vmatprep.subr.mxu0 0.0
    %474 = vmatpush1.xpose.msra.mxu0 0.0
    %475 = vmatprep.subr.mxu0 0.0
    %476 = vmatpush1.xpose.msra.mxu0 0.0
    %477 = vmatprep.subr.mxu0 0.0
    %478 = vmatpush1.xpose.msra.mxu0 0.0
    %479 = vmatprep.subr.mxu0 0.0
    %480 = vmatpush1.xpose.msra.mxu0 0.0
    %481 = vmatprep.subr.mxu0 0.0
    %482 = vmatpush1.xpose.msra.mxu0 0.0
    %483 = vmatprep.subr.mxu0 0.0
    %484 = vmatpush1.xpose.msra.mxu0 0.0
    %485 = vmatprep.subr.mxu0 0.0
    %486 = vmatpush1.xpose.msra.mxu0 0.0
    %487 = vmatprep.subr.mxu0 0.0
    %488 = vmatpush1.xpose.msra.mxu0 0.0
    %489 = vmatprep.subr.mxu0 0.0
    %490 = vmatpush1.xpose.msra.mxu0 0.0
    %491 = vmatprep.subr.mxu0 0.0
    %492 = vmatpush1.xpose.msra.mxu0 0.0
    %493 = vmatprep.subr.mxu0 0.0
    %494 = vmatpush1.xpose.msra.mxu0 0.0
    %495 = vmatprep.subr.mxu0 0.0
    %496 = vmatpush1.xpose.msra.mxu0 0.0
    %497 = vmatprep.subr.mxu0 0.0
    %498 = vmatpush1.xpose.msra.mxu0 0.0
    %499 = vmatprep.subr.mxu0 0.0
    %500 = vmatpush1.xpose.msra.mxu0 0.0
    %501 = vmatprep.subr.mxu0 0.0
    %502 = vmatpush1.xpose.msra.mxu0 0.0
    %503 = vmatprep.subr.mxu0 0.0
    %504 = vmatpush1.xpose.msra.mxu0 0.0
    %505 = vmatprep.subr.mxu0 0.0
    %506 = vmatpush1.xpose.msra.mxu0 0.0
    %507 = vmatprep.subr.mxu0 0.0
    %508 = vmatpush1.xpose.msra.mxu0 0.0
    %509 = vmatprep.subr.mxu0 0.0
    %510 = vmatpush1.xpose.msra.mxu0 0.0
    %511 = vmatprep.subr.mxu0 0.0
    %512 = vmatpush1.xpose.msra.mxu0 0.0
    %513 = vmatprep.subr.mxu0 0.0
    %514 = vmatpush1.xpose.msra.mxu0 0.0
    %515 = vmatprep.subr.mxu0 0.0
    %516 = vmatpush1.xpose.msra.mxu0 0.0
    %517 = vmatprep.subr.mxu0 0.0
    %518 = vmatpush1.xpose.msra.mxu0 0.0
    %519 = vmatprep.subr.mxu0 0.0
    %520 = vmatpush1.xpose.msra.mxu0 0.0
    %521 = vmatprep.mubr.f32.mxu0 0.0
    %522 = vmatmul.mubr.f32.gmra.mrb[0].mxu0 %v452
    %v523 = vpop.f32.mrb[0].mxu0
    %v524 = vadd.f32 0.0, %v523
    %v525 = vpop.f32.mrb[0].mxu0
    %526 = vdwg.mxu0
    %v527 = vsel %vm103, %v208, 0
    %v530 = vsel %vm103, %v92, 0
    %532 = vmatprep.subr.mxu0 0.0
    %533 = vmatpush1.xpose.msra.mxu0 %v530
    %534 = vmatprep.subr.mxu0 0.0
    %535 = vmatpush1.xpose.msra.mxu0 0.0
    %536 = vmatprep.subr.mxu0 0.0
    %537 = vmatpush1.xpose.msra.mxu0 0.0
    %538 = vmatprep.subr.mxu0 0.0
    %539 = vmatpush1.xpose.msra.mxu0 0.0
    %540 = vmatprep.subr.mxu0 0.0
    %541 = vmatpush1.xpose.msra.mxu0 0.0
    %542 = vmatprep.subr.mxu0 0.0
    %543 = vmatpush1.xpose.msra.mxu0 0.0
    %544 = vmatprep.subr.mxu0 0.0
    %545 = vmatpush1.xpose.msra.mxu0 0.0
    %546 = vmatprep.subr.mxu0 0.0
    %547 = vmatpush1.xpose.msra.mxu0 0.0
    %548 = vmatprep.subr.mxu0 0.0
    %549 = vmatpush1.xpose.msra.mxu0 0.0
    %550 = vmatprep.subr.mxu0 0.0
    %551 = vmatpush1.xpose.msra.mxu0 0.0
    %552 = vmatprep.subr.mxu0 0.0
    %553 = vmatpush1.xpose.msra.mxu0 0.0
    %554 = vmatprep.subr.mxu0 0.0
    %555 = vmatpush1.xpose.msra.mxu0 0.0
    %556 = vmatprep.subr.mxu0 0.0
    %557 = vmatpush1.xpose.msra.mxu0 0.0
    %558 = vmatprep.subr.mxu0 0.0
    %559 = vmatpush1.xpose.msra.mxu0 0.0
    %560 = vmatprep.subr.mxu0 0.0
    %561 = vmatpush1.xpose.msra.mxu0 0.0
    %562 = vmatprep.subr.mxu0 0.0
    %563 = vmatpush1.xpose.msra.mxu0 0.0
    %564 = vmatprep.subr.mxu0 0.0
    %565 = vmatpush1.xpose.msra.mxu0 0.0
    %566 = vmatprep.subr.mxu0 0.0
    %567 = vmatpush1.xpose.msra.mxu0 0.0
    %568 = vmatprep.subr.mxu0 0.0
    %569 = vmatpush1.xpose.msra.mxu0 0.0
    %570 = vmatprep.subr.mxu0 0.0
    %571 = vmatpush1.xpose.msra.mxu0 0.0
    %572 = vmatprep.subr.mxu0 0.0
    %573 = vmatpush1.xpose.msra.mxu0 0.0
    %574 = vmatprep.subr.mxu0 0.0
    %575 = vmatpush1.xpose.msra.mxu0 0.0
    %576 = vmatprep.subr.mxu0 0.0
    %577 = vmatpush1.xpose.msra.mxu0 0.0
    %578 = vmatprep.subr.mxu0 0.0
    %579 = vmatpush1.xpose.msra.mxu0 0.0
    %580 = vmatprep.subr.mxu0 0.0
    %581 = vmatpush1.xpose.msra.mxu0 0.0
    %582 = vmatprep.subr.mxu0 0.0
    %583 = vmatpush1.xpose.msra.mxu0 0.0
    %584 = vmatprep.subr.mxu0 0.0
    %585 = vmatpush1.xpose.msra.mxu0 0.0
    %586 = vmatprep.subr.mxu0 0.0
    %587 = vmatpush1.xpose.msra.mxu0 0.0
    %588 = vmatprep.subr.mxu0 0.0
    %589 = vmatpush1.xpose.msra.mxu0 0.0
    %590 = vmatprep.subr.mxu0 0.0
    %591 = vmatpush1.xpose.msra.mxu0 0.0
    %592 = vmatprep.subr.mxu0 0.0
    %593 = vmatpush1.xpose.msra.mxu0 0.0
    %594 = vmatprep.subr.mxu0 0.0
    %595 = vmatpush1.xpose.msra.mxu0 0.0
    %596 = vmatprep.mubr.f32.mxu0 0.0
    %597 = vmatmul.mubr.f32.gmra.mrb[0].mxu0 %v527
    %v598 = vpop.f32.mrb[0].mxu0
    %v599 = vadd.f32 0.0, %v598
    %v600 = vpop.f32.mrb[0].mxu0
    %601 = vdwg.mxu0
    %v602 = vsel %vm103, %v222, 0
    %v605 = vsel %vm103, %v93, 0
    %607 = vmatprep.subr.mxu0 0.0
    %608 = vmatpush1.xpose.msra.mxu0 %v605
    %609 = vmatprep.subr.mxu0 0.0
    %610 = vmatpush1.xpose.msra.mxu0 0.0
    %611 = vmatprep.subr.mxu0 0.0
    %612 = vmatpush1.xpose.msra.mxu0 0.0
    %613 = vmatprep.subr.mxu0 0.0
    %614 = vmatpush1.xpose.msra.mxu0 0.0
    %615 = vmatprep.subr.mxu0 0.0
    %616 = vmatpush1.xpose.msra.mxu0 0.0
    %617 = vmatprep.subr.mxu0 0.0
    %618 = vmatpush1.xpose.msra.mxu0 0.0
    %619 = vmatprep.subr.mxu0 0.0
    %620 = vmatpush1.xpose.msra.mxu0 0.0
    %621 = vmatprep.subr.mxu0 0.0
    %622 = vmatpush1.xpose.msra.mxu0 0.0
    %623 = vmatprep.subr.mxu0 0.0
    %624 = vmatpush1.xpose.msra.mxu0 0.0
    %625 = vmatprep.subr.mxu0 0.0
    %626 = vmatpush1.xpose.msra.mxu0 0.0
    %627 = vmatprep.subr.mxu0 0.0
    %628 = vmatpush1.xpose.msra.mxu0 0.0
    %629 = vmatprep.subr.mxu0 0.0
    %630 = vmatpush1.xpose.msra.mxu0 0.0
    %631 = vmatprep.subr.mxu0 0.0
    %632 = vmatpush1.xpose.msra.mxu0 0.0
    %633 = vmatprep.subr.mxu0 0.0
    %634 = vmatpush1.xpose.msra.mxu0 0.0
    %635 = vmatprep.subr.mxu0 0.0
    %636 = vmatpush1.xpose.msra.mxu0 0.0
    %637 = vmatprep.subr.mxu0 0.0
    %638 = vmatpush1.xpose.msra.mxu0 0.0
    %639 = vmatprep.subr.mxu0 0.0
    %640 = vmatpush1.xpose.msra.mxu0 0.0
    %641 = vmatprep.subr.mxu0 0.0
    %642 = vmatpush1.xpose.msra.mxu0 0.0
    %643 = vmatprep.subr.mxu0 0.0
    %644 = vmatpush1.xpose.msra.mxu0 0.0
    %645 = vmatprep.subr.mxu0 0.0
    %646 = vmatpush1.xpose.msra.mxu0 0.0
    %647 = vmatprep.subr.mxu0 0.0
    %648 = vmatpush1.xpose.msra.mxu0 0.0
    %649 = vmatprep.subr.mxu0 0.0
    %650 = vmatpush1.xpose.msra.mxu0 0.0
    %651 = vmatprep.subr.mxu0 0.0
    %652 = vmatpush1.xpose.msra.mxu0 0.0
    %653 = vmatprep.subr.mxu0 0.0
    %654 = vmatpush1.xpose.msra.mxu0 0.0
    %655 = vmatprep.subr.mxu0 0.0
    %656 = vmatpush1.xpose.msra.mxu0 0.0
    %657 = vmatprep.subr.mxu0 0.0
    %658 = vmatpush1.xpose.msra.mxu0 0.0
    %659 = vmatprep.subr.mxu0 0.0
    %660 = vmatpush1.xpose.msra.mxu0 0.0
    %661 = vmatprep.subr.mxu0 0.0
    %662 = vmatpush1.xpose.msra.mxu0 0.0
    %663 = vmatprep.subr.mxu0 0.0
    %664 = vmatpush1.xpose.msra.mxu0 0.0
    %665 = vmatprep.subr.mxu0 0.0
    %666 = vmatpush1.xpose.msra.mxu0 0.0
    %667 = vmatprep.subr.mxu0 0.0
    %668 = vmatpush1.xpose.msra.mxu0 0.0
    %669 = vmatprep.subr.mxu0 0.0
    %670 = vmatpush1.xpose.msra.mxu0 0.0
    %671 = vmatprep.mubr.f32.mxu0 0.0
    %672 = vmatmul.mubr.f32.gmra.mrb[0].mxu0 %v602
    %v673 = vpop.f32.mrb[0].mxu0
    %v674 = vadd.f32 0.0, %v673
    %v675 = vpop.f32.mrb[0].mxu0
    %676 = vdwg.mxu0
    %v677 = vsel %vm103, %v224, 0
    %v680 = vsel %vm103, %v94, 0
    %682 = vmatprep.subr.mxu0 0.0
    %683 = vmatpush1.xpose.msra.mxu0 %v680
    %684 = vmatprep.subr.mxu0 0.0
    %685 = vmatpush1.xpose.msra.mxu0 0.0
    %686 = vmatprep.subr.mxu0 0.0
    %687 = vmatpush1.xpose.msra.mxu0 0.0
    %688 = vmatprep.subr.mxu0 0.0
    %689 = vmatpush1.xpose.msra.mxu0 0.0
    %690 = vmatprep.subr.mxu0 0.0
    %691 = vmatpush1.xpose.msra.mxu0 0.0
    %692 = vmatprep.subr.mxu0 0.0
    %693 = vmatpush1.xpose.msra.mxu0 0.0
    %694 = vmatprep.subr.mxu0 0.0
    %695 = vmatpush1.xpose.msra.mxu0 0.0
    %696 = vmatprep.subr.mxu0 0.0
    %697 = vmatpush1.xpose.msra.mxu0 0.0
    %698 = vmatprep.subr.mxu0 0.0
    %699 = vmatpush1.xpose.msra.mxu0 0.0
    %700 = vmatprep.subr.mxu0 0.0
    %701 = vmatpush1.xpose.msra.mxu0 0.0
    %702 = vmatprep.subr.mxu0 0.0
    %703 = vmatpush1.xpose.msra.mxu0 0.0
    %704 = vmatprep.subr.mxu0 0.0
    %705 = vmatpush1.xpose.msra.mxu0 0.0
    %706 = vmatprep.subr.mxu0 0.0
    %707 = vmatpush1.xpose.msra.mxu0 0.0
    %708 = vmatprep.subr.mxu0 0.0
    %709 = vmatpush1.xpose.msra.mxu0 0.0
    %710 = vmatprep.subr.mxu0 0.0
    %711 = vmatpush1.xpose.msra.mxu0 0.0
    %712 = vmatprep.subr.mxu0 0.0
    %713 = vmatpush1.xpose.msra.mxu0 0.0
    %714 = vmatprep.subr.mxu0 0.0
    %715 = vmatpush1.xpose.msra.mxu0 0.0
    %716 = vmatprep.subr.mxu0 0.0
    %717 = vmatpush1.xpose.msra.mxu0 0.0
    %718 = vmatprep.subr.mxu0 0.0
    %719 = vmatpush1.xpose.msra.mxu0 0.0
    %720 = vmatprep.subr.mxu0 0.0
    %721 = vmatpush1.xpose.msra.mxu0 0.0
    %722 = vmatprep.subr.mxu0 0.0
    %723 = vmatpush1.xpose.msra.mxu0 0.0
    %724 = vmatprep.subr.mxu0 0.0
    %725 = vmatpush1.xpose.msra.mxu0 0.0
    %726 = vmatprep.subr.mxu0 0.0
    %727 = vmatpush1.xpose.msra.mxu0 0.0
    %728 = vmatprep.subr.mxu0 0.0
    %729 = vmatpush1.xpose.msra.mxu0 0.0
    %730 = vmatprep.subr.mxu0 0.0
    %731 = vmatpush1.xpose.msra.mxu0 0.0
    %732 = vmatprep.subr.mxu0 0.0
    %733 = vmatpush1.xpose.msra.mxu0 0.0
    %734 = vmatprep.subr.mxu0 0.0
    %735 = vmatpush1.xpose.msra.mxu0 0.0
    %736 = vmatprep.subr.mxu0 0.0
    %737 = vmatpush1.xpose.msra.mxu0 0.0
    %738 = vmatprep.subr.mxu0 0.0
    %739 = vmatpush1.xpose.msra.mxu0 0.0
    %740 = vmatprep.subr.mxu0 0.0
    %741 = vmatpush1.xpose.msra.mxu0 0.0
    %742 = vmatprep.subr.mxu0 0.0
    %743 = vmatpush1.xpose.msra.mxu0 0.0
    %744 = vmatprep.subr.mxu0 0.0
    %745 = vmatpush1.xpose.msra.mxu0 0.0
    %746 = vmatprep.mubr.f32.mxu0 0.0
    %747 = vmatmul.mubr.f32.gmra.mrb[0].mxu0 %v677
    %v748 = vpop.f32.mrb[0].mxu0
    %v749 = vadd.f32 0.0, %v748
    %v750 = vpop.f32.mrb[0].mxu0
    %751 = vdwg.mxu0
    %v752 = vsel %vm103, %v226, 0
    %v755 = vsel %vm103, %v95, 0
    %757 = vmatprep.subr.mxu0 0.0
    %758 = vmatpush1.xpose.msra.mxu0 %v755
    %759 = vmatprep.subr.mxu0 0.0
    %760 = vmatpush1.xpose.msra.mxu0 0.0
    %761 = vmatprep.subr.mxu0 0.0
    %762 = vmatpush1.xpose.msra.mxu0 0.0
    %763 = vmatprep.subr.mxu0 0.0
    %764 = vmatpush1.xpose.msra.mxu0 0.0
    %765 = vmatprep.subr.mxu0 0.0
    %766 = vmatpush1.xpose.msra.mxu0 0.0
    %767 = vmatprep.subr.mxu0 0.0
    %768 = vmatpush1.xpose.msra.mxu0 0.0
    %769 = vmatprep.subr.mxu0 0.0
    %770 = vmatpush1.xpose.msra.mxu0 0.0
    %771 = vmatprep.subr.mxu0 0.0
    %772 = vmatpush1.xpose.msra.mxu0 0.0
    %773 = vmatprep.subr.mxu0 0.0
    %774 = vmatpush1.xpose.msra.mxu0 0.0
    %775 = vmatprep.subr.mxu0 0.0
    %776 = vmatpush1.xpose.msra.mxu0 0.0
    %777 = vmatprep.subr.mxu0 0.0
    %778 = vmatpush1.xpose.msra.mxu0 0.0
    %779 = vmatprep.subr.mxu0 0.0
    %780 = vmatpush1.xpose.msra.mxu0 0.0
    %781 = vmatprep.subr.mxu0 0.0
    %782 = vmatpush1.xpose.msra.mxu0 0.0
    %783 = vmatprep.subr.mxu0 0.0
    %784 = vmatpush1.xpose.msra.mxu0 0.0
    %785 = vmatprep.subr.mxu0 0.0
    %786 = vmatpush1.xpose.msra.mxu0 0.0
    %787 = vmatprep.subr.mxu0 0.0
    %788 = vmatpush1.xpose.msra.mxu0 0.0
    %789 = vmatprep.subr.mxu0 0.0
    %790 = vmatpush1.xpose.msra.mxu0 0.0
    %791 = vmatprep.subr.mxu0 0.0
    %792 = vmatpush1.xpose.msra.mxu0 0.0
    %793 = vmatprep.subr.mxu0 0.0
    %794 = vmatpush1.xpose.msra.mxu0 0.0
    %795 = vmatprep.subr.mxu0 0.0
    %796 = vmatpush1.xpose.msra.mxu0 0.0
    %797 = vmatprep.subr.mxu0 0.0
    %798 = vmatpush1.xpose.msra.mxu0 0.0
    %799 = vmatprep.subr.mxu0 0.0
    %800 = vmatpush1.xpose.msra.mxu0 0.0
    %801 = vmatprep.subr.mxu0 0.0
    %802 = vmatpush1.xpose.msra.mxu0 0.0
    %803 = vmatprep.subr.mxu0 0.0
    %804 = vmatpush1.xpose.msra.mxu0 0.0
    %805 = vmatprep.subr.mxu0 0.0
    %806 = vmatpush1.xpose.msra.mxu0 0.0
    %807 = vmatprep.subr.mxu0 0.0
    %808 = vmatpush1.xpose.msra.mxu0 0.0
    %809 = vmatprep.subr.mxu0 0.0
    %810 = vmatpush1.xpose.msra.mxu0 0.0
    %811 = vmatprep.subr.mxu0 0.0
    %812 = vmatpush1.xpose.msra.mxu0 0.0
    %813 = vmatprep.subr.mxu0 0.0
    %814 = vmatpush1.xpose.msra.mxu0 0.0
    %815 = vmatprep.subr.mxu0 0.0
    %816 = vmatpush1.xpose.msra.mxu0 0.0
    %817 = vmatprep.subr.mxu0 0.0
    %818 = vmatpush1.xpose.msra.mxu0 0.0
    %819 = vmatprep.subr.mxu0 0.0
    %820 = vmatpush1.xpose.msra.mxu0 0.0
    %821 = vmatprep.mubr.f32.mxu0 0.0
    %822 = vmatmul.mubr.f32.gmra.mrb[0].mxu0 %v752
    %v823 = vpop.f32.mrb[0].mxu0
    %v824 = vadd.f32 0.0, %v823
    %v825 = vpop.f32.mrb[0].mxu0
    %826 = vdwg.mxu0
    %v827 = vxor.u32 %v299, 2147483648
    %v828 = vxor.u32 %v374, 2147483648
    %v829 = vxor.u32 %v449, 2147483648
    %v830 = vxor.u32 %v524, 2147483648
    %v831 = vxor.u32 %v599, 2147483648
    %v832 = vxor.u32 %v674, 2147483648
    %v833 = vxor.u32 %v749, 2147483648
    %v834 = vxor.u32 %v824, 2147483648
    %v835 = vmul.f32 %v827, 1.442695
    %v836 = vpow.pop %v835
    %v837 = vmul.f32 %v828, 1.442695
    %v838 = vpow.pop %v837
    %v839 = vmul.f32 %v829, 1.442695
    %v840 = vpow.pop %v839
    %v841 = vmul.f32 %v830, 1.442695
    %v842 = vpow.pop %v841
    %v843 = vmul.f32 %v831, 1.442695
    %v844 = vpow.pop %v843
    %v845 = vmul.f32 %v832, 1.442695
    %v846 = vpow.pop %v845
    %v847 = vmul.f32 %v833, 1.442695
    %v848 = vpow.pop %v847
    %v849 = vmul.f32 %v834, 1.442695
    %v850 = vpow.pop %v849
    %v851 = vadd.f32 %v836, 1.0
    %v852 = vadd.f32 %v838, 1.0
    %v853 = vadd.f32 %v840, 1.0
    %v854 = vadd.f32 %v842, 1.0
    %v855 = vadd.f32 %v844, 1.0
    %v856 = vadd.f32 %v846, 1.0
    %v857 = vadd.f32 %v848, 1.0
    %v858 = vadd.f32 %v850, 1.0
    %v859 = vrcp.pop %v851
    %v860 = vmul.f32 1.0, %v859
    %v861 = vrcp.pop %v852
    %v862 = vmul.f32 1.0, %v861
    %v863 = vrcp.pop %v853
    %v864 = vmul.f32 1.0, %v863
    %v865 = vrcp.pop %v854
    %v866 = vmul.f32 1.0, %v865
    %v867 = vrcp.pop %v855
    %v868 = vmul.f32 1.0, %v867
    %v869 = vrcp.pop %v856
    %v870 = vmul.f32 1.0, %v869
    %v871 = vrcp.pop %v857
    %v872 = vmul.f32 1.0, %v871
    %v873 = vrcp.pop %v858
    %v874 = vmul.f32 1.0, %v873
    %v883 = vrot.slane %v862, 7
    %vm884 = vcmask 1041409
    %v885 = vsel %vm884, %v883, %v860
    %v886 = vrot.slane %v864, 6
    %vm887 = vcmask 1042434
    %v888 = vsel %vm887, %v886, %v885
    %v889 = vrot.slane %v866, 5
    %vm890 = vcmask 1043459
    %v891 = vsel %vm890, %v889, %v888
    %v892 = vrot.slane %v868, 4
    %vm893 = vcmask 1044484
    %v894 = vsel %vm893, %v892, %v891
    %v895 = vrot.slane %v870, 3
    %vm896 = vcmask 1045509
    %v897 = vsel %vm896, %v895, %v894
    %v898 = vrot.slane %v872, 2
    %vm899 = vcmask 1046534
    %v900 = vsel %vm899, %v898, %v897
    %v901 = vrot.slane %v874, 1
    %vm902 = vcmask 1047559
    %v903 = vsel %vm902, %v901, %v900
    %v905 = vsel %vm97, %v903, 0.0
    %v907 = vcombine.high %v905, %v905
    %v909 = vunpack.c.l.s4 1966171168
    %v910 = vunpack.c.0.s8 %v909
    %v911 = vlaneseq
    %v912 = vshrl.u32 %v911, 7
    %v913 = vsub.s32 %v910, %v912
    %v914 = vrot.slane %v905, %v913
    %v916 = vunpack.c.l.s4 1966171168
    %v917 = vunpack.c.0.s8 %v916
    %v918 = vlaneseq
    %v919 = vshrl.u32 %v918, 7
    %v920 = vsub.s32 %v917, %v919
    %v921 = vrot.slane %v907, %v920
    %v922 = vcombine.high %v914, %v914
    %v923 = vcombine.high %v921, %v921
    %v925 = vunpack.c.l.s4 1966171168
    %v926 = vunpack.c.0.s8 %v925
    %v927 = vlaneseq
    %v928 = vshrl.u32 %v927, 7
    %v929 = vsub.s32 %v926, %v928
    %v930 = vrot.slane %v914, %v929
    %v932 = vunpack.c.l.s4 1966171168
    %v933 = vunpack.c.0.s8 %v932
    %v934 = vlaneseq
    %v935 = vshrl.u32 %v934, 7
    %v936 = vsub.s32 %v933, %v935
    %v937 = vrot.slane %v921, %v936
    %v939 = vunpack.c.l.s4 1966171168
    %v940 = vunpack.c.0.s8 %v939
    %v941 = vlaneseq
    %v942 = vshrl.u32 %v941, 7
    %v943 = vsub.s32 %v940, %v942
    %v944 = vrot.slane %v922, %v943
    %v946 = vunpack.c.l.s4 1966171168
    %v947 = vunpack.c.0.s8 %v946
    %v948 = vlaneseq
    %v949 = vshrl.u32 %v948, 7
    %v950 = vsub.s32 %v947, %v949
    %v951 = vrot.slane %v923, %v950
    %v952 = vcombine.high %v930, %v930
    %v953 = vcombine.high %v937, %v937
    %v954 = vcombine.high %v944, %v944
    %v955 = vcombine.high %v951, %v951
    %vm956 = vcmask 64512
    %v957 = vsel %vm956, %v930, 0
    %959 = vmatprep.subr.mxu0 0.0
    %960 = vmatpush1.msra.mxu0 %v88
    %961 = vmatprep.subr.mxu0 0.0
    %962 = vmatpush1.msra.mxu0 0.0
    %963 = vmatprep.subr.mxu0 0.0
    %964 = vmatpush1.msra.mxu0 0.0
    %965 = vmatprep.subr.mxu0 0.0
    %966 = vmatpush1.msra.mxu0 0.0
    %967 = vmatprep.subr.mxu0 0.0
    %968 = vmatpush1.msra.mxu0 0.0
    %969 = vmatprep.subr.mxu0 0.0
    %970 = vmatpush1.msra.mxu0 0.0
    %971 = vmatprep.subr.mxu0 0.0
    %972 = vmatpush1.msra.mxu0 0.0
    %973 = vmatprep.subr.mxu0 0.0
    %974 = vmatpush1.msra.mxu0 0.0
    %975 = vmatprep.subr.mxu0 0.0
    %976 = vmatpush1.msra.mxu0 0.0
    %977 = vmatprep.subr.mxu0 0.0
    %978 = vmatpush1.msra.mxu0 0.0
    %979 = vmatprep.subr.mxu0 0.0
    %980 = vmatpush1.msra.mxu0 0.0
    %981 = vmatprep.subr.mxu0 0.0
    %982 = vmatpush1.msra.mxu0 0.0
    %983 = vmatprep.subr.mxu0 0.0
    %984 = vmatpush1.msra.mxu0 0.0
    %985 = vmatprep.subr.mxu0 0.0
    %986 = vmatpush1.msra.mxu0 0.0
    %987 = vmatprep.subr.mxu0 0.0
    %988 = vmatpush1.msra.mxu0 0.0
    %989 = vmatprep.subr.mxu0 0.0
    %990 = vmatpush1.msra.mxu0 0.0
    %991 = vmatprep.subr.mxu0 0.0
    %992 = vmatpush1.msra.mxu0 0.0
    %993 = vmatprep.subr.mxu0 0.0
    %994 = vmatpush1.msra.mxu0 0.0
    %995 = vmatprep.subr.mxu0 0.0
    %996 = vmatpush1.msra.mxu0 0.0
    %997 = vmatprep.subr.mxu0 0.0
    %998 = vmatpush1.msra.mxu0 0.0
    %999 = vmatprep.subr.mxu0 0.0
    %1000 = vmatpush1.msra.mxu0 0.0
    %1001 = vmatprep.subr.mxu0 0.0
    %1002 = vmatpush1.msra.mxu0 0.0
    %1003 = vmatprep.subr.mxu0 0.0
    %1004 = vmatpush1.msra.mxu0 0.0
    %1005 = vmatprep.subr.mxu0 0.0
    %1006 = vmatpush1.msra.mxu0 0.0
    %1007 = vmatprep.subr.mxu0 0.0
    %1008 = vmatpush1.msra.mxu0 0.0
    %1009 = vmatprep.subr.mxu0 0.0
    %1010 = vmatpush1.msra.mxu0 0.0
    %1011 = vmatprep.subr.mxu0 0.0
    %1012 = vmatpush1.msra.mxu0 0.0
    %1013 = vmatprep.subr.mxu0 0.0
    %1014 = vmatpush1.msra.mxu0 0.0
    %1015 = vmatprep.subr.mxu0 0.0
    %1016 = vmatpush1.msra.mxu0 0.0
    %1017 = vmatprep.subr.mxu0 0.0
    %1018 = vmatpush1.msra.mxu0 0.0
    %1019 = vmatprep.subr.mxu0 0.0
    %1020 = vmatpush1.msra.mxu0 0.0
    %1021 = vmatprep.subr.mxu0 0.0
    %1022 = vmatpush1.msra.mxu0 0.0
    %1023 = vmatprep.mubr.f32.mxu0 0.0
    %1024 = vmatmul.mubr.f32.gmra.mrb[0].mxu0 %v957
    %v1025 = vpop.f32.mrb[0].mxu0
    %v1026 = vadd.f32 0.0, %v1025
    %v1027 = vpop.f32.mrb[0].mxu0
    %1028 = vdwg.mxu0
    %v1029 = vsel %vm956, %v944, 0
    %1031 = vmatprep.subr.mxu0 0.0
    %1032 = vmatpush1.msra.mxu0 %v89
    %1033 = vmatprep.subr.mxu0 0.0
    %1034 = vmatpush1.msra.mxu0 0.0
    %1035 = vmatprep.subr.mxu0 0.0
    %1036 = vmatpush1.msra.mxu0 0.0
    %1037 = vmatprep.subr.mxu0 0.0
    %1038 = vmatpush1.msra.mxu0 0.0
    %1039 = vmatprep.subr.mxu0 0.0
    %1040 = vmatpush1.msra.mxu0 0.0
    %1041 = vmatprep.subr.mxu0 0.0
    %1042 = vmatpush1.msra.mxu0 0.0
    %1043 = vmatprep.subr.mxu0 0.0
    %1044 = vmatpush1.msra.mxu0 0.0
    %1045 = vmatprep.subr.mxu0 0.0
    %1046 = vmatpush1.msra.mxu0 0.0
    %1047 = vmatprep.subr.mxu0 0.0
    %1048 = vmatpush1.msra.mxu0 0.0
    %1049 = vmatprep.subr.mxu0 0.0
    %1050 = vmatpush1.msra.mxu0 0.0
    %1051 = vmatprep.subr.mxu0 0.0
    %1052 = vmatpush1.msra.mxu0 0.0
    %1053 = vmatprep.subr.mxu0 0.0
    %1054 = vmatpush1.msra.mxu0 0.0
    %1055 = vmatprep.subr.mxu0 0.0
    %1056 = vmatpush1.msra.mxu0 0.0
    %1057 = vmatprep.subr.mxu0 0.0
    %1058 = vmatpush1.msra.mxu0 0.0
    %1059 = vmatprep.subr.mxu0 0.0
    %1060 = vmatpush1.msra.mxu0 0.0
    %1061 = vmatprep.subr.mxu0 0.0
    %1062 = vmatpush1.msra.mxu0 0.0
    %1063 = vmatprep.subr.mxu0 0.0
    %1064 = vmatpush1.msra.mxu0 0.0
    %1065 = vmatprep.subr.mxu0 0.0
    %1066 = vmatpush1.msra.mxu0 0.0
    %1067 = vmatprep.subr.mxu0 0.0
    %1068 = vmatpush1.msra.mxu0 0.0
    %1069 = vmatprep.subr.mxu0 0.0
    %1070 = vmatpush1.msra.mxu0 0.0
    %1071 = vmatprep.subr.mxu0 0.0
    %1072 = vmatpush1.msra.mxu0 0.0
    %1073 = vmatprep.subr.mxu0 0.0
    %1074 = vmatpush1.msra.mxu0 0.0
    %1075 = vmatprep.subr.mxu0 0.0
    %1076 = vmatpush1.msra.mxu0 0.0
    %1077 = vmatprep.subr.mxu0 0.0
    %1078 = vmatpush1.msra.mxu0 0.0
    %1079 = vmatprep.subr.mxu0 0.0
    %1080 = vmatpush1.msra.mxu0 0.0
    %1081 = vmatprep.subr.mxu0 0.0
    %1082 = vmatpush1.msra.mxu0 0.0
    %1083 = vmatprep.subr.mxu0 0.0
    %1084 = vmatpush1.msra.mxu0 0.0
    %1085 = vmatprep.subr.mxu0 0.0
    %1086 = vmatpush1.msra.mxu0 0.0
    %1087 = vmatprep.subr.mxu0 0.0
    %1088 = vmatpush1.msra.mxu0 0.0
    %1089 = vmatprep.subr.mxu0 0.0
    %1090 = vmatpush1.msra.mxu0 0.0
    %1091 = vmatprep.subr.mxu0 0.0
    %1092 = vmatpush1.msra.mxu0 0.0
    %1093 = vmatprep.subr.mxu0 0.0
    %1094 = vmatpush1.msra.mxu0 0.0
    %1095 = vmatprep.mubr.f32.mxu0 0.0
    %1096 = vmatmul.mubr.f32.gmra.mrb[0].mxu0 %v1029
    %v1097 = vpop.f32.mrb[0].mxu0
    %v1098 = vadd.f32 0.0, %v1097
    %v1099 = vpop.f32.mrb[0].mxu0
    %1100 = vdwg.mxu0
    %v1101 = vsel %vm956, %v952, 0
    %1103 = vmatprep.subr.mxu0 0.0
    %1104 = vmatpush1.msra.mxu0 %v90
    %1105 = vmatprep.subr.mxu0 0.0
    %1106 = vmatpush1.msra.mxu0 0.0
    %1107 = vmatprep.subr.mxu0 0.0
    %1108 = vmatpush1.msra.mxu0 0.0
    %1109 = vmatprep.subr.mxu0 0.0
    %1110 = vmatpush1.msra.mxu0 0.0
    %1111 = vmatprep.subr.mxu0 0.0
    %1112 = vmatpush1.msra.mxu0 0.0
    %1113 = vmatprep.subr.mxu0 0.0
    %1114 = vmatpush1.msra.mxu0 0.0
    %1115 = vmatprep.subr.mxu0 0.0
    %1116 = vmatpush1.msra.mxu0 0.0
    %1117 = vmatprep.subr.mxu0 0.0
    %1118 = vmatpush1.msra.mxu0 0.0
    %1119 = vmatprep.subr.mxu0 0.0
    %1120 = vmatpush1.msra.mxu0 0.0
    %1121 = vmatprep.subr.mxu0 0.0
    %1122 = vmatpush1.msra.mxu0 0.0
    %1123 = vmatprep.subr.mxu0 0.0
    %1124 = vmatpush1.msra.mxu0 0.0
    %1125 = vmatprep.subr.mxu0 0.0
    %1126 = vmatpush1.msra.mxu0 0.0
    %1127 = vmatprep.subr.mxu0 0.0
    %1128 = vmatpush1.msra.mxu0 0.0
    %1129 = vmatprep.subr.mxu0 0.0
    %1130 = vmatpush1.msra.mxu0 0.0
    %1131 = vmatprep.subr.mxu0 0.0
    %1132 = vmatpush1.msra.mxu0 0.0
    %1133 = vmatprep.subr.mxu0 0.0
    %1134 = vmatpush1.msra.mxu0 0.0
    %1135 = vmatprep.subr.mxu0 0.0
    %1136 = vmatpush1.msra.mxu0 0.0
    %1137 = vmatprep.subr.mxu0 0.0
    %1138 = vmatpush1.msra.mxu0 0.0
    %1139 = vmatprep.subr.mxu0 0.0
    %1140 = vmatpush1.msra.mxu0 0.0
    %1141 = vmatprep.subr.mxu0 0.0
    %1142 = vmatpush1.msra.mxu0 0.0
    %1143 = vmatprep.subr.mxu0 0.0
    %1144 = vmatpush1.msra.mxu0 0.0
    %1145 = vmatprep.subr.mxu0 0.0
    %1146 = vmatpush1.msra.mxu0 0.0
    %1147 = vmatprep.subr.mxu0 0.0
    %1148 = vmatpush1.msra.mxu0 0.0
    %1149 = vmatprep.subr.mxu0 0.0
    %1150 = vmatpush1.msra.mxu0 0.0
    %1151 = vmatprep.subr.mxu0 0.0
    %1152 = vmatpush1.msra.mxu0 0.0
    %1153 = vmatprep.subr.mxu0 0.0
    %1154 = vmatpush1.msra.mxu0 0.0
    %1155 = vmatprep.subr.mxu0 0.0
    %1156 = vmatpush1.msra.mxu0 0.0
    %1157 = vmatprep.subr.mxu0 0.0
    %1158 = vmatpush1.msra.mxu0 0.0
    %1159 = vmatprep.subr.mxu0 0.0
    %1160 = vmatpush1.msra.mxu0 0.0
    %1161 = vmatprep.subr.mxu0 0.0
    %1162 = vmatpush1.msra.mxu0 0.0
    %1163 = vmatprep.subr.mxu0 0.0
    %1164 = vmatpush1.msra.mxu0 0.0
    %1165 = vmatprep.subr.mxu0 0.0
    %1166 = vmatpush1.msra.mxu0 0.0
    %1167 = vmatprep.mubr.f32.mxu0 0.0
    %1168 = vmatmul.mubr.f32.gmra.mrb[0].mxu0 %v1101
    %v1169 = vpop.f32.mrb[0].mxu0
    %v1170 = vadd.f32 0.0, %v1169
    %v1171 = vpop.f32.mrb[0].mxu0
    %1172 = vdwg.mxu0
    %v1173 = vsel %vm956, %v954, 0
    %1175 = vmatprep.subr.mxu0 0.0
    %1176 = vmatpush1.msra.mxu0 %v91
    %1177 = vmatprep.subr.mxu0 0.0
    %1178 = vmatpush1.msra.mxu0 0.0
    %1179 = vmatprep.subr.mxu0 0.0
    %1180 = vmatpush1.msra.mxu0 0.0
    %1181 = vmatprep.subr.mxu0 0.0
    %1182 = vmatpush1.msra.mxu0 0.0
    %1183 = vmatprep.subr.mxu0 0.0
    %1184 = vmatpush1.msra.mxu0 0.0
    %1185 = vmatprep.subr.mxu0 0.0
    %1186 = vmatpush1.msra.mxu0 0.0
    %1187 = vmatprep.subr.mxu0 0.0
    %1188 = vmatpush1.msra.mxu0 0.0
    %1189 = vmatprep.subr.mxu0 0.0
    %1190 = vmatpush1.msra.mxu0 0.0
    %1191 = vmatprep.subr.mxu0 0.0
    %1192 = vmatpush1.msra.mxu0 0.0
    %1193 = vmatprep.subr.mxu0 0.0
    %1194 = vmatpush1.msra.mxu0 0.0
    %1195 = vmatprep.subr.mxu0 0.0
    %1196 = vmatpush1.msra.mxu0 0.0
    %1197 = vmatprep.subr.mxu0 0.0
    %1198 = vmatpush1.msra.mxu0 0.0
    %1199 = vmatprep.subr.mxu0 0.0
    %1200 = vmatpush1.msra.mxu0 0.0
    %1201 = vmatprep.subr.mxu0 0.0
    %1202 = vmatpush1.msra.mxu0 0.0
    %1203 = vmatprep.subr.mxu0 0.0
    %1204 = vmatpush1.msra.mxu0 0.0
    %1205 = vmatprep.subr.mxu0 0.0
    %1206 = vmatpush1.msra.mxu0 0.0
    %1207 = vmatprep.subr.mxu0 0.0
    %1208 = vmatpush1.msra.mxu0 0.0
    %1209 = vmatprep.subr.mxu0 0.0
    %1210 = vmatpush1.msra.mxu0 0.0
    %1211 = vmatprep.subr.mxu0 0.0
    %1212 = vmatpush1.msra.mxu0 0.0
    %1213 = vmatprep.subr.mxu0 0.0
    %1214 = vmatpush1.msra.mxu0 0.0
    %1215 = vmatprep.subr.mxu0 0.0
    %1216 = vmatpush1.msra.mxu0 0.0
    %1217 = vmatprep.subr.mxu0 0.0
    %1218 = vmatpush1.msra.mxu0 0.0
    %1219 = vmatprep.subr.mxu0 0.0
    %1220 = vmatpush1.msra.mxu0 0.0
    %1221 = vmatprep.subr.mxu0 0.0
    %1222 = vmatpush1.msra.mxu0 0.0
    %1223 = vmatprep.subr.mxu0 0.0
    %1224 = vmatpush1.msra.mxu0 0.0
    %1225 = vmatprep.subr.mxu0 0.0
    %1226 = vmatpush1.msra.mxu0 0.0
    %1227 = vmatprep.subr.mxu0 0.0
    %1228 = vmatpush1.msra.mxu0 0.0
    %1229 = vmatprep.subr.mxu0 0.0
    %1230 = vmatpush1.msra.mxu0 0.0
    %1231 = vmatprep.subr.mxu0 0.0
    %1232 = vmatpush1.msra.mxu0 0.0
    %1233 = vmatprep.subr.mxu0 0.0
    %1234 = vmatpush1.msra.mxu0 0.0
    %1235 = vmatprep.subr.mxu0 0.0
    %1236 = vmatpush1.msra.mxu0 0.0
    %1237 = vmatprep.subr.mxu0 0.0
    %1238 = vmatpush1.msra.mxu0 0.0
    %1239 = vmatprep.mubr.f32.mxu0 0.0
    %1240 = vmatmul.mubr.f32.gmra.mrb[0].mxu0 %v1173
    %v1241 = vpop.f32.mrb[0].mxu0
    %v1242 = vadd.f32 0.0, %v1241
    %v1243 = vpop.f32.mrb[0].mxu0
    %1244 = vdwg.mxu0
    %v1245 = vsel %vm956, %v937, 0
    %1247 = vmatprep.subr.mxu0 0.0
    %1248 = vmatpush1.msra.mxu0 %v92
    %1249 = vmatprep.subr.mxu0 0.0
    %1250 = vmatpush1.msra.mxu0 0.0
    %1251 = vmatprep.subr.mxu0 0.0
    %1252 = vmatpush1.msra.mxu0 0.0
    %1253 = vmatprep.subr.mxu0 0.0
    %1254 = vmatpush1.msra.mxu0 0.0
    %1255 = vmatprep.subr.mxu0 0.0
    %1256 = vmatpush1.msra.mxu0 0.0
    %1257 = vmatprep.subr.mxu0 0.0
    %1258 = vmatpush1.msra.mxu0 0.0
    %1259 = vmatprep.subr.mxu0 0.0
    %1260 = vmatpush1.msra.mxu0 0.0
    %1261 = vmatprep.subr.mxu0 0.0
    %1262 = vmatpush1.msra.mxu0 0.0
    %1263 = vmatprep.subr.mxu0 0.0
    %1264 = vmatpush1.msra.mxu0 0.0
    %1265 = vmatprep.subr.mxu0 0.0
    %1266 = vmatpush1.msra.mxu0 0.0
    %1267 = vmatprep.subr.mxu0 0.0
    %1268 = vmatpush1.msra.mxu0 0.0
    %1269 = vmatprep.subr.mxu0 0.0
    %1270 = vmatpush1.msra.mxu0 0.0
    %1271 = vmatprep.subr.mxu0 0.0
    %1272 = vmatpush1.msra.mxu0 0.0
    %1273 = vmatprep.subr.mxu0 0.0
    %1274 = vmatpush1.msra.mxu0 0.0
    %1275 = vmatprep.subr.mxu0 0.0
    %1276 = vmatpush1.msra.mxu0 0.0
    %1277 = vmatprep.subr.mxu0 0.0
    %1278 = vmatpush1.msra.mxu0 0.0
    %1279 = vmatprep.subr.mxu0 0.0
    %1280 = vmatpush1.msra.mxu0 0.0
    %1281 = vmatprep.subr.mxu0 0.0
    %1282 = vmatpush1.msra.mxu0 0.0
    %1283 = vmatprep.subr.mxu0 0.0
    %1284 = vmatpush1.msra.mxu0 0.0
    %1285 = vmatprep.subr.mxu0 0.0
    %1286 = vmatpush1.msra.mxu0 0.0
    %1287 = vmatprep.subr.mxu0 0.0
    %1288 = vmatpush1.msra.mxu0 0.0
    %1289 = vmatprep.subr.mxu0 0.0
    %1290 = vmatpush1.msra.mxu0 0.0
    %1291 = vmatprep.subr.mxu0 0.0
    %1292 = vmatpush1.msra.mxu0 0.0
    %1293 = vmatprep.subr.mxu0 0.0
    %1294 = vmatpush1.msra.mxu0 0.0
    %1295 = vmatprep.subr.mxu0 0.0
    %1296 = vmatpush1.msra.mxu0 0.0
    %1297 = vmatprep.subr.mxu0 0.0
    %1298 = vmatpush1.msra.mxu0 0.0
    %1299 = vmatprep.subr.mxu0 0.0
    %1300 = vmatpush1.msra.mxu0 0.0
    %1301 = vmatprep.subr.mxu0 0.0
    %1302 = vmatpush1.msra.mxu0 0.0
    %1303 = vmatprep.subr.mxu0 0.0
    %1304 = vmatpush1.msra.mxu0 0.0
    %1305 = vmatprep.subr.mxu0 0.0
    %1306 = vmatpush1.msra.mxu0 0.0
    %1307 = vmatprep.subr.mxu0 0.0
    %1308 = vmatpush1.msra.mxu0 0.0
    %1309 = vmatprep.subr.mxu0 0.0
    %1310 = vmatpush1.msra.mxu0 0.0
    %1311 = vmatprep.mubr.f32.mxu0 0.0
    %1312 = vmatmul.mubr.f32.gmra.mrb[0].mxu0 %v1245
    %v1313 = vpop.f32.mrb[0].mxu0
    %v1314 = vadd.f32 0.0, %v1313
    %v1315 = vpop.f32.mrb[0].mxu0
    %1316 = vdwg.mxu0
    %v1317 = vsel %vm956, %v951, 0
    %1319 = vmatprep.subr.mxu0 0.0
    %1320 = vmatpush1.msra.mxu0 %v93
    %1321 = vmatprep.subr.mxu0 0.0
    %1322 = vmatpush1.msra.mxu0 0.0
    %1323 = vmatprep.subr.mxu0 0.0
    %1324 = vmatpush1.msra.mxu0 0.0
    %1325 = vmatprep.subr.mxu0 0.0
    %1326 = vmatpush1.msra.mxu0 0.0
    %1327 = vmatprep.subr.mxu0 0.0
    %1328 = vmatpush1.msra.mxu0 0.0
    %1329 = vmatprep.subr.mxu0 0.0
    %1330 = vmatpush1.msra.mxu0 0.0
    %1331 = vmatprep.subr.mxu0 0.0
    %1332 = vmatpush1.msra.mxu0 0.0
    %1333 = vmatprep.subr.mxu0 0.0
    %1334 = vmatpush1.msra.mxu0 0.0
    %1335 = vmatprep.subr.mxu0 0.0
    %1336 = vmatpush1.msra.mxu0 0.0
    %1337 = vmatprep.subr.mxu0 0.0
    %1338 = vmatpush1.msra.mxu0 0.0
    %1339 = vmatprep.subr.mxu0 0.0
    %1340 = vmatpush1.msra.mxu0 0.0
    %1341 = vmatprep.subr.mxu0 0.0
    %1342 = vmatpush1.msra.mxu0 0.0
    %1343 = vmatprep.subr.mxu0 0.0
    %1344 = vmatpush1.msra.mxu0 0.0
    %1345 = vmatprep.subr.mxu0 0.0
    %1346 = vmatpush1.msra.mxu0 0.0
    %1347 = vmatprep.subr.mxu0 0.0
    %1348 = vmatpush1.msra.mxu0 0.0
    %1349 = vmatprep.subr.mxu0 0.0
    %1350 = vmatpush1.msra.mxu0 0.0
    %1351 = vmatprep.subr.mxu0 0.0
    %1352 = vmatpush1.msra.mxu0 0.0
    %1353 = vmatprep.subr.mxu0 0.0
    %1354 = vmatpush1.msra.mxu0 0.0
    %1355 = vmatprep.subr.mxu0 0.0
    %1356 = vmatpush1.msra.mxu0 0.0
    %1357 = vmatprep.subr.mxu0 0.0
    %1358 = vmatpush1.msra.mxu0 0.0
    %1359 = vmatprep.subr.mxu0 0.0
    %1360 = vmatpush1.msra.mxu0 0.0
    %1361 = vmatprep.subr.mxu0 0.0
    %1362 = vmatpush1.msra.mxu0 0.0
    %1363 = vmatprep.subr.mxu0 0.0
    %1364 = vmatpush1.msra.mxu0 0.0
    %1365 = vmatprep.subr.mxu0 0.0
    %1366 = vmatpush1.msra.mxu0 0.0
    %1367 = vmatprep.subr.mxu0 0.0
    %1368 = vmatpush1.msra.mxu0 0.0
    %1369 = vmatprep.subr.mxu0 0.0
    %1370 = vmatpush1.msra.mxu0 0.0
    %1371 = vmatprep.subr.mxu0 0.0
    %1372 = vmatpush1.msra.mxu0 0.0
    %1373 = vmatprep.subr.mxu0 0.0
    %1374 = vmatpush1.msra.mxu0 0.0
    %1375 = vmatprep.subr.mxu0 0.0
    %1376 = vmatpush1.msra.mxu0 0.0
    %1377 = vmatprep.subr.mxu0 0.0
    %1378 = vmatpush1.msra.mxu0 0.0
    %1379 = vmatprep.subr.mxu0 0.0
    %1380 = vmatpush1.msra.mxu0 0.0
    %1381 = vmatprep.subr.mxu0 0.0
    %1382 = vmatpush1.msra.mxu0 0.0
    %1383 = vmatprep.mubr.f32.mxu0 0.0
    %1384 = vmatmul.mubr.f32.gmra.mrb[0].mxu0 %v1317
    %v1385 = vpop.f32.mrb[0].mxu0
    %v1386 = vadd.f32 0.0, %v1385
    %v1387 = vpop.f32.mrb[0].mxu0
    %1388 = vdwg.mxu0
    %v1389 = vsel %vm956, %v953, 0
    %1391 = vmatprep.subr.mxu0 0.0
    %1392 = vmatpush1.msra.mxu0 %v94
    %1393 = vmatprep.subr.mxu0 0.0
    %1394 = vmatpush1.msra.mxu0 0.0
    %1395 = vmatprep.subr.mxu0 0.0
    %1396 = vmatpush1.msra.mxu0 0.0
    %1397 = vmatprep.subr.mxu0 0.0
    %1398 = vmatpush1.msra.mxu0 0.0
    %1399 = vmatprep.subr.mxu0 0.0
    %1400 = vmatpush1.msra.mxu0 0.0
    %1401 = vmatprep.subr.mxu0 0.0
    %1402 = vmatpush1.msra.mxu0 0.0
    %1403 = vmatprep.subr.mxu0 0.0
    %1404 = vmatpush1.msra.mxu0 0.0
    %1405 = vmatprep.subr.mxu0 0.0
    %1406 = vmatpush1.msra.mxu0 0.0
    %1407 = vmatprep.subr.mxu0 0.0
    %1408 = vmatpush1.msra.mxu0 0.0
    %1409 = vmatprep.subr.mxu0 0.0
    %1410 = vmatpush1.msra.mxu0 0.0
    %1411 = vmatprep.subr.mxu0 0.0
    %1412 = vmatpush1.msra.mxu0 0.0
    %1413 = vmatprep.subr.mxu0 0.0
    %1414 = vmatpush1.msra.mxu0 0.0
    %1415 = vmatprep.subr.mxu0 0.0
    %1416 = vmatpush1.msra.mxu0 0.0
    %1417 = vmatprep.subr.mxu0 0.0
    %1418 = vmatpush1.msra.mxu0 0.0
    %1419 = vmatprep.subr.mxu0 0.0
    %1420 = vmatpush1.msra.mxu0 0.0
    %1421 = vmatprep.subr.mxu0 0.0
    %1422 = vmatpush1.msra.mxu0 0.0
    %1423 = vmatprep.subr.mxu0 0.0
    %1424 = vmatpush1.msra.mxu0 0.0
    %1425 = vmatprep.subr.mxu0 0.0
    %1426 = vmatpush1.msra.mxu0 0.0
    %1427 = vmatprep.subr.mxu0 0.0
    %1428 = vmatpush1.msra.mxu0 0.0
    %1429 = vmatprep.subr.mxu0 0.0
    %1430 = vmatpush1.msra.mxu0 0.0
    %1431 = vmatprep.subr.mxu0 0.0
    %1432 = vmatpush1.msra.mxu0 0.0
    %1433 = vmatprep.subr.mxu0 0.0
    %1434 = vmatpush1.msra.mxu0 0.0
    %1435 = vmatprep.subr.mxu0 0.0
    %1436 = vmatpush1.msra.mxu0 0.0
    %1437 = vmatprep.subr.mxu0 0.0
    %1438 = vmatpush1.msra.mxu0 0.0
    %1439 = vmatprep.subr.mxu0 0.0
    %1440 = vmatpush1.msra.mxu0 0.0
    %1441 = vmatprep.subr.mxu0 0.0
    %1442 = vmatpush1.msra.mxu0 0.0
    %1443 = vmatprep.subr.mxu0 0.0
    %1444 = vmatpush1.msra.mxu0 0.0
    %1445 = vmatprep.subr.mxu0 0.0
    %1446 = vmatpush1.msra.mxu0 0.0
    %1447 = vmatprep.subr.mxu0 0.0
    %1448 = vmatpush1.msra.mxu0 0.0
    %1449 = vmatprep.subr.mxu0 0.0
    %1450 = vmatpush1.msra.mxu0 0.0
    %1451 = vmatprep.subr.mxu0 0.0
    %1452 = vmatpush1.msra.mxu0 0.0
    %1453 = vmatprep.subr.mxu0 0.0
    %1454 = vmatpush1.msra.mxu0 0.0
    %1455 = vmatprep.mubr.f32.mxu0 0.0
    %1456 = vmatmul.mubr.f32.gmra.mrb[0].mxu0 %v1389
    %v1457 = vpop.f32.mrb[0].mxu0
    %v1458 = vadd.f32 0.0, %v1457
    %v1459 = vpop.f32.mrb[0].mxu0
    %1460 = vdwg.mxu0
    %v1461 = vsel %vm956, %v955, 0
    %1463 = vmatprep.subr.mxu0 0.0
    %1464 = vmatpush1.msra.mxu0 %v95
    %1465 = vmatprep.subr.mxu0 0.0
    %1466 = vmatpush1.msra.mxu0 0.0
    %1467 = vmatprep.subr.mxu0 0.0
    %1468 = vmatpush1.msra.mxu0 0.0
    %1469 = vmatprep.subr.mxu0 0.0
    %1470 = vmatpush1.msra.mxu0 0.0
    %1471 = vmatprep.subr.mxu0 0.0
    %1472 = vmatpush1.msra.mxu0 0.0
    %1473 = vmatprep.subr.mxu0 0.0
    %1474 = vmatpush1.msra.mxu0 0.0
    %1475 = vmatprep.subr.mxu0 0.0
    %1476 = vmatpush1.msra.mxu0 0.0
    %1477 = vmatprep.subr.mxu0 0.0
    %1478 = vmatpush1.msra.mxu0 0.0
    %1479 = vmatprep.subr.mxu0 0.0
    %1480 = vmatpush1.msra.mxu0 0.0
    %1481 = vmatprep.subr.mxu0 0.0
    %1482 = vmatpush1.msra.mxu0 0.0
    %1483 = vmatprep.subr.mxu0 0.0
    %1484 = vmatpush1.msra.mxu0 0.0
    %1485 = vmatprep.subr.mxu0 0.0
    %1486 = vmatpush1.msra.mxu0 0.0
    %1487 = vmatprep.subr.mxu0 0.0
    %1488 = vmatpush1.msra.mxu0 0.0
    %1489 = vmatprep.subr.mxu0 0.0
    %1490 = vmatpush1.msra.mxu0 0.0
    %1491 = vmatprep.subr.mxu0 0.0
    %1492 = vmatpush1.msra.mxu0 0.0
    %1493 = vmatprep.subr.mxu0 0.0
    %1494 = vmatpush1.msra.mxu0 0.0
    %1495 = vmatprep.subr.mxu0 0.0
    %1496 = vmatpush1.msra.mxu0 0.0
    %1497 = vmatprep.subr.mxu0 0.0
    %1498 = vmatpush1.msra.mxu0 0.0
    %1499 = vmatprep.subr.mxu0 0.0
    %1500 = vmatpush1.msra.mxu0 0.0
    %1501 = vmatprep.subr.mxu0 0.0
    %1502 = vmatpush1.msra.mxu0 0.0
    %1503 = vmatprep.subr.mxu0 0.0
    %1504 = vmatpush1.msra.mxu0 0.0
    %1505 = vmatprep.subr.mxu0 0.0
    %1506 = vmatpush1.msra.mxu0 0.0
    %1507 = vmatprep.subr.mxu0 0.0
    %1508 = vmatpush1.msra.mxu0 0.0
    %1509 = vmatprep.subr.mxu0 0.0
    %1510 = vmatpush1.msra.mxu0 0.0
    %1511 = vmatprep.subr.mxu0 0.0
    %1512 = vmatpush1.msra.mxu0 0.0
    %1513 = vmatprep.subr.mxu0 0.0
    %1514 = vmatpush1.msra.mxu0 0.0
    %1515 = vmatprep.subr.mxu0 0.0
    %1516 = vmatpush1.msra.mxu0 0.0
    %1517 = vmatprep.subr.mxu0 0.0
    %1518 = vmatpush1.msra.mxu0 0.0
    %1519 = vmatprep.subr.mxu0 0.0
    %1520 = vmatpush1.msra.mxu0 0.0
    %1521 = vmatprep.subr.mxu0 0.0
    %1522 = vmatpush1.msra.mxu0 0.0
    %1523 = vmatprep.subr.mxu0 0.0
    %1524 = vmatpush1.msra.mxu0 0.0
    %1525 = vmatprep.subr.mxu0 0.0
    %1526 = vmatpush1.msra.mxu0 0.0
    %1527 = vmatprep.mubr.f32.mxu0 0.0
    %1528 = vmatmul.mubr.f32.gmra.mrb[0].mxu0 %v1461
    %v1529 = vpop.f32.mrb[0].mxu0
    %v1530 = vadd.f32 0.0, %v1529
    %v1531 = vpop.f32.mrb[0].mxu0
    %1532 = vdwg.mxu0
    %1533 = vst.msk [vmem:[#allocation12] sm:$0xff] %vm956, %v905
    %v1534 = vld [vmem:[#allocation10] sm:$0xff]
    %v1535 = vld [vmem:[#allocation10 + $0x8] sm:$0xff]
    %v1536 = vld [vmem:[#allocation10 + $0x10] sm:$0xff]
    %v1537 = vld [vmem:[#allocation10 + $0x18] sm:$0xff]
    %v1546 = vrot.slane %v1098, 7
    %v1547 = vsel %vm884, %v1546, %v1026
    %v1548 = vrot.slane %v1170, 6
    %v1549 = vsel %vm887, %v1548, %v1547
    %v1550 = vrot.slane %v1242, 5
    %v1551 = vsel %vm890, %v1550, %v1549
    %v1552 = vrot.slane %v1314, 4
    %v1553 = vsel %vm893, %v1552, %v1551
    %v1554 = vrot.slane %v1386, 3
    %v1555 = vsel %vm896, %v1554, %v1553
    %v1556 = vrot.slane %v1458, 2
    %v1557 = vsel %vm899, %v1556, %v1555
    %v1558 = vrot.slane %v1530, 1
    %v1559 = vsel %vm902, %v1558, %v1557
    %1560 = vrot.lane.b32.xlu0 %v174, 96
    %v1561 = vpop.permute.xlu0 %1560
    %v1563 = vsel %vm103, %v1559, 0
    %1565 = vmatprep.subr.mxu0 0.0
    %1566 = vmatpush1.msra.mxu0 %v1534
    %1567 = vmatprep.subr.mxu0 0.0
    %1568 = vmatpush1.msra.mxu0 %v1535
    %1569 = vmatprep.subr.mxu0 0.0
    %1570 = vmatpush1.msra.mxu0 %v1536
    %1571 = vmatprep.subr.mxu0 0.0
    %1572 = vmatpush1.msra.mxu0 %v1537
    %1573 = vmatprep.subr.mxu0 0.0
    %1574 = vmatpush1.msra.mxu0 0.0
    %1575 = vmatprep.subr.mxu0 0.0
    %1576 = vmatpush1.msra.mxu0 0.0
    %1577 = vmatprep.subr.mxu0 0.0
    %1578 = vmatpush1.msra.mxu0 0.0
    %1579 = vmatprep.subr.mxu0 0.0
    %1580 = vmatpush1.msra.mxu0 0.0
    %1581 = vmatprep.subr.mxu0 0.0
    %1582 = vmatpush1.msra.mxu0 0.0
    %1583 = vmatprep.subr.mxu0 0.0
    %1584 = vmatpush1.msra.mxu0 0.0
    %1585 = vmatprep.subr.mxu0 0.0
    %1586 = vmatpush1.msra.mxu0 0.0
    %1587 = vmatprep.subr.mxu0 0.0
    %1588 = vmatpush1.msra.mxu0 0.0
    %1589 = vmatprep.subr.mxu0 0.0
    %1590 = vmatpush1.msra.mxu0 0.0
    %1591 = vmatprep.subr.mxu0 0.0
    %1592 = vmatpush1.msra.mxu0 0.0
    %1593 = vmatprep.subr.mxu0 0.0
    %1594 = vmatpush1.msra.mxu0 0.0
    %1595 = vmatprep.subr.mxu0 0.0
    %1596 = vmatpush1.msra.mxu0 0.0
    %1597 = vmatprep.subr.mxu0 0.0
    %1598 = vmatpush1.msra.mxu0 0.0
    %1599 = vmatprep.subr.mxu0 0.0
    %1600 = vmatpush1.msra.mxu0 0.0
    %1601 = vmatprep.subr.mxu0 0.0
    %1602 = vmatpush1.msra.mxu0 0.0
    %1603 = vmatprep.subr.mxu0 0.0
    %1604 = vmatpush1.msra.mxu0 0.0
    %1605 = vmatprep.subr.mxu0 0.0
    %1606 = vmatpush1.msra.mxu0 0.0
    %1607 = vmatprep.subr.mxu0 0.0
    %1608 = vmatpush1.msra.mxu0 0.0
    %1609 = vmatprep.subr.mxu0 0.0
    %1610 = vmatpush1.msra.mxu0 0.0
    %1611 = vmatprep.subr.mxu0 0.0
    %1612 = vmatpush1.msra.mxu0 0.0
    %1613 = vmatprep.subr.mxu0 0.0
    %1614 = vmatpush1.msra.mxu0 0.0
    %1615 = vmatprep.subr.mxu0 0.0
    %1616 = vmatpush1.msra.mxu0 0.0
    %1617 = vmatprep.subr.mxu0 0.0
    %1618 = vmatpush1.msra.mxu0 0.0
    %1619 = vmatprep.subr.mxu0 0.0
    %1620 = vmatpush1.msra.mxu0 0.0
    %1621 = vmatprep.subr.mxu0 0.0
    %1622 = vmatpush1.msra.mxu0 0.0
    %1623 = vmatprep.subr.mxu0 0.0
    %1624 = vmatpush1.msra.mxu0 0.0
    %1625 = vmatprep.subr.mxu0 0.0
    %1626 = vmatpush1.msra.mxu0 0.0
    %1627 = vmatprep.subr.mxu0 0.0
    %1628 = vmatpush1.msra.mxu0 0.0
    %1629 = vmatprep.mubr.f32.mxu0 0.0
    %1630 = vmatmul.mubr.f32.gmra.mrb[0].mxu0 %v1563
    %v1631 = vpop.f32.mrb[0].mxu0
    %v1632 = vadd.f32 %v1561, %v1631
    %v1633 = vpop.f32.mrb[0].mxu0
    %1634 = vdwg.mxu0
    %v1635 = vtanh.pop %v1632
    %1636 = vst.msk [vmem:[#allocation11] sm:$0xff] %vm103, %v1635
    // Predicated region
    $region42: #{tpu_custom_call.1} parent=1 // pred_check
      _
    $region43: #{tpu_custom_call.1} parent=1 // pred_check_branch
      %1638 = sbr.rel (0) target = $region45
    $region44: #{tpu_custom_call.1} parent=1 // pred_region
      %s1640 = ssub.s32 128, 128
      %1641 = vsyncadd [#allocation4], %s1640
      %s1643 = sshll.u32 [#allocation11], 4
      %s1644 = int_to_ptr.vmem [resolvable:$true] %s1643
      %1646 = dma.vmem_to_hbm [thread:$0]  %s1644, 128, %s5, [#allocation4]
    $region45: #{tpu_custom_call.1} parent=1 // pred_fallthru
      _
    // Predicated region
    $region46: #{tpu_custom_call.1} parent=1 // pred_check
      _
    $region47: #{tpu_custom_call.1} parent=1 // pred_check_branch
      %1648 = sbr.rel (0) target = $region49
    $region48: #{tpu_custom_call.1} parent=1 // pred_region
      %s1650 = ssub.s32 128, 128
      %1651 = vsyncadd [#allocation13], %s1650
      %s1653 = sshll.u32 [#allocation12], 4
      %s1654 = int_to_ptr.vmem [resolvable:$true] %s1653
      %1656 = dma.vmem_to_hbm [thread:$0]  %s1654, 128, %s6, [#allocation13]
    $region49: #{tpu_custom_call.1} parent=1 // pred_fallthru
      _
    // Predicated region
    $region50: #{tpu_custom_call.1} parent=1 // pred_check
      _
    $region51: #{tpu_custom_call.1} parent=1 // pred_check_branch
      %1658 = sbr.rel (0) target = $region53
    $region52: #{tpu_custom_call.1} parent=1 // pred_region
      %1659 = dma.done [#allocation4], 128
    $region53: #{tpu_custom_call.1} parent=1 // pred_fallthru
      _
    // Predicated region
    $region54: #{tpu_custom_call.1} parent=1 // pred_check
      _
    $region55: #{tpu_custom_call.1} parent=1 // pred_check_branch
      %1661 = sbr.rel (0) target = $region57
    $region56: #{tpu_custom_call.1} parent=1 // pred_region
      %1662 = dma.done [#allocation13], 128
    $region57: #{tpu_custom_call.1} parent=1 // pred_fallthru
      _
    %1663 = vsyncpa [#allocation3], 1
    %1664 = vsyncpa [#allocation6], 1
    %1665 = vsyncpa [#allocation9], 1
    %1666 = vsyncpa [#allocation4], 1
    %1667 = vsyncpa [#allocation13], 1

// kernel: tpu_custom_call.1
$region0: #{tpu_custom_call.1}
  #allocation0 [shape = 'u32[]', space=smem, size = 0x4, offset = 0x4, fixed_abs, tag = 'smem constant byte address 0x4 - core index']
  #allocation1 [shape = 'u32[144,128]{1,0:T(1,128)}', space=vmem, size = 0x12000, scoped, tag = 'internal scratch']
  %s0 = inlined_call_operand.hbm [shape: f32[8,32], index: 0, kind: input, shape index: {}]
  %s1 = inlined_call_operand.hbm [shape: f32[8,8,32], index: 1, kind: input, shape index: {}]
  %s2 = inlined_call_operand.hbm [shape: s32[8,8], index: 2, kind: input, shape index: {}]
  %s3 = inlined_call_operand.hbm [shape: f32[32,64], index: 3, kind: input, shape index: {}]
  %s4 = inlined_call_operand.hbm [shape: f32[32,32], index: 4, kind: input, shape index: {}]
  %s5 = inlined_call_operand.hbm [shape: f32[8,32], index: 5, kind: output, shape index: {0}]
  %s6 = inlined_call_operand.hbm [shape: f32[8,8], index: 6, kind: output, shape index: {1}]
  %7 = xla_tuple %s5, %s6
  %s8 = sld [smem:[#allocation0]]
  $region58: #{tpu_custom_call.1} parent=0
    _
  %s10 = ssub.s32 1, %s8
  %s11 = scalar_select 0, %s10, %s8
  $region1: #{tpu_custom_call.1} parent=0
    #allocation2 [shape = 'u8[4096]{0}', space=vmem, size = 0x1000, scoped, tag = 'input window, operand 0, single buffered']
    #allocation3 [shape = 's32[1]{0}', space=sflag, size = 0x4, scoped, tag = 'scoped memory for tpu_custom_call.1']
    #allocation4 [shape = 's32[1]{0}', space=sflag, size = 0x4, scoped, tag = 'scoped memory for tpu_custom_call.1']
    #allocation5 [shape = 'u8[32768]{0}', space=vmem, size = 0x8000, scoped, tag = 'input window, operand 1, single buffered']
    #allocation6 [shape = 's32[1]{0}', space=sflag, size = 0x4, scoped, tag = 'scoped memory for tpu_custom_call.1']
    #allocation7 [shape = 'u8[4096]{0}', space=vmem, size = 0x1000, scoped, tag = 'input window, operand 2, single buffered']
    #allocation8 [shape = 'u8[16384]{0}', space=vmem, size = 0x4000, scoped, tag = 'input window, operand 3, single buffered']
    #allocation9 [shape = 's32[1]{0}', space=sflag, size = 0x4, scoped, tag = 'scoped memory for tpu_custom_call.1']
    #allocation10 [shape = 'u8[16384]{0}', space=vmem, size = 0x4000, scoped, tag = 'input window, operand 4, single buffered']
    #allocation11 [shape = 'u8[4096]{0}', space=vmem, size = 0x1000, scoped, tag = 'output window, operand 0, single buffered']
    #allocation12 [shape = 'u8[4096]{0}', space=vmem, size = 0x1000, scoped, tag = 'output window, operand 1, single buffered']
    #allocation13 [shape = 's32[1]{0}', space=sflag, size = 0x4, scoped, tag = 'scoped memory for tpu_custom_call.1']
    %12 = vsyncpa [#allocation3], 0
    %13 = vsyncpa [#allocation6], 0
    %14 = vsyncpa [#allocation9], 0
    %15 = vsyncpa [#allocation4], 0
    %16 = vsyncpa [#allocation13], 0
    // Predicated region
    $region2: #{tpu_custom_call.1} parent=1 // pred_check
      _
    $region3: #{tpu_custom_call.1} parent=1 // pred_check_branch
      %18 = sbr.rel (0) target = $region5
    $region4: #{tpu_custom_call.1} parent=1 // pred_region
      %s20 = ssub.s32 128, 128
      %21 = vsyncadd [#allocation3], %s20
      %s23 = sshll.u32 [#allocation2], 4
      %s24 = int_to_ptr.vmem [resolvable:$true] %s23
      %26 = dma.hbm_to_vmem [thread:$0]  %s0, 128, %s24, [#allocation3]
    $region5: #{tpu_custom_call.1} parent=1 // pred_fallthru
      _
    // Predicated region
    $region6: #{tpu_custom_call.1} parent=1 // pred_check
      _
    $region7: #{tpu_custom_call.1} parent=1 // pred_check_branch
      %28 = sbr.rel (0) target = $region9
    $region8: #{tpu_custom_call.1} parent=1 // pred_region
      %s30 = ssub.s32 1024, 1024
      %31 = vsyncadd [#allocation6], %s30
      %s32 = sshll.u32 [#allocation5], 4
      %s33 = int_to_ptr.vmem [resolvable:$true] %s32
      %38 = dma.hbm_to_vmem [thread:$0]  %s1, 1024, %s33, [#allocation6], 128, 128, 8
    $region9: #{tpu_custom_call.1} parent=1 // pred_fallthru
      _
    // Predicated region
    $region10: #{tpu_custom_call.1} parent=1 // pred_check
      _
    $region11: #{tpu_custom_call.1} parent=1 // pred_check_branch
      %40 = sbr.rel (0) target = $region13
    $region12: #{tpu_custom_call.1} parent=1 // pred_region
      %s42 = ssub.s32 128, 128
      %43 = vsyncadd [#allocation6], %s42
      %s45 = sshll.u32 [#allocation7], 4
      %s46 = int_to_ptr.vmem [resolvable:$true] %s45
      %48 = dma.hbm_to_vmem [thread:$0]  %s2, 128, %s46, [#allocation6]
    $region13: #{tpu_custom_call.1} parent=1 // pred_fallthru
      _
    // Predicated region
    $region14: #{tpu_custom_call.1} parent=1 // pred_check
      _
    $region15: #{tpu_custom_call.1} parent=1 // pred_check_branch
      %50 = sbr.rel (0) target = $region17
    $region16: #{tpu_custom_call.1} parent=1 // pred_region
      %s52 = ssub.s32 512, 512
      %53 = vsyncadd [#allocation9], %s52
      %s54 = sshll.u32 [#allocation8], 4
      %s55 = int_to_ptr.vmem [resolvable:$true] %s54
      %60 = dma.hbm_to_vmem [thread:$0]  %s3, 512, %s55, [#allocation9], 128, 128, 8
    $region17: #{tpu_custom_call.1} parent=1 // pred_fallthru
      _
    // Predicated region
    $region18: #{tpu_custom_call.1} parent=1 // pred_check
      _
    $region19: #{tpu_custom_call.1} parent=1 // pred_check_branch
      %62 = sbr.rel (0) target = $region21
    $region20: #{tpu_custom_call.1} parent=1 // pred_region
      %s64 = ssub.s32 512, 512
      %65 = vsyncadd [#allocation9], %s64
      %s66 = sshll.u32 [#allocation10], 4
      %s67 = int_to_ptr.vmem [resolvable:$true] %s66
      %72 = dma.hbm_to_vmem [thread:$0]  %s4, 512, %s67, [#allocation9], 128, 128, 8
    $region21: #{tpu_custom_call.1} parent=1 // pred_fallthru
      _
    // Predicated region
    $region22: #{tpu_custom_call.1} parent=1 // pred_check
      _
    $region23: #{tpu_custom_call.1} parent=1 // pred_check_branch
      %74 = sbr.rel (0) target = $region25
    $region24: #{tpu_custom_call.1} parent=1 // pred_region
      %75 = dma.done [#allocation3], 128
    $region25: #{tpu_custom_call.1} parent=1 // pred_fallthru
      _
    // Predicated region
    $region26: #{tpu_custom_call.1} parent=1 // pred_check
      _
    $region27: #{tpu_custom_call.1} parent=1 // pred_check_branch
      %77 = sbr.rel (0) target = $region29
    $region28: #{tpu_custom_call.1} parent=1 // pred_region
      %78 = dma.done [#allocation6], 1024
    $region29: #{tpu_custom_call.1} parent=1 // pred_fallthru
      _
    // Predicated region
    $region30: #{tpu_custom_call.1} parent=1 // pred_check
      _
    $region31: #{tpu_custom_call.1} parent=1 // pred_check_branch
      %80 = sbr.rel (0) target = $region33
    $region32: #{tpu_custom_call.1} parent=1 // pred_region
      %81 = dma.done [#allocation6], 128
    $region33: #{tpu_custom_call.1} parent=1 // pred_fallthru
      _
    // Predicated region
    $region34: #{tpu_custom_call.1} parent=1 // pred_check
      _
    $region35: #{tpu_custom_call.1} parent=1 // pred_check_branch
      %83 = sbr.rel (0) target = $region37
    $region36: #{tpu_custom_call.1} parent=1 // pred_region
      %84 = dma.done [#allocation9], 512
    $region37: #{tpu_custom_call.1} parent=1 // pred_fallthru
      _
    // Predicated region
    $region38: #{tpu_custom_call.1} parent=1 // pred_check
      _
    $region39: #{tpu_custom_call.1} parent=1 // pred_check_branch
      %86 = sbr.rel (0) target = $region41
    $region40: #{tpu_custom_call.1} parent=1 // pred_region
      %87 = dma.done [#allocation9], 512
    $region41: #{tpu_custom_call.1} parent=1 // pred_fallthru
      _
    %v88 = vld [vmem:[#allocation5] sm:$0xff]
    %v89 = vld [vmem:[#allocation5 + $0x8] sm:$0xff]
    %v90 = vld [vmem:[#allocation5 + $0x10] sm:$0xff]
    %v91 = vld [vmem:[#allocation5 + $0x18] sm:$0xff]
    %v92 = vld [vmem:[#allocation5 + $0x20] sm:$0xff]
    %v93 = vld [vmem:[#allocation5 + $0x28] sm:$0xff]
    %v94 = vld [vmem:[#allocation5 + $0x30] sm:$0xff]
    %v95 = vld [vmem:[#allocation5 + $0x38] sm:$0xff]
    %v96 = vld [vmem:[#allocation7] sm:$0xff]
    %vm97 = vcmp.eq.s32.totalorder %v96, 0
    %v98 = vld [vmem:[#allocation2] sm:$0xff]
    %v99 = vld [vmem:[#allocation8] sm:$0xff]
    %v100 = vld [vmem:[#allocation8 + $0x8] sm:$0xff]
    %v101 = vld [vmem:[#allocation8 + $0x10] sm:$0xff]
    %v102 = vld [vmem:[#allocation8 + $0x18] sm:$0xff]
    %vm103 = vcmask 261120
    %v105 = vsel %vm103, %v98, 0
    %107 = vmatprep.subr.mxu0 0.0
    %108 = vmatpush1.msra.mxu0 %v99
    %109 = vmatprep.subr.mxu0 0.0
    %110 = vmatpush1.msra.mxu0 %v100
    %111 = vmatprep.subr.mxu0 0.0
    %112 = vmatpush1.msra.mxu0 %v101
    %113 = vmatprep.subr.mxu0 0.0
    %114 = vmatpush1.msra.mxu0 %v102
    %115 = vmatprep.subr.mxu0 0.0
    %116 = vmatpush1.msra.mxu0 0.0
    %117 = vmatprep.subr.mxu0 0.0
    %118 = vmatpush1.msra.mxu0 0.0
    %119 = vmatprep.subr.mxu0 0.0
    %120 = vmatpush1.msra.mxu0 0.0
    %121 = vmatprep.subr.mxu0 0.0
    %122 = vmatpush1.msra.mxu0 0.0
    %123 = vmatprep.subr.mxu0 0.0
    %124 = vmatpush1.msra.mxu0 0.0
    %125 = vmatprep.subr.mxu0 0.0
    %126 = vmatpush1.msra.mxu0 0.0
    %127 = vmatprep.subr.mxu0 0.0
    %128 = vmatpush1.msra.mxu0 0.0
    %129 = vmatprep.subr.mxu0 0.0
    %130 = vmatpush1.msra.mxu0 0.0
    %131 = vmatprep.subr.mxu0 0.0
    %132 = vmatpush1.msra.mxu0 0.0
    %133 = vmatprep.subr.mxu0 0.0
    %134 = vmatpush1.msra.mxu0 0.0
    %135 = vmatprep.subr.mxu0 0.0
    %136 = vmatpush1.msra.mxu0 0.0
    %137 = vmatprep.subr.mxu0 0.0
    %138 = vmatpush1.msra.mxu0 0.0
    %139 = vmatprep.subr.mxu0 0.0
    %140 = vmatpush1.msra.mxu0 0.0
    %141 = vmatprep.subr.mxu0 0.0
    %142 = vmatpush1.msra.mxu0 0.0
    %143 = vmatprep.subr.mxu0 0.0
    %144 = vmatpush1.msra.mxu0 0.0
    %145 = vmatprep.subr.mxu0 0.0
    %146 = vmatpush1.msra.mxu0 0.0
    %147 = vmatprep.subr.mxu0 0.0
    %148 = vmatpush1.msra.mxu0 0.0
    %149 = vmatprep.subr.mxu0 0.0
    %150 = vmatpush1.msra.mxu0 0.0
    %151 = vmatprep.subr.mxu0 0.0
    %152 = vmatpush1.msra.mxu0 0.0
    %153 = vmatprep.subr.mxu0 0.0
    %154 = vmatpush1.msra.mxu0 0.0
    %155 = vmatprep.subr.mxu0 0.0
    %156 = vmatpush1.msra.mxu0 0.0
    %157 = vmatprep.subr.mxu0 0.0
    %158 = vmatpush1.msra.mxu0 0.0
    %159 = vmatprep.subr.mxu0 0.0
    %160 = vmatpush1.msra.mxu0 0.0
    %161 = vmatprep.subr.mxu0 0.0
    %162 = vmatpush1.msra.mxu0 0.0
    %163 = vmatprep.subr.mxu0 0.0
    %164 = vmatpush1.msra.mxu0 0.0
    %165 = vmatprep.subr.mxu0 0.0
    %166 = vmatpush1.msra.mxu0 0.0
    %167 = vmatprep.subr.mxu0 0.0
    %168 = vmatpush1.msra.mxu0 0.0
    %169 = vmatprep.subr.mxu0 0.0
    %170 = vmatpush1.msra.mxu0 0.0
    %171 = vmatprep.mubr.f32.mxu0 0.0
    %172 = vmatmul.mubr.f32.gmra.mrb[0].mxu0 %v105
    %v173 = vpop.f32.mrb[0].mxu0
    %v174 = vadd.f32 0.0, %v173
    %v175 = vpop.f32.mrb[0].mxu0
    %176 = vdwg.mxu0
    %v178 = vcombine.high %v174, %v174
    %v180 = vunpack.c.l.s4 1966171168
    %v181 = vunpack.c.0.s8 %v180
    %v182 = vlaneseq
    %v183 = vshrl.u32 %v182, 7
    %v184 = vsub.s32 %v181, %v183
    %v185 = vrot.slane %v174, %v184
    %v187 = vunpack.c.l.s4 1966171168
    %v188 = vunpack.c.0.s8 %v187
    %v189 = vlaneseq
    %v190 = vshrl.u32 %v189, 7
    %v191 = vsub.s32 %v188, %v190
    %v192 = vrot.slane %v178, %v191
    %v193 = vcombine.high %v185, %v185
    %v194 = vcombine.high %v192, %v192
    %v196 = vunpack.c.l.s4 1966171168
    %v197 = vunpack.c.0.s8 %v196
    %v198 = vlaneseq
    %v199 = vshrl.u32 %v198, 7
    %v200 = vsub.s32 %v197, %v199
    %v201 = vrot.slane %v185, %v200
    %v203 = vunpack.c.l.s4 1966171168
    %v204 = vunpack.c.0.s8 %v203
    %v205 = vlaneseq
    %v206 = vshrl.u32 %v205, 7
    %v207 = vsub.s32 %v204, %v206
    %v208 = vrot.slane %v192, %v207
    %v210 = vunpack.c.l.s4 1966171168
    %v211 = vunpack.c.0.s8 %v210
    %v212 = vlaneseq
    %v213 = vshrl.u32 %v212, 7
    %v214 = vsub.s32 %v211, %v213
    %v215 = vrot.slane %v193, %v214
    %v217 = vunpack.c.l.s4 1966171168
    %v218 = vunpack.c.0.s8 %v217
    %v219 = vlaneseq
    %v220 = vshrl.u32 %v219, 7
    %v221 = vsub.s32 %v218, %v220
    %v222 = vrot.slane %v194, %v221
    %v223 = vcombine.high %v201, %v201
    %v224 = vcombine.high %v208, %v208
    %v225 = vcombine.high %v215, %v215
    %v226 = vcombine.high %v222, %v222
    %v227 = vlaneseq
    %v228 = vshrl.u32 %v227, 7
    %v229 = vsub.s32 0, %v228
    %v230 = vrot.slane %v201, %v229
    %v231 = vlaneseq
    %v232 = vshrl.u32 %v231, 7
    %v233 = vsub.s32 0, %v232
    %v234 = vrot.slane %v215, %v233
    %v235 = vlaneseq
    %v236 = vshrl.u32 %v235, 7
    %v237 = vsub.s32 0, %v236
    %v238 = vrot.slane %v223, %v237
    %v239 = vlaneseq
    %v240 = vshrl.u32 %v239, 7
    %v241 = vsub.s32 0, %v240
    %v242 = vrot.slane %v225, %v241
    %v243 = vlaneseq
    %v244 = vshrl.u32 %v243, 7
    %v245 = vsub.s32 0, %v244
    %v246 = vrot.slane %v208, %v245
    %v247 = vlaneseq
    %v248 = vshrl.u32 %v247, 7
    %v249 = vsub.s32 0, %v248
    %v250 = vrot.slane %v222, %v249
    %v251 = vlaneseq
    %v252 = vshrl.u32 %v251, 7
    %v253 = vsub.s32 0, %v252
    %v254 = vrot.slane %v224, %v253
    %v255 = vlaneseq
    %v256 = vshrl.u32 %v255, 7
    %v257 = vsub.s32 0, %v256
    %v258 = vrot.slane %v226, %v257
    %v267 = vmul.f32 %v88, %v230
    %v268 = vmul.f32 %v89, %v234
    %v269 = vmul.f32 %v90, %v238
    %v270 = vmul.f32 %v91, %v242
    %v271 = vmul.f32 %v92, %v246
    %v272 = vmul.f32 %v93, %v250
    %v273 = vmul.f32 %v94, %v254
    %v274 = vmul.f32 %v95, %v258
    %v275 = vsel %vm103, %v267, 0.0
    %276 = vadd.xlane.f32.xlu0 %v275
    %v277 = vpop.xlane.xlu0 %276
    %v278 = vsel %vm103, %v268, 0.0
    %279 = vadd.xlane.f32.xlu0 %v278
    %v280 = vpop.xlane.xlu0 %279
    %v281 = vsel %vm103, %v269, 0.0
    %282 = vadd.xlane.f32.xlu0 %v281
    %v283 = vpop.xlane.xlu0 %282
    %v284 = vsel %vm103, %v270, 0.0
    %285 = vadd.xlane.f32.xlu0 %v284
    %v286 = vpop.xlane.xlu0 %285
    %v287 = vsel %vm103, %v271, 0.0
    %288 = vadd.xlane.f32.xlu0 %v287
    %v289 = vpop.xlane.xlu0 %288
    %v290 = vsel %vm103, %v272, 0.0
    %291 = vadd.xlane.f32.xlu0 %v290
    %v292 = vpop.xlane.xlu0 %291
    %v293 = vsel %vm103, %v273, 0.0
    %294 = vadd.xlane.f32.xlu0 %v293
    %v295 = vpop.xlane.xlu0 %294
    %v296 = vsel %vm103, %v274, 0.0
    %297 = vadd.xlane.f32.xlu0 %v296
    %v298 = vpop.xlane.xlu0 %297
    %v299 = vxor.u32 %v277, 2147483648
    %v300 = vxor.u32 %v280, 2147483648
    %v301 = vxor.u32 %v283, 2147483648
    %v302 = vxor.u32 %v286, 2147483648
    %v303 = vxor.u32 %v289, 2147483648
    %v304 = vxor.u32 %v292, 2147483648
    %v305 = vxor.u32 %v295, 2147483648
    %v306 = vxor.u32 %v298, 2147483648
    %v307 = vmul.f32 %v299, 1.442695
    %v308 = vpow.pop %v307
    %v309 = vmul.f32 %v300, 1.442695
    %v310 = vpow.pop %v309
    %v311 = vmul.f32 %v301, 1.442695
    %v312 = vpow.pop %v311
    %v313 = vmul.f32 %v302, 1.442695
    %v314 = vpow.pop %v313
    %v315 = vmul.f32 %v303, 1.442695
    %v316 = vpow.pop %v315
    %v317 = vmul.f32 %v304, 1.442695
    %v318 = vpow.pop %v317
    %v319 = vmul.f32 %v305, 1.442695
    %v320 = vpow.pop %v319
    %v321 = vmul.f32 %v306, 1.442695
    %v322 = vpow.pop %v321
    %v323 = vadd.f32 %v308, 1.0
    %v324 = vadd.f32 %v310, 1.0
    %v325 = vadd.f32 %v312, 1.0
    %v326 = vadd.f32 %v314, 1.0
    %v327 = vadd.f32 %v316, 1.0
    %v328 = vadd.f32 %v318, 1.0
    %v329 = vadd.f32 %v320, 1.0
    %v330 = vadd.f32 %v322, 1.0
    %v331 = vrcp.pop %v323
    %v332 = vmul.f32 1.0, %v331
    %v333 = vrcp.pop %v324
    %v334 = vmul.f32 1.0, %v333
    %v335 = vrcp.pop %v325
    %v336 = vmul.f32 1.0, %v335
    %v337 = vrcp.pop %v326
    %v338 = vmul.f32 1.0, %v337
    %v339 = vrcp.pop %v327
    %v340 = vmul.f32 1.0, %v339
    %v341 = vrcp.pop %v328
    %v342 = vmul.f32 1.0, %v341
    %v343 = vrcp.pop %v329
    %v344 = vmul.f32 1.0, %v343
    %v345 = vrcp.pop %v330
    %v346 = vmul.f32 1.0, %v345
    %v355 = vlaneseq
    %v356 = vand.u32 %v355, 127
    %v357 = vlaneseq
    %v358 = vshrl.u32 %v357, 7
    %v359 = vsub.s32 %v356, %v358
    %v360 = vrot.slane %v332, %v359
    %v361 = vlaneseq
    %v362 = vshrl.u32 %v361, 7
    %v363 = vsub.s32 %v356, %v362
    %v364 = vrot.slane %v334, %v363
    %v365 = vlaneseq
    %v366 = vshrl.u32 %v365, 7
    %v367 = vsub.s32 %v356, %v366
    %v368 = vrot.slane %v336, %v367
    %v369 = vlaneseq
    %v370 = vshrl.u32 %v369, 7
    %v371 = vsub.s32 %v356, %v370
    %v372 = vrot.slane %v338, %v371
    %v373 = vlaneseq
    %v374 = vshrl.u32 %v373, 7
    %v375 = vsub.s32 %v356, %v374
    %v376 = vrot.slane %v340, %v375
    %v377 = vlaneseq
    %v378 = vshrl.u32 %v377, 7
    %v379 = vsub.s32 %v356, %v378
    %v380 = vrot.slane %v342, %v379
    %v381 = vlaneseq
    %v382 = vshrl.u32 %v381, 7
    %v383 = vsub.s32 %v356, %v382
    %v384 = vrot.slane %v344, %v383
    %v385 = vlaneseq
    %v386 = vshrl.u32 %v385, 7
    %v387 = vsub.s32 %v356, %v386
    %v388 = vrot.slane %v346, %v387
    %vm389 = vcmask 1041409
    %v390 = vsel %vm389, %v364, %v360
    %vm391 = vcmask 1042434
    %v392 = vsel %vm391, %v368, %v390
    %vm393 = vcmask 1043459
    %v394 = vsel %vm393, %v372, %v392
    %vm395 = vcmask 1044484
    %v396 = vsel %vm395, %v376, %v394
    %vm397 = vcmask 1045509
    %v398 = vsel %vm397, %v380, %v396
    %vm399 = vcmask 1046534
    %v400 = vsel %vm399, %v384, %v398
    %vm401 = vcmask 1047559
    %v402 = vsel %vm401, %v388, %v400
    %v404 = vsel %vm97, %v402, 0.0
    %v405 = vlaneseq
    %v406 = vshrl.u32 %v405, 7
    %v407 = vsub.s32 0, %v406
    %v408 = vrot.slane %v404, %v407
    %410 = vbcast.lane.b32.xlu0 %v408, 256
    %v411 = vpop.permute.xlu0 %410
    %v412 = vlaneseq
    %v413 = vshrl.u32 %v412, 7
    %v414 = vsub.s32 1, %v413
    %v415 = vrot.slane %v404, %v414
    %417 = vbcast.lane.b32.xlu0 %v415, 256
    %v418 = vpop.permute.xlu0 %417
    %v419 = vlaneseq
    %v420 = vshrl.u32 %v419, 7
    %v421 = vsub.s32 2, %v420
    %v422 = vrot.slane %v404, %v421
    %424 = vbcast.lane.b32.xlu0 %v422, 256
    %v425 = vpop.permute.xlu0 %424
    %v426 = vlaneseq
    %v427 = vshrl.u32 %v426, 7
    %v428 = vsub.s32 3, %v427
    %v429 = vrot.slane %v404, %v428
    %431 = vbcast.lane.b32.xlu0 %v429, 256
    %v432 = vpop.permute.xlu0 %431
    %v433 = vlaneseq
    %v434 = vshrl.u32 %v433, 7
    %v435 = vsub.s32 4, %v434
    %v436 = vrot.slane %v404, %v435
    %438 = vbcast.lane.b32.xlu0 %v436, 256
    %v439 = vpop.permute.xlu0 %438
    %v440 = vlaneseq
    %v441 = vshrl.u32 %v440, 7
    %v442 = vsub.s32 5, %v441
    %v443 = vrot.slane %v404, %v442
    %445 = vbcast.lane.b32.xlu0 %v443, 256
    %v446 = vpop.permute.xlu0 %445
    %v447 = vlaneseq
    %v448 = vshrl.u32 %v447, 7
    %v449 = vsub.s32 6, %v448
    %v450 = vrot.slane %v404, %v449
    %452 = vbcast.lane.b32.xlu0 %v450, 256
    %v453 = vpop.permute.xlu0 %452
    %v454 = vlaneseq
    %v455 = vshrl.u32 %v454, 7
    %v456 = vsub.s32 7, %v455
    %v457 = vrot.slane %v404, %v456
    %459 = vbcast.lane.b32.xlu0 %v457, 256
    %v460 = vpop.permute.xlu0 %459
    %v461 = vmul.f32 %v411, %v88
    %v462 = vmul.f32 %v418, %v89
    %v463 = vmul.f32 %v425, %v90
    %v464 = vmul.f32 %v432, %v91
    %v465 = vmul.f32 %v439, %v92
    %v466 = vmul.f32 %v446, %v93
    %v467 = vmul.f32 %v453, %v94
    %v468 = vmul.f32 %v460, %v95
    %v469 = vsel %vm103, %v461, 0.0
    %v470 = vrot.slane %v469, 4
    %v471 = vadd.f32 %v469, %v470
    %v472 = vrot.slane %v471, 2
    %v473 = vadd.f32 %v471, %v472
    %v474 = vrot.slane %v473, 1
    %v475 = vadd.f32 %v473, %v474
    %v476 = vsel %vm103, %v462, 0.0
    %v477 = vrot.slane %v476, 4
    %v478 = vadd.f32 %v476, %v477
    %v479 = vrot.slane %v478, 2
    %v480 = vadd.f32 %v478, %v479
    %v481 = vrot.slane %v480, 1
    %v482 = vadd.f32 %v480, %v481
    %v483 = vsel %vm103, %v463, 0.0
    %v484 = vrot.slane %v483, 4
    %v485 = vadd.f32 %v483, %v484
    %v486 = vrot.slane %v485, 2
    %v487 = vadd.f32 %v485, %v486
    %v488 = vrot.slane %v487, 1
    %v489 = vadd.f32 %v487, %v488
    %v490 = vsel %vm103, %v464, 0.0
    %v491 = vrot.slane %v490, 4
    %v492 = vadd.f32 %v490, %v491
    %v493 = vrot.slane %v492, 2
    %v494 = vadd.f32 %v492, %v493
    %v495 = vrot.slane %v494, 1
    %v496 = vadd.f32 %v494, %v495
    %v497 = vsel %vm103, %v465, 0.0
    %v498 = vrot.slane %v497, 4
    %v499 = vadd.f32 %v497, %v498
    %v500 = vrot.slane %v499, 2
    %v501 = vadd.f32 %v499, %v500
    %v502 = vrot.slane %v501, 1
    %v503 = vadd.f32 %v501, %v502
    %v504 = vsel %vm103, %v466, 0.0
    %v505 = vrot.slane %v504, 4
    %v506 = vadd.f32 %v504, %v505
    %v507 = vrot.slane %v506, 2
    %v508 = vadd.f32 %v506, %v507
    %v509 = vrot.slane %v508, 1
    %v510 = vadd.f32 %v508, %v509
    %v511 = vsel %vm103, %v467, 0.0
    %v512 = vrot.slane %v511, 4
    %v513 = vadd.f32 %v511, %v512
    %v514 = vrot.slane %v513, 2
    %v515 = vadd.f32 %v513, %v514
    %v516 = vrot.slane %v515, 1
    %v517 = vadd.f32 %v515, %v516
    %v518 = vsel %vm103, %v468, 0.0
    %v519 = vrot.slane %v518, 4
    %v520 = vadd.f32 %v518, %v519
    %v521 = vrot.slane %v520, 2
    %v522 = vadd.f32 %v520, %v521
    %v523 = vrot.slane %v522, 1
    %v524 = vadd.f32 %v522, %v523
    %vm525 = vcmask 64512
    %526 = vst.msk [vmem:[#allocation12] sm:$0xff] %vm525, %v404
    %v527 = vld [vmem:[#allocation10] sm:$0xff]
    %v528 = vld [vmem:[#allocation10 + $0x8] sm:$0xff]
    %v529 = vld [vmem:[#allocation10 + $0x10] sm:$0xff]
    %v530 = vld [vmem:[#allocation10 + $0x18] sm:$0xff]
    %v539 = vsel %vm389, %v482, %v475
    %v540 = vsel %vm391, %v489, %v539
    %v541 = vsel %vm393, %v496, %v540
    %v542 = vsel %vm395, %v503, %v541
    %v543 = vsel %vm397, %v510, %v542
    %v544 = vsel %vm399, %v517, %v543
    %v545 = vsel %vm401, %v524, %v544
    %546 = vrot.lane.b32.xlu0 %v174, 96
    %v547 = vpop.permute.xlu0 %546
    %v549 = vsel %vm103, %v545, 0
    %551 = vmatprep.subr.mxu0 0.0
    %552 = vmatpush1.msra.mxu0 %v527
    %553 = vmatprep.subr.mxu0 0.0
    %554 = vmatpush1.msra.mxu0 %v528
    %555 = vmatprep.subr.mxu0 0.0
    %556 = vmatpush1.msra.mxu0 %v529
    %557 = vmatprep.subr.mxu0 0.0
    %558 = vmatpush1.msra.mxu0 %v530
    %559 = vmatprep.subr.mxu0 0.0
    %560 = vmatpush1.msra.mxu0 0.0
    %561 = vmatprep.subr.mxu0 0.0
    %562 = vmatpush1.msra.mxu0 0.0
    %563 = vmatprep.subr.mxu0 0.0
    %564 = vmatpush1.msra.mxu0 0.0
    %565 = vmatprep.subr.mxu0 0.0
    %566 = vmatpush1.msra.mxu0 0.0
    %567 = vmatprep.subr.mxu0 0.0
    %568 = vmatpush1.msra.mxu0 0.0
    %569 = vmatprep.subr.mxu0 0.0
    %570 = vmatpush1.msra.mxu0 0.0
    %571 = vmatprep.subr.mxu0 0.0
    %572 = vmatpush1.msra.mxu0 0.0
    %573 = vmatprep.subr.mxu0 0.0
    %574 = vmatpush1.msra.mxu0 0.0
    %575 = vmatprep.subr.mxu0 0.0
    %576 = vmatpush1.msra.mxu0 0.0
    %577 = vmatprep.subr.mxu0 0.0
    %578 = vmatpush1.msra.mxu0 0.0
    %579 = vmatprep.subr.mxu0 0.0
    %580 = vmatpush1.msra.mxu0 0.0
    %581 = vmatprep.subr.mxu0 0.0
    %582 = vmatpush1.msra.mxu0 0.0
    %583 = vmatprep.subr.mxu0 0.0
    %584 = vmatpush1.msra.mxu0 0.0
    %585 = vmatprep.subr.mxu0 0.0
    %586 = vmatpush1.msra.mxu0 0.0
    %587 = vmatprep.subr.mxu0 0.0
    %588 = vmatpush1.msra.mxu0 0.0
    %589 = vmatprep.subr.mxu0 0.0
    %590 = vmatpush1.msra.mxu0 0.0
    %591 = vmatprep.subr.mxu0 0.0
    %592 = vmatpush1.msra.mxu0 0.0
    %593 = vmatprep.subr.mxu0 0.0
    %594 = vmatpush1.msra.mxu0 0.0
    %595 = vmatprep.subr.mxu0 0.0
    %596 = vmatpush1.msra.mxu0 0.0
    %597 = vmatprep.subr.mxu0 0.0
    %598 = vmatpush1.msra.mxu0 0.0
    %599 = vmatprep.subr.mxu0 0.0
    %600 = vmatpush1.msra.mxu0 0.0
    %601 = vmatprep.subr.mxu0 0.0
    %602 = vmatpush1.msra.mxu0 0.0
    %603 = vmatprep.subr.mxu0 0.0
    %604 = vmatpush1.msra.mxu0 0.0
    %605 = vmatprep.subr.mxu0 0.0
    %606 = vmatpush1.msra.mxu0 0.0
    %607 = vmatprep.subr.mxu0 0.0
    %608 = vmatpush1.msra.mxu0 0.0
    %609 = vmatprep.subr.mxu0 0.0
    %610 = vmatpush1.msra.mxu0 0.0
    %611 = vmatprep.subr.mxu0 0.0
    %612 = vmatpush1.msra.mxu0 0.0
    %613 = vmatprep.subr.mxu0 0.0
    %614 = vmatpush1.msra.mxu0 0.0
    %615 = vmatprep.mubr.f32.mxu0 0.0
    %616 = vmatmul.mubr.f32.gmra.mrb[0].mxu0 %v549
    %v617 = vpop.f32.mrb[0].mxu0
    %v618 = vadd.f32 %v547, %v617
    %v619 = vpop.f32.mrb[0].mxu0
    %620 = vdwg.mxu0
    %v621 = vtanh.pop %v618
    %622 = vst.msk [vmem:[#allocation11] sm:$0xff] %vm103, %v621
    // Predicated region
    $region42: #{tpu_custom_call.1} parent=1 // pred_check
      _
    $region43: #{tpu_custom_call.1} parent=1 // pred_check_branch
      %624 = sbr.rel (0) target = $region45
    $region44: #{tpu_custom_call.1} parent=1 // pred_region
      %s626 = ssub.s32 128, 128
      %627 = vsyncadd [#allocation4], %s626
      %s629 = sshll.u32 [#allocation11], 4
      %s630 = int_to_ptr.vmem [resolvable:$true] %s629
      %632 = dma.vmem_to_hbm [thread:$0]  %s630, 128, %s5, [#allocation4]
    $region45: #{tpu_custom_call.1} parent=1 // pred_fallthru
      _
    // Predicated region
    $region46: #{tpu_custom_call.1} parent=1 // pred_check
      _
    $region47: #{tpu_custom_call.1} parent=1 // pred_check_branch
      %634 = sbr.rel (0) target = $region49
    $region48: #{tpu_custom_call.1} parent=1 // pred_region
      %s636 = ssub.s32 128, 128
      %637 = vsyncadd [#allocation13], %s636
      %s639 = sshll.u32 [#allocation12], 4
      %s640 = int_to_ptr.vmem [resolvable:$true] %s639
      %642 = dma.vmem_to_hbm [thread:$0]  %s640, 128, %s6, [#allocation13]
    $region49: #{tpu_custom_call.1} parent=1 // pred_fallthru
      _
    // Predicated region
    $region50: #{tpu_custom_call.1} parent=1 // pred_check
      _
    $region51: #{tpu_custom_call.1} parent=1 // pred_check_branch
      %644 = sbr.rel (0) target = $region53
    $region52: #{tpu_custom_call.1} parent=1 // pred_region
      %645 = dma.done [#allocation4], 128
    $region53: #{tpu_custom_call.1} parent=1 // pred_fallthru
      _
    // Predicated region
    $region54: #{tpu_custom_call.1} parent=1 // pred_check
      _
    $region55: #{tpu_custom_call.1} parent=1 // pred_check_branch
      %647 = sbr.rel (0) target = $region57
    $region56: #{tpu_custom_call.1} parent=1 // pred_region
      %648 = dma.done [#allocation13], 128
    $region57: #{tpu_custom_call.1} parent=1 // pred_fallthru
      _
    %649 = vsyncpa [#allocation3], 1
    %650 = vsyncpa [#allocation6], 1
    %651 = vsyncpa [#allocation9], 1
    %652 = vsyncpa [#allocation4], 1
    %653 = vsyncpa [#allocation13], 1

</llo_original>
